<compile_context>
chip_gen: v7x
topology: tpu7x:2x2x1
jax: 0.10.0
libtpu: 0.0.40
codegen_flags: <defaults>
</compile_context>

<pallas_src>
import functools
import math

import jax
import jax.numpy as jnp
from jax import lax
from jax.experimental import pallas as pl
from jax.experimental.pallas import tpu as pltpu


def _layernorm(x, gamma, beta, eps=1e-5):
    mu = jnp.mean(x, axis=-1, keepdims=True)
    var = jnp.mean((x - mu) ** 2, axis=-1, keepdims=True)
    return (x - mu) * lax.rsqrt(var + eps) * gamma + beta


def _gelu_exact(x):
    # nn.GELU() default = exact erf formulation (kept for semantic fidelity).
    # jax.nn.gelu(x, approximate=True) would route through the EUP and is cheaper
    # on v5e's f32-only VPU if the small numeric difference is acceptable.
    return 0.5 * x * (1.0 + lax.erf(x * (1.0 / math.sqrt(2.0))))


def _block_kernel(x_ref,
                  ln1_g_ref, ln1_b_ref,
                  wq_ref, bq_ref, wk_ref, bk_ref, wv_ref, bv_ref,
                  wproj_ref, bproj_ref,
                  ln2_g_ref, ln2_b_ref,
                  wfc_ref, bfc_ref, wmlp_ref, bmlp_ref,
                  o_ref,
                  *, heads: int, q_tile: int):
    qi = pl.program_id(1)
    row0 = pl.multiple_of(qi * q_tile, q_tile)

    x_full = x_ref[0]                                   # (n_ctx, W) f32
    n_ctx, width = x_full.shape
    attn_ch = width // heads
    bf16 = jnp.bfloat16
    f32 = jnp.float32

    # ---------------- attention branch ----------------
    # LN over the full sequence (needed for K/V); bf16 matmul operands, f32 accum.
    xn_full = _layernorm(x_full, ln1_g_ref[0], ln1_b_ref[0]).astype(bf16)
    # softmax scale is pre-folded into wk/bk (and wq/bq) by the wrapper.
    k_all = (jnp.dot(xn_full, wk_ref[...], preferred_element_type=f32)
             + bk_ref[0]).astype(bf16)                  # (n_ctx, W)
    v_all = (jnp.dot(xn_full, wv_ref[...], preferred_element_type=f32)
             + bv_ref[0]).astype(bf16)                  # (n_ctx, W)

    # Query tile owned by this grid step (residual stream rows).
    x_t = x_ref[0, pl.ds(row0, q_tile), :]              # (q_tile, W) f32
    xn_t = _layernorm(x_t, ln1_g_ref[0], ln1_b_ref[0]).astype(bf16)
    q_all = (jnp.dot(xn_t, wq_ref[...], preferred_element_type=f32)
             + bq_ref[0]).astype(bf16)                  # (q_tile, W)

    # Q @ K^T without materializing a transpose: contract last dims of both.
    dn = (((1,), (1,)), ((), ()))
    attn_acc = jnp.zeros((q_tile, width), f32)
    for h in range(heads):      # static unroll; one score tile live at a time
        s0 = h * attn_ch
        qh = q_all[:, s0:s0 + attn_ch]
        kh = k_all[:, s0:s0 + attn_ch]
        vh = v_all[:, s0:s0 + attn_ch]
        w = lax.dot_general(qh, kh, dn, preferred_element_type=f32)  # (q_tile, n_ctx)
        w = w - jnp.max(w, axis=-1, keepdims=True)
        e = jnp.exp(w)
        p = e * pl.reciprocal(jnp.sum(e, axis=-1, keepdims=True), approx=True)
        head_out = jnp.dot(p.astype(bf16), vh,
                           preferred_element_type=f32)               # (q_tile, attn_ch)
        # Accumulate straight into the output projection (no head concat).
        attn_acc = attn_acc + jnp.dot(
            head_out.astype(bf16), wproj_ref[s0:s0 + attn_ch, :],
            preferred_element_type=f32)

    x1 = x_t + attn_acc + bproj_ref[0]                  # residual, f32

    # ---------------- MLP branch ----------------
    xn2 = _layernorm(x1, ln2_g_ref[0], ln2_b_ref[0]).astype(bf16)
    h1 = jnp.dot(xn2, wfc_ref[...], preferred_element_type=f32) + bfc_ref[0]
    h1 = _gelu_exact(h1).astype(bf16)                   # (q_tile, 4W)
    mlp = jnp.dot(h1, wmlp_ref[...], preferred_element_type=f32) + bmlp_ref[0]

    o_ref[0] = (x1 + mlp).astype(o_ref.dtype)


# ---------------------------------------------------------------------------
# Wrapper: parameter re-layout + pallas_call
# ---------------------------------------------------------------------------
_PARAM_ORDER = ("ln1_g", "ln1_b",
                "wq", "bq", "wk", "bk", "wv", "bv",
                "wproj", "bproj",
                "ln2_g", "ln2_b",
                "wfc", "bfc", "wmlp", "bmlp")


def _prepare_params(params, heads):
    """Permute qkv columns to head-major [Q|K|V], fold softmax scale, cast bf16."""
    width = params["wqkv"].shape[0]
    attn_ch = width // heads
    scale = 1.0 / math.sqrt(math.sqrt(attn_ch))
    bf16, f32 = jnp.bfloat16, jnp.float32

    # module layout: column = h*3*attn_ch + part*attn_ch + c  (part: 0=q,1=k,2=v)
    wqkv = params["wqkv"].astype(f32).reshape(width, heads, 3, attn_ch)
    bqkv = params["bqkv"].astype(f32).reshape(1, heads, 3, attn_ch)

    def take(part, fold):
        w = wqkv[:, :, part, :].reshape(width, width) * fold
        b = bqkv[:, :, part, :].reshape(1, width) * fold
        return w.astype(bf16), b.astype(f32)

    wq, bq = take(0, scale)
    wk, bk = take(1, scale)
    wv, bv = take(2, 1.0)

    return dict(
        ln1_g=params["ln1_g"].astype(f32), ln1_b=params["ln1_b"].astype(f32),
        wq=wq, bq=bq, wk=wk, bk=bk, wv=wv, bv=bv,
        wproj=params["wattn_proj"].astype(bf16),
        bproj=params["battn_proj"].astype(f32),
        ln2_g=params["ln2_g"].astype(f32), ln2_b=params["ln2_b"].astype(f32),
        wfc=params["wfc"].astype(bf16), bfc=params["bfc"].astype(f32),
        wmlp=params["wmlp_proj"].astype(bf16), bmlp=params["bmlp_proj"].astype(f32),
    )


def _pick_q_tile(n_ctx):
    return 256 if n_ctx % 256 == 0 else n_ctx


def _vmem_limit_bytes(weight_bytes, n_ctx, width, q_tile):
    # Generous activation-footprint estimate (f32 + bf16 copies).
    act = 4 * n_ctx * width * 12            # x, ln1(x), K, V
    act += 4 * q_tile * n_ctx * 2           # one score tile (+ slack)
    act += 4 * q_tile * 4 * width * 3       # MLP hidden
    act += 4 * q_tile * width * 8           # q tile, accumulators, out (2x buffered)
    est = weight_bytes + act
    phys = 128 << 20
    try:
        phys = int(getattr(pltpu.get_tpu_info(), "vmem_capacity_bytes", phys))
    except Exception:
        pass
    # Keep headroom below physical VMEM (64 MiB on v7x, 128 MiB on v5e/v6e).
    return int(min(phys * 3 // 4, max(16 << 20, 2 * est)))


def residual_attention_block(x, params, heads, *, single_buffer_weights=True):
    bs, n_ctx, width = x.shape
    assert width % heads == 0
    q_tile = _pick_q_tile(n_ctx)
    n_q = n_ctx // q_tile

    prepped = _prepare_params(params, heads)
    param_arrays = [prepped[k] for k in _PARAM_ORDER]
    weight_bytes = sum(int(a.size) * a.dtype.itemsize for a in param_arrays)

    spec_kwargs = {}
    if single_buffer_weights and hasattr(pl, "Buffered"):
        # Constant index_map => block never changes; single-buffer the weights so
        # they are not double-allocated in VMEM (critical on v7x's 64 MiB).
        spec_kwargs = dict(pipeline_mode=pl.Buffered(1))

    def const_spec(arr):
        nd = arr.ndim
        return pl.BlockSpec(arr.shape, lambda b, q: (0,) * nd, **spec_kwargs)

    in_specs = [pl.BlockSpec((1, n_ctx, width), lambda b, q: (b, 0, 0))]
    in_specs += [const_spec(a) for a in param_arrays]

    kernel = functools.partial(_block_kernel, heads=heads, q_tile=q_tile)

    return pl.pallas_call(
        kernel,
        out_shape=jax.ShapeDtypeStruct((bs, n_ctx, width), x.dtype),
        grid_spec=pltpu.PrefetchScalarGridSpec(
            num_scalar_prefetch=0,
            grid=(bs, n_q),
            in_specs=in_specs,
            out_specs=pl.BlockSpec((1, q_tile, width), lambda b, q: (b, q, 0)),
        ),
        compiler_params=pltpu.CompilerParams(
            dimension_semantics=("parallel", "parallel"),
            vmem_limit_bytes=_vmem_limit_bytes(weight_bytes, n_ctx, width, q_tile),
        ),
    )(x, *param_arrays)


# ---------------------------------------------------------------------------
# Pure-JAX reference (mirrors the PyTorch forward, f32) for a correctness check.
# ---------------------------------------------------------------------------
def reference(x, params, heads):
    def ln(v, g, b):
        mu = jnp.mean(v, axis=-1, keepdims=True)
        var = jnp.mean((v - mu) ** 2, axis=-1, keepdims=True)
        return (v - mu) / jnp.sqrt(var + 1e-5) * g[0] + b[0]

    bs, n_ctx, width = x.shape
    attn_ch = width // heads
    scale = 1 / math.sqrt(math.sqrt(attn_ch))

    xn = ln(x, params["ln1_g"], params["ln1_b"])
    qkv = xn @ params["wqkv"] + params["bqkv"][0]
    qkv = qkv.reshape(bs, n_ctx, heads, 3 * attn_ch)
    q, k, v = qkv[..., :attn_ch], qkv[..., attn_ch:2 * attn_ch], qkv[..., 2 * attn_ch:]
    w = jnp.einsum("bthc,bshc->bhts", q * scale, k * scale)
    w = jax.nn.softmax(w.astype(jnp.float32), axis=-1)
    attn = jnp.einsum("bhts,bshc->bthc", w, v).reshape(bs, n_ctx, width)
    attn = attn @ params["wattn_proj"] + params["battn_proj"][0]
    x = x + attn

    xn2 = ln(x, params["ln2_g"], params["ln2_b"])
    h = xn2 @ params["wfc"] + params["bfc"][0]
    h = 0.5 * h * (1.0 + jax.lax.erf(h / jnp.sqrt(2.0)))
    mlp = h @ params["wmlp_proj"] + params["bmlp_proj"][0]
    return x + mlp


def make_params(key, width, init_scale=0.05):
    ks = jax.random.split(key, 4)
    f32 = jnp.float32
    return {
        # LayerNorm: PyTorch default init (weight=1, bias=0)
        "ln1_g": jnp.ones((1, width), f32),
        "ln1_b": jnp.zeros((1, width), f32),
        "ln2_g": jnp.ones((1, width), f32),
        "ln2_b": jnp.zeros((1, width), f32),
        # Linears: normal(std=init_scale), bias=0  (init_linear)
        "wqkv": jax.random.normal(ks[0], (width, 3 * width), f32) * init_scale,
        "bqkv": jnp.zeros((1, 3 * width), f32),
        "wattn_proj": jax.random.normal(ks[1], (width, width), f32) * init_scale,
        "battn_proj": jnp.zeros((1, width), f32),
        "wfc": jax.random.normal(ks[2], (width, 4 * width), f32) * init_scale,
        "bfc": jnp.zeros((1, 4 * width), f32),
        "wmlp_proj": jax.random.normal(ks[3], (4 * width, width), f32) * init_scale,
        "bmlp_proj": jnp.zeros((1, width), f32),
    }


if __name__ == "__main__":
    bs, n_ctx, width, heads = 2, 8, 32, 4

    key = jax.random.PRNGKey(0)
    kx, kp = jax.random.split(key)
    x = jax.random.normal(kx, (bs, n_ctx, width), jnp.float32)
    params = make_params(kp, width)

    try:
        out = residual_attention_block(x, params, heads)
        out = jax.block_until_ready(out)
    except Exception:
        # Fallback: disable single-buffered weights if this Pallas build rejects it.
        out = residual_attention_block(x, params, heads, single_buffer_weights=False)
        out = jax.block_until_ready(out)

    ref = reference(x, params, heads)
    assert out.shape == (bs, n_ctx, width)
    max_err = float(jnp.max(jnp.abs(out - ref)))
    # bf16 matmul operands with f32 accumulation -> loosened tolerance vs f32 ref.
    assert jnp.allclose(out, ref, atol=2e-2, rtol=2e-2), max_err

    print("KERNEL_OK")
</pallas_src>

<mosaic_0001>
module attributes {stable_mosaic.version = 11 : i64} {
  func.func @_block_kernel(%arg0: i32, %arg1: i32, %arg2: memref<1x8x32xf32, #tpu.memory_space<vmem>>, %arg3: memref<1x32xf32, #tpu.memory_space<vmem>>, %arg4: memref<1x32xf32, #tpu.memory_space<vmem>>, %arg5: memref<32x32xbf16, #tpu.memory_space<vmem>>, %arg6: memref<1x32xf32, #tpu.memory_space<vmem>>, %arg7: memref<32x32xbf16, #tpu.memory_space<vmem>>, %arg8: memref<1x32xf32, #tpu.memory_space<vmem>>, %arg9: memref<32x32xbf16, #tpu.memory_space<vmem>>, %arg10: memref<1x32xf32, #tpu.memory_space<vmem>>, %arg11: memref<32x32xbf16, #tpu.memory_space<vmem>>, %arg12: memref<1x32xf32, #tpu.memory_space<vmem>>, %arg13: memref<1x32xf32, #tpu.memory_space<vmem>>, %arg14: memref<1x32xf32, #tpu.memory_space<vmem>>, %arg15: memref<32x128xbf16, #tpu.memory_space<vmem>>, %arg16: memref<1x128xf32, #tpu.memory_space<vmem>>, %arg17: memref<128x32xbf16, #tpu.memory_space<vmem>>, %arg18: memref<1x32xf32, #tpu.memory_space<vmem>>, %arg19: memref<1x8x32xf32, #tpu.memory_space<vmem>>) attributes {dimension_semantics = [#tpu.dimension_semantics<parallel>, #tpu.dimension_semantics<parallel>], iteration_bounds = array<i64: 2, 1>, scalar_prefetch = 0 : i64, scratch_operands = 0 : i64, tpu.core_type = #tpu.core_type<tc>, window_params = [{transform_indices = @transform_0, window_bounds = array<i64: 1, 8, 32>}, {pipeline_mode = #tpu.pipeline_mode<synchronous>, transform_indices = @transform_1, window_bounds = array<i64: 1, 32>}, {pipeline_mode = #tpu.pipeline_mode<synchronous>, transform_indices = @transform_2, window_bounds = array<i64: 1, 32>}, {pipeline_mode = #tpu.pipeline_mode<synchronous>, transform_indices = @transform_3, window_bounds = array<i64: 32, 32>}, {pipeline_mode = #tpu.pipeline_mode<synchronous>, transform_indices = @transform_4, window_bounds = array<i64: 1, 32>}, {pipeline_mode = #tpu.pipeline_mode<synchronous>, transform_indices = @transform_5, window_bounds = array<i64: 32, 32>}, {pipeline_mode = #tpu.pipeline_mode<synchronous>, transform_indices = @transform_6, window_bounds = array<i64: 1, 32>}, {pipeline_mode = #tpu.pipeline_mode<synchronous>, transform_indices = @transform_7, window_bounds = array<i64: 32, 32>}, {pipeline_mode = #tpu.pipeline_mode<synchronous>, transform_indices = @transform_8, window_bounds = array<i64: 1, 32>}, {pipeline_mode = #tpu.pipeline_mode<synchronous>, transform_indices = @transform_9, window_bounds = array<i64: 32, 32>}, {pipeline_mode = #tpu.pipeline_mode<synchronous>, transform_indices = @transform_10, window_bounds = array<i64: 1, 32>}, {pipeline_mode = #tpu.pipeline_mode<synchronous>, transform_indices = @transform_11, window_bounds = array<i64: 1, 32>}, {pipeline_mode = #tpu.pipeline_mode<synchronous>, transform_indices = @transform_12, window_bounds = array<i64: 1, 32>}, {pipeline_mode = #tpu.pipeline_mode<synchronous>, transform_indices = @transform_13, window_bounds = array<i64: 32, 128>}, {pipeline_mode = #tpu.pipeline_mode<synchronous>, transform_indices = @transform_14, window_bounds = array<i64: 1, 128>}, {pipeline_mode = #tpu.pipeline_mode<synchronous>, transform_indices = @transform_15, window_bounds = array<i64: 128, 32>}, {pipeline_mode = #tpu.pipeline_mode<synchronous>, transform_indices = @transform_16, window_bounds = array<i64: 1, 32>}, {transform_indices = @transform_17, window_bounds = array<i64: 1, 8, 32>}]} {
    %c8_i32 = arith.constant 8 : i32
    %0 = arith.muli %arg1, %c8_i32 : i32
    %1 = tpu.assume_multiple %0, 8 : i32
    %c0 = arith.constant 0 : index
    %c0_0 = arith.constant 0 : index
    %c0_1 = arith.constant 0 : index
    %2 = vector.load %arg2[%c0, %c0_0, %c0_1] : memref<1x8x32xf32, #tpu.memory_space<vmem>>, vector<1x8x32xf32>
    %3 = vector.shape_cast %2 : vector<1x8x32xf32> to vector<8x32xf32>
    %c0_2 = arith.constant 0 : index
    %c0_3 = arith.constant 0 : index
    %4 = vector.load %arg3[%c0_2, %c0_3] : memref<1x32xf32, #tpu.memory_space<vmem>>, vector<1x32xf32>
    %5 = vector.shape_cast %4 : vector<1x32xf32> to vector<32xf32>
    %c0_4 = arith.constant 0 : index
    %c0_5 = arith.constant 0 : index
    %6 = vector.load %arg4[%c0_4, %c0_5] : memref<1x32xf32, #tpu.memory_space<vmem>>, vector<1x32xf32>
    %7 = vector.shape_cast %6 : vector<1x32xf32> to vector<32xf32>
    %cst = arith.constant dense<0.000000e+00> : vector<8xf32>
    %8 = vector.multi_reduction <add>, %3, %cst [1] : vector<8x32xf32> to vector<8xf32>
    %9 = vector.shape_cast %8 : vector<8xf32> to vector<8x1xf32>
    %cst_6 = arith.constant 3.200000e+01 : f32
    %10 = vector.broadcast %cst_6 : f32 to vector<8x1xf32>
    %11 = arith.divf %9, %10 : vector<8x1xf32>
    %12 = vector.broadcast %11 : vector<8x1xf32> to vector<8x32xf32>
    %13 = arith.subf %3, %12 : vector<8x32xf32>
    %14 = arith.mulf %13, %13 : vector<8x32xf32>
    %cst_7 = arith.constant dense<0.000000e+00> : vector<8xf32>
    %15 = vector.multi_reduction <add>, %14, %cst_7 [1] : vector<8x32xf32> to vector<8xf32>
    %16 = vector.shape_cast %15 : vector<8xf32> to vector<8x1xf32>
    %cst_8 = arith.constant 3.200000e+01 : f32
    %17 = vector.broadcast %cst_8 : f32 to vector<8x1xf32>
    %18 = arith.divf %16, %17 : vector<8x1xf32>
    %19 = vector.broadcast %11 : vector<8x1xf32> to vector<8x32xf32>
    %20 = arith.subf %3, %19 : vector<8x32xf32>
    %cst_9 = arith.constant 9.99999974E-6 : f32
    %21 = vector.broadcast %cst_9 : f32 to vector<8x1xf32>
    %22 = arith.addf %18, %21 : vector<8x1xf32>
    %23 = math.rsqrt %22 : vector<8x1xf32>
    %24 = vector.broadcast %23 : vector<8x1xf32> to vector<8x32xf32>
    %25 = arith.mulf %20, %24 : vector<8x32xf32>
    %26 = vector.shape_cast %5 : vector<32xf32> to vector<1x32xf32>
    %27 = vector.broadcast %26 : vector<1x32xf32> to vector<8x32xf32>
    %28 = arith.mulf %25, %27 : vector<8x32xf32>
    %29 = vector.shape_cast %7 : vector<32xf32> to vector<1x32xf32>
    %30 = vector.broadcast %29 : vector<1x32xf32> to vector<8x32xf32>
    %31 = arith.addf %28, %30 : vector<8x32xf32>
    %32 = arith.truncf %31 : vector<8x32xf32> to vector<8x32xbf16>
    %c0_10 = arith.constant 0 : index
    %c0_11 = arith.constant 0 : index
    %33 = vector.load %arg7[%c0_10, %c0_11] : memref<32x32xbf16, #tpu.memory_space<vmem>>, vector<32x32xbf16>
    %cst_12 = arith.constant dense<0.000000e+00> : vector<8x32xf32>
    %34 = tpu.matmul %32, %33, %cst_12 {dimension_numbers = #tpu.dot_dimension_numbers<[1], [0], [0], [1], [0, 0, 1, 1], [], []>} : vector<8x32xbf16>, vector<32x32xbf16>, vector<8x32xf32> -> vector<8x32xf32>
    %c0_13 = arith.constant 0 : index
    %c0_14 = arith.constant 0 : index
    %35 = vector.load %arg8[%c0_13, %c0_14] : memref<1x32xf32, #tpu.memory_space<vmem>>, vector<1x32xf32>
    %36 = vector.shape_cast %35 : vector<1x32xf32> to vector<32xf32>
    %37 = vector.shape_cast %36 : vector<32xf32> to vector<1x32xf32>
    %38 = vector.broadcast %37 : vector<1x32xf32> to vector<8x32xf32>
    %39 = arith.addf %34, %38 : vector<8x32xf32>
    %40 = arith.truncf %39 : vector<8x32xf32> to vector<8x32xbf16>
    %c0_15 = arith.constant 0 : index
    %c0_16 = arith.constant 0 : index
    %41 = vector.load %arg9[%c0_15, %c0_16] : memref<32x32xbf16, #tpu.memory_space<vmem>>, vector<32x32xbf16>
    %cst_17 = arith.constant dense<0.000000e+00> : vector<8x32xf32>
    %42 = tpu.matmul %32, %41, %cst_17 {dimension_numbers = #tpu.dot_dimension_numbers<[1], [0], [0], [1], [0, 0, 1, 1], [], []>} : vector<8x32xbf16>, vector<32x32xbf16>, vector<8x32xf32> -> vector<8x32xf32>
    %c0_18 = arith.constant 0 : index
    %c0_19 = arith.constant 0 : index
    %43 = vector.load %arg10[%c0_18, %c0_19] : memref<1x32xf32, #tpu.memory_space<vmem>>, vector<1x32xf32>
    %44 = vector.shape_cast %43 : vector<1x32xf32> to vector<32xf32>
    %45 = vector.shape_cast %44 : vector<32xf32> to vector<1x32xf32>
    %46 = vector.broadcast %45 : vector<1x32xf32> to vector<8x32xf32>
    %47 = arith.addf %42, %46 : vector<8x32xf32>
    %48 = arith.truncf %47 : vector<8x32xf32> to vector<8x32xbf16>
    %c0_20 = arith.constant 0 : index
    %49 = arith.index_cast %1 : i32 to index
    %c0_21 = arith.constant 0 : index
    %50 = vector.load %arg2[%c0_20, %49, %c0_21] : memref<1x8x32xf32, #tpu.memory_space<vmem>>, vector<1x8x32xf32>
    %51 = vector.shape_cast %50 : vector<1x8x32xf32> to vector<8x32xf32>
    %c0_22 = arith.constant 0 : index
    %c0_23 = arith.constant 0 : index
    %52 = vector.load %arg3[%c0_22, %c0_23] : memref<1x32xf32, #tpu.memory_space<vmem>>, vector<1x32xf32>
    %53 = vector.shape_cast %52 : vector<1x32xf32> to vector<32xf32>
    %c0_24 = arith.constant 0 : index
    %c0_25 = arith.constant 0 : index
    %54 = vector.load %arg4[%c0_24, %c0_25] : memref<1x32xf32, #tpu.memory_space<vmem>>, vector<1x32xf32>
    %55 = vector.shape_cast %54 : vector<1x32xf32> to vector<32xf32>
    %cst_26 = arith.constant dense<0.000000e+00> : vector<8xf32>
    %56 = vector.multi_reduction <add>, %51, %cst_26 [1] : vector<8x32xf32> to vector<8xf32>
    %57 = vector.shape_cast %56 : vector<8xf32> to vector<8x1xf32>
    %cst_27 = arith.constant 3.200000e+01 : f32
    %58 = vector.broadcast %cst_27 : f32 to vector<8x1xf32>
    %59 = arith.divf %57, %58 : vector<8x1xf32>
    %60 = vector.broadcast %59 : vector<8x1xf32> to vector<8x32xf32>
    %61 = arith.subf %51, %60 : vector<8x32xf32>
    %62 = arith.mulf %61, %61 : vector<8x32xf32>
    %cst_28 = arith.constant dense<0.000000e+00> : vector<8xf32>
    %63 = vector.multi_reduction <add>, %62, %cst_28 [1] : vector<8x32xf32> to vector<8xf32>
    %64 = vector.shape_cast %63 : vector<8xf32> to vector<8x1xf32>
    %cst_29 = arith.constant 3.200000e+01 : f32
    %65 = vector.broadcast %cst_29 : f32 to vector<8x1xf32>
    %66 = arith.divf %64, %65 : vector<8x1xf32>
    %67 = vector.broadcast %59 : vector<8x1xf32> to vector<8x32xf32>
    %68 = arith.subf %51, %67 : vector<8x32xf32>
    %cst_30 = arith.constant 9.99999974E-6 : f32
    %69 = vector.broadcast %cst_30 : f32 to vector<8x1xf32>
    %70 = arith.addf %66, %69 : vector<8x1xf32>
    %71 = math.rsqrt %70 : vector<8x1xf32>
    %72 = vector.broadcast %71 : vector<8x1xf32> to vector<8x32xf32>
    %73 = arith.mulf %68, %72 : vector<8x32xf32>
    %74 = vector.shape_cast %53 : vector<32xf32> to vector<1x32xf32>
    %75 = vector.broadcast %74 : vector<1x32xf32> to vector<8x32xf32>
    %76 = arith.mulf %73, %75 : vector<8x32xf32>
    %77 = vector.shape_cast %55 : vector<32xf32> to vector<1x32xf32>
    %78 = vector.broadcast %77 : vector<1x32xf32> to vector<8x32xf32>
    %79 = arith.addf %76, %78 : vector<8x32xf32>
    %80 = arith.truncf %79 : vector<8x32xf32> to vector<8x32xbf16>
    %c0_31 = arith.constant 0 : index
    %c0_32 = arith.constant 0 : index
    %81 = vector.load %arg5[%c0_31, %c0_32] : memref<32x32xbf16, #tpu.memory_space<vmem>>, vector<32x32xbf16>
    %cst_33 = arith.constant dense<0.000000e+00> : vector<8x32xf32>
    %82 = tpu.matmul %80, %81, %cst_33 {dimension_numbers = #tpu.dot_dimension_numbers<[1], [0], [0], [1], [0, 0, 1, 1], [], []>} : vector<8x32xbf16>, vector<32x32xbf16>, vector<8x32xf32> -> vector<8x32xf32>
    %c0_34 = arith.constant 0 : index
    %c0_35 = arith.constant 0 : index
    %83 = vector.load %arg6[%c0_34, %c0_35] : memref<1x32xf32, #tpu.memory_space<vmem>>, vector<1x32xf32>
    %84 = vector.shape_cast %83 : vector<1x32xf32> to vector<32xf32>
    %85 = vector.shape_cast %84 : vector<32xf32> to vector<1x32xf32>
    %86 = vector.broadcast %85 : vector<1x32xf32> to vector<8x32xf32>
    %87 = arith.addf %82, %86 : vector<8x32xf32>
    %88 = arith.truncf %87 : vector<8x32xf32> to vector<8x32xbf16>
    %cst_36 = arith.constant 0.000000e+00 : f32
    %89 = vector.broadcast %cst_36 : f32 to vector<8x32xf32>
    %90 = vector.extract_strided_slice %88 {offsets = [0, 0], sizes = [8, 8], strides = [1, 1]} : vector<8x32xbf16> to vector<8x8xbf16>
    %91 = vector.extract_strided_slice %40 {offsets = [0, 0], sizes = [8, 8], strides = [1, 1]} : vector<8x32xbf16> to vector<8x8xbf16>
    %92 = vector.extract_strided_slice %48 {offsets = [0, 0], sizes = [8, 8], strides = [1, 1]} : vector<8x32xbf16> to vector<8x8xbf16>
    %cst_37 = arith.constant dense<0.000000e+00> : vector<8x8xf32>
    %93 = tpu.matmul %90, %91, %cst_37 {dimension_numbers = #tpu.dot_dimension_numbers<[1], [1], [0], [0], [0, 0, 1, 0], [], []>} : vector<8x8xbf16>, vector<8x8xbf16>, vector<8x8xf32> -> vector<8x8xf32>
    %cst_38 = arith.constant dense<0xFF800000> : vector<8xf32>
    %94 = vector.multi_reduction <maximumf>, %93, %cst_38 [1] : vector<8x8xf32> to vector<8xf32>
    %95 = vector.shape_cast %94 : vector<8xf32> to vector<8x1xf32>
    %96 = vector.broadcast %95 : vector<8x1xf32> to vector<8x8xf32>
    %97 = arith.subf %93, %96 : vector<8x8xf32>
    %98 = math.exp %97 : vector<8x8xf32>
    %cst_39 = arith.constant dense<0.000000e+00> : vector<8xf32>
    %99 = vector.multi_reduction <add>, %98, %cst_39 [1] : vector<8x8xf32> to vector<8xf32>
    %100 = vector.shape_cast %99 : vector<8xf32> to vector<8x1xf32>
    %101 = tpu.reciprocal %100 {approx = true} : vector<8x1xf32> -> vector<8x1xf32>
    %102 = vector.broadcast %101 : vector<8x1xf32> to vector<8x8xf32>
    %103 = arith.mulf %98, %102 : vector<8x8xf32>
    %104 = arith.truncf %103 : vector<8x8xf32> to vector<8x8xbf16>
    %cst_40 = arith.constant dense<0.000000e+00> : vector<8x8xf32>
    %105 = tpu.matmul %104, %92, %cst_40 {dimension_numbers = #tpu.dot_dimension_numbers<[1], [0], [0], [1], [0, 0, 1, 1], [], []>} : vector<8x8xbf16>, vector<8x8xbf16>, vector<8x8xf32> -> vector<8x8xf32>
    %106 = arith.truncf %105 : vector<8x8xf32> to vector<8x8xbf16>
    %c0_41 = arith.constant 0 : index
    %c0_42 = arith.constant 0 : index
    %107 = vector.load %arg11[%c0_41, %c0_42] : memref<32x32xbf16, #tpu.memory_space<vmem>>, vector<8x32xbf16>
    %cst_43 = arith.constant dense<0.000000e+00> : vector<8x32xf32>
    %108 = tpu.matmul %106, %107, %cst_43 {dimension_numbers = #tpu.dot_dimension_numbers<[1], [0], [0], [1], [0, 0, 1, 1], [], []>} : vector<8x8xbf16>, vector<8x32xbf16>, vector<8x32xf32> -> vector<8x32xf32>
    %109 = arith.addf %89, %108 : vector<8x32xf32>
    %110 = vector.extract_strided_slice %88 {offsets = [0, 8], sizes = [8, 8], strides = [1, 1]} : vector<8x32xbf16> to vector<8x8xbf16>
    %111 = vector.extract_strided_slice %40 {offsets = [0, 8], sizes = [8, 8], strides = [1, 1]} : vector<8x32xbf16> to vector<8x8xbf16>
    %112 = vector.extract_strided_slice %48 {offsets = [0, 8], sizes = [8, 8], strides = [1, 1]} : vector<8x32xbf16> to vector<8x8xbf16>
    %cst_44 = arith.constant dense<0.000000e+00> : vector<8x8xf32>
    %113 = tpu.matmul %110, %111, %cst_44 {dimension_numbers = #tpu.dot_dimension_numbers<[1], [1], [0], [0], [0, 0, 1, 0], [], []>} : vector<8x8xbf16>, vector<8x8xbf16>, vector<8x8xf32> -> vector<8x8xf32>
    %cst_45 = arith.constant dense<0xFF800000> : vector<8xf32>
    %114 = vector.multi_reduction <maximumf>, %113, %cst_45 [1] : vector<8x8xf32> to vector<8xf32>
    %115 = vector.shape_cast %114 : vector<8xf32> to vector<8x1xf32>
    %116 = vector.broadcast %115 : vector<8x1xf32> to vector<8x8xf32>
    %117 = arith.subf %113, %116 : vector<8x8xf32>
    %118 = math.exp %117 : vector<8x8xf32>
    %cst_46 = arith.constant dense<0.000000e+00> : vector<8xf32>
    %119 = vector.multi_reduction <add>, %118, %cst_46 [1] : vector<8x8xf32> to vector<8xf32>
    %120 = vector.shape_cast %119 : vector<8xf32> to vector<8x1xf32>
    %121 = tpu.reciprocal %120 {approx = true} : vector<8x1xf32> -> vector<8x1xf32>
    %122 = vector.broadcast %121 : vector<8x1xf32> to vector<8x8xf32>
    %123 = arith.mulf %118, %122 : vector<8x8xf32>
    %124 = arith.truncf %123 : vector<8x8xf32> to vector<8x8xbf16>
    %cst_47 = arith.constant dense<0.000000e+00> : vector<8x8xf32>
    %125 = tpu.matmul %124, %112, %cst_47 {dimension_numbers = #tpu.dot_dimension_numbers<[1], [0], [0], [1], [0, 0, 1, 1], [], []>} : vector<8x8xbf16>, vector<8x8xbf16>, vector<8x8xf32> -> vector<8x8xf32>
    %126 = arith.truncf %125 : vector<8x8xf32> to vector<8x8xbf16>
    %c8 = arith.constant 8 : index
    %c0_48 = arith.constant 0 : index
    %127 = vector.load %arg11[%c8, %c0_48] : memref<32x32xbf16, #tpu.memory_space<vmem>>, vector<8x32xbf16>
    %cst_49 = arith.constant dense<0.000000e+00> : vector<8x32xf32>
    %128 = tpu.matmul %126, %127, %cst_49 {dimension_numbers = #tpu.dot_dimension_numbers<[1], [0], [0], [1], [0, 0, 1, 1], [], []>} : vector<8x8xbf16>, vector<8x32xbf16>, vector<8x32xf32> -> vector<8x32xf32>
    %129 = arith.addf %109, %128 : vector<8x32xf32>
    %130 = vector.extract_strided_slice %88 {offsets = [0, 16], sizes = [8, 8], strides = [1, 1]} : vector<8x32xbf16> to vector<8x8xbf16>
    %131 = vector.extract_strided_slice %40 {offsets = [0, 16], sizes = [8, 8], strides = [1, 1]} : vector<8x32xbf16> to vector<8x8xbf16>
    %132 = vector.extract_strided_slice %48 {offsets = [0, 16], sizes = [8, 8], strides = [1, 1]} : vector<8x32xbf16> to vector<8x8xbf16>
    %cst_50 = arith.constant dense<0.000000e+00> : vector<8x8xf32>
    %133 = tpu.matmul %130, %131, %cst_50 {dimension_numbers = #tpu.dot_dimension_numbers<[1], [1], [0], [0], [0, 0, 1, 0], [], []>} : vector<8x8xbf16>, vector<8x8xbf16>, vector<8x8xf32> -> vector<8x8xf32>
    %cst_51 = arith.constant dense<0xFF800000> : vector<8xf32>
    %134 = vector.multi_reduction <maximumf>, %133, %cst_51 [1] : vector<8x8xf32> to vector<8xf32>
    %135 = vector.shape_cast %134 : vector<8xf32> to vector<8x1xf32>
    %136 = vector.broadcast %135 : vector<8x1xf32> to vector<8x8xf32>
    %137 = arith.subf %133, %136 : vector<8x8xf32>
    %138 = math.exp %137 : vector<8x8xf32>
    %cst_52 = arith.constant dense<0.000000e+00> : vector<8xf32>
    %139 = vector.multi_reduction <add>, %138, %cst_52 [1] : vector<8x8xf32> to vector<8xf32>
    %140 = vector.shape_cast %139 : vector<8xf32> to vector<8x1xf32>
    %141 = tpu.reciprocal %140 {approx = true} : vector<8x1xf32> -> vector<8x1xf32>
    %142 = vector.broadcast %141 : vector<8x1xf32> to vector<8x8xf32>
    %143 = arith.mulf %138, %142 : vector<8x8xf32>
    %144 = arith.truncf %143 : vector<8x8xf32> to vector<8x8xbf16>
    %cst_53 = arith.constant dense<0.000000e+00> : vector<8x8xf32>
    %145 = tpu.matmul %144, %132, %cst_53 {dimension_numbers = #tpu.dot_dimension_numbers<[1], [0], [0], [1], [0, 0, 1, 1], [], []>} : vector<8x8xbf16>, vector<8x8xbf16>, vector<8x8xf32> -> vector<8x8xf32>
    %146 = arith.truncf %145 : vector<8x8xf32> to vector<8x8xbf16>
    %c16 = arith.constant 16 : index
    %c0_54 = arith.constant 0 : index
    %147 = vector.load %arg11[%c16, %c0_54] : memref<32x32xbf16, #tpu.memory_space<vmem>>, vector<8x32xbf16>
    %cst_55 = arith.constant dense<0.000000e+00> : vector<8x32xf32>
    %148 = tpu.matmul %146, %147, %cst_55 {dimension_numbers = #tpu.dot_dimension_numbers<[1], [0], [0], [1], [0, 0, 1, 1], [], []>} : vector<8x8xbf16>, vector<8x32xbf16>, vector<8x32xf32> -> vector<8x32xf32>
    %149 = arith.addf %129, %148 : vector<8x32xf32>
    %150 = vector.extract_strided_slice %88 {offsets = [0, 24], sizes = [8, 8], strides = [1, 1]} : vector<8x32xbf16> to vector<8x8xbf16>
    %151 = vector.extract_strided_slice %40 {offsets = [0, 24], sizes = [8, 8], strides = [1, 1]} : vector<8x32xbf16> to vector<8x8xbf16>
    %152 = vector.extract_strided_slice %48 {offsets = [0, 24], sizes = [8, 8], strides = [1, 1]} : vector<8x32xbf16> to vector<8x8xbf16>
    %cst_56 = arith.constant dense<0.000000e+00> : vector<8x8xf32>
    %153 = tpu.matmul %150, %151, %cst_56 {dimension_numbers = #tpu.dot_dimension_numbers<[1], [1], [0], [0], [0, 0, 1, 0], [], []>} : vector<8x8xbf16>, vector<8x8xbf16>, vector<8x8xf32> -> vector<8x8xf32>
    %cst_57 = arith.constant dense<0xFF800000> : vector<8xf32>
    %154 = vector.multi_reduction <maximumf>, %153, %cst_57 [1] : vector<8x8xf32> to vector<8xf32>
    %155 = vector.shape_cast %154 : vector<8xf32> to vector<8x1xf32>
    %156 = vector.broadcast %155 : vector<8x1xf32> to vector<8x8xf32>
    %157 = arith.subf %153, %156 : vector<8x8xf32>
    %158 = math.exp %157 : vector<8x8xf32>
    %cst_58 = arith.constant dense<0.000000e+00> : vector<8xf32>
    %159 = vector.multi_reduction <add>, %158, %cst_58 [1] : vector<8x8xf32> to vector<8xf32>
    %160 = vector.shape_cast %159 : vector<8xf32> to vector<8x1xf32>
    %161 = tpu.reciprocal %160 {approx = true} : vector<8x1xf32> -> vector<8x1xf32>
    %162 = vector.broadcast %161 : vector<8x1xf32> to vector<8x8xf32>
    %163 = arith.mulf %158, %162 : vector<8x8xf32>
    %164 = arith.truncf %163 : vector<8x8xf32> to vector<8x8xbf16>
    %cst_59 = arith.constant dense<0.000000e+00> : vector<8x8xf32>
    %165 = tpu.matmul %164, %152, %cst_59 {dimension_numbers = #tpu.dot_dimension_numbers<[1], [0], [0], [1], [0, 0, 1, 1], [], []>} : vector<8x8xbf16>, vector<8x8xbf16>, vector<8x8xf32> -> vector<8x8xf32>
    %166 = arith.truncf %165 : vector<8x8xf32> to vector<8x8xbf16>
    %c24 = arith.constant 24 : index
    %c0_60 = arith.constant 0 : index
    %167 = vector.load %arg11[%c24, %c0_60] : memref<32x32xbf16, #tpu.memory_space<vmem>>, vector<8x32xbf16>
    %cst_61 = arith.constant dense<0.000000e+00> : vector<8x32xf32>
    %168 = tpu.matmul %166, %167, %cst_61 {dimension_numbers = #tpu.dot_dimension_numbers<[1], [0], [0], [1], [0, 0, 1, 1], [], []>} : vector<8x8xbf16>, vector<8x32xbf16>, vector<8x32xf32> -> vector<8x32xf32>
    %169 = arith.addf %149, %168 : vector<8x32xf32>
    %170 = arith.addf %51, %169 : vector<8x32xf32>
    %c0_62 = arith.constant 0 : index
    %c0_63 = arith.constant 0 : index
    %171 = vector.load %arg12[%c0_62, %c0_63] : memref<1x32xf32, #tpu.memory_space<vmem>>, vector<1x32xf32>
    %172 = vector.shape_cast %171 : vector<1x32xf32> to vector<32xf32>
    %173 = vector.shape_cast %172 : vector<32xf32> to vector<1x32xf32>
    %174 = vector.broadcast %173 : vector<1x32xf32> to vector<8x32xf32>
    %175 = arith.addf %170, %174 : vector<8x32xf32>
    %c0_64 = arith.constant 0 : index
    %c0_65 = arith.constant 0 : index
    %176 = vector.load %arg13[%c0_64, %c0_65] : memref<1x32xf32, #tpu.memory_space<vmem>>, vector<1x32xf32>
    %177 = vector.shape_cast %176 : vector<1x32xf32> to vector<32xf32>
    %c0_66 = arith.constant 0 : index
    %c0_67 = arith.constant 0 : index
    %178 = vector.load %arg14[%c0_66, %c0_67] : memref<1x32xf32, #tpu.memory_space<vmem>>, vector<1x32xf32>
    %179 = vector.shape_cast %178 : vector<1x32xf32> to vector<32xf32>
    %cst_68 = arith.constant dense<0.000000e+00> : vector<8xf32>
    %180 = vector.multi_reduction <add>, %175, %cst_68 [1] : vector<8x32xf32> to vector<8xf32>
    %181 = vector.shape_cast %180 : vector<8xf32> to vector<8x1xf32>
    %cst_69 = arith.constant 3.200000e+01 : f32
    %182 = vector.broadcast %cst_69 : f32 to vector<8x1xf32>
    %183 = arith.divf %181, %182 : vector<8x1xf32>
    %184 = vector.broadcast %183 : vector<8x1xf32> to vector<8x32xf32>
    %185 = arith.subf %175, %184 : vector<8x32xf32>
    %186 = arith.mulf %185, %185 : vector<8x32xf32>
    %cst_70 = arith.constant dense<0.000000e+00> : vector<8xf32>
    %187 = vector.multi_reduction <add>, %186, %cst_70 [1] : vector<8x32xf32> to vector<8xf32>
    %188 = vector.shape_cast %187 : vector<8xf32> to vector<8x1xf32>
    %cst_71 = arith.constant 3.200000e+01 : f32
    %189 = vector.broadcast %cst_71 : f32 to vector<8x1xf32>
    %190 = arith.divf %188, %189 : vector<8x1xf32>
    %191 = vector.broadcast %183 : vector<8x1xf32> to vector<8x32xf32>
    %192 = arith.subf %175, %191 : vector<8x32xf32>
    %cst_72 = arith.constant 9.99999974E-6 : f32
    %193 = vector.broadcast %cst_72 : f32 to vector<8x1xf32>
    %194 = arith.addf %190, %193 : vector<8x1xf32>
    %195 = math.rsqrt %194 : vector<8x1xf32>
    %196 = vector.broadcast %195 : vector<8x1xf32> to vector<8x32xf32>
    %197 = arith.mulf %192, %196 : vector<8x32xf32>
    %198 = vector.shape_cast %177 : vector<32xf32> to vector<1x32xf32>
    %199 = vector.broadcast %198 : vector<1x32xf32> to vector<8x32xf32>
    %200 = arith.mulf %197, %199 : vector<8x32xf32>
    %201 = vector.shape_cast %179 : vector<32xf32> to vector<1x32xf32>
    %202 = vector.broadcast %201 : vector<1x32xf32> to vector<8x32xf32>
    %203 = arith.addf %200, %202 : vector<8x32xf32>
    %204 = arith.truncf %203 : vector<8x32xf32> to vector<8x32xbf16>
    %c0_73 = arith.constant 0 : index
    %c0_74 = arith.constant 0 : index
    %205 = vector.load %arg15[%c0_73, %c0_74] : memref<32x128xbf16, #tpu.memory_space<vmem>>, vector<32x128xbf16>
    %cst_75 = arith.constant dense<0.000000e+00> : vector<8x128xf32>
    %206 = tpu.matmul %204, %205, %cst_75 {dimension_numbers = #tpu.dot_dimension_numbers<[1], [0], [0], [1], [0, 0, 1, 1], [], []>} : vector<8x32xbf16>, vector<32x128xbf16>, vector<8x128xf32> -> vector<8x128xf32>
    %c0_76 = arith.constant 0 : index
    %c0_77 = arith.constant 0 : index
    %207 = vector.load %arg16[%c0_76, %c0_77] : memref<1x128xf32, #tpu.memory_space<vmem>>, vector<1x128xf32>
    %208 = vector.shape_cast %207 : vector<1x128xf32> to vector<128xf32>
    %209 = vector.shape_cast %208 : vector<128xf32> to vector<1x128xf32>
    %210 = vector.broadcast %209 : vector<1x128xf32> to vector<8x128xf32>
    %211 = arith.addf %206, %210 : vector<8x128xf32>
    %cst_78 = arith.constant 5.000000e-01 : f32
    %212 = vector.broadcast %cst_78 : f32 to vector<8x128xf32>
    %213 = arith.mulf %212, %211 : vector<8x128xf32>
    %cst_79 = arith.constant 0.707106769 : f32
    %214 = vector.broadcast %cst_79 : f32 to vector<8x128xf32>
    %215 = arith.mulf %211, %214 : vector<8x128xf32>
    %216 = math.erf %215 : vector<8x128xf32>
    %cst_80 = arith.constant 1.000000e+00 : f32
    %217 = vector.broadcast %cst_80 : f32 to vector<8x128xf32>
    %218 = arith.addf %217, %216 : vector<8x128xf32>
    %219 = arith.mulf %213, %218 : vector<8x128xf32>
    %220 = arith.truncf %219 : vector<8x128xf32> to vector<8x128xbf16>
    %c0_81 = arith.constant 0 : index
    %c0_82 = arith.constant 0 : index
    %221 = vector.load %arg17[%c0_81, %c0_82] : memref<128x32xbf16, #tpu.memory_space<vmem>>, vector<128x32xbf16>
    %cst_83 = arith.constant dense<0.000000e+00> : vector<8x32xf32>
    %222 = tpu.matmul %220, %221, %cst_83 {dimension_numbers = #tpu.dot_dimension_numbers<[1], [0], [0], [1], [0, 0, 1, 1], [], []>} : vector<8x128xbf16>, vector<128x32xbf16>, vector<8x32xf32> -> vector<8x32xf32>
    %c0_84 = arith.constant 0 : index
    %c0_85 = arith.constant 0 : index
    %223 = vector.load %arg18[%c0_84, %c0_85] : memref<1x32xf32, #tpu.memory_space<vmem>>, vector<1x32xf32>
    %224 = vector.shape_cast %223 : vector<1x32xf32> to vector<32xf32>
    %225 = vector.shape_cast %224 : vector<32xf32> to vector<1x32xf32>
    %226 = vector.broadcast %225 : vector<1x32xf32> to vector<8x32xf32>
    %227 = arith.addf %222, %226 : vector<8x32xf32>
    %228 = arith.addf %175, %227 : vector<8x32xf32>
    %c0_86 = arith.constant 0 : index
    %c0_87 = arith.constant 0 : index
    %c0_88 = arith.constant 0 : index
    %229 = vector.load %arg19[%c0_86, %c0_87, %c0_88] : memref<1x8x32xf32, #tpu.memory_space<vmem>>, vector<1x8x32xf32>
    %230 = vector.shape_cast %229 : vector<1x8x32xf32> to vector<8x32xf32>
    %231 = vector.shape_cast %228 : vector<8x32xf32> to vector<1x8x32xf32>
    tpu.vector_store %arg19[%c0_86, %c0_87, %c0_88], %231 {strides = array<i32>} : memref<1x8x32xf32, #tpu.memory_space<vmem>>, vector<1x8x32xf32>,
    return
  }
  func.func @transform_0(%arg0: i32, %arg1: i32) -> (i32, i32, i32) {
    %c0_i32 = arith.constant 0 : i32
    %c0_i32_0 = arith.constant 0 : i32
    %c0_i32_1 = arith.constant 0 : i32
    return %arg0, %c0_i32, %c0_i32_0 : i32, i32, i32
  }
  func.func @transform_1(%arg0: i32, %arg1: i32) -> (i32, i32) {
    %c0_i32 = arith.constant 0 : i32
    %c0_i32_0 = arith.constant 0 : i32
    %c0_i32_1 = arith.constant 0 : i32
    return %c0_i32, %c0_i32_0 : i32, i32
  }
  func.func @transform_2(%arg0: i32, %arg1: i32) -> (i32, i32) {
    %c0_i32 = arith.constant 0 : i32
    %c0_i32_0 = arith.constant 0 : i32
    %c0_i32_1 = arith.constant 0 : i32
    return %c0_i32, %c0_i32_0 : i32, i32
  }
  func.func @transform_3(%arg0: i32, %arg1: i32) -> (i32, i32) {
    %c0_i32 = arith.constant 0 : i32
    %c0_i32_0 = arith.constant 0 : i32
    %c0_i32_1 = arith.constant 0 : i32
    return %c0_i32, %c0_i32_0 : i32, i32
  }
  func.func @transform_4(%arg0: i32, %arg1: i32) -> (i32, i32) {
    %c0_i32 = arith.constant 0 : i32
    %c0_i32_0 = arith.constant 0 : i32
    %c0_i32_1 = arith.constant 0 : i32
    return %c0_i32, %c0_i32_0 : i32, i32
  }
  func.func @transform_5(%arg0: i32, %arg1: i32) -> (i32, i32) {
    %c0_i32 = arith.constant 0 : i32
    %c0_i32_0 = arith.constant 0 : i32
    %c0_i32_1 = arith.constant 0 : i32
    return %c0_i32, %c0_i32_0 : i32, i32
  }
  func.func @transform_6(%arg0: i32, %arg1: i32) -> (i32, i32) {
    %c0_i32 = arith.constant 0 : i32
    %c0_i32_0 = arith.constant 0 : i32
    %c0_i32_1 = arith.constant 0 : i32
    return %c0_i32, %c0_i32_0 : i32, i32
  }
  func.func @transform_7(%arg0: i32, %arg1: i32) -> (i32, i32) {
    %c0_i32 = arith.constant 0 : i32
    %c0_i32_0 = arith.constant 0 : i32
    %c0_i32_1 = arith.constant 0 : i32
    return %c0_i32, %c0_i32_0 : i32, i32
  }
  func.func @transform_8(%arg0: i32, %arg1: i32) -> (i32, i32) {
    %c0_i32 = arith.constant 0 : i32
    %c0_i32_0 = arith.constant 0 : i32
    %c0_i32_1 = arith.constant 0 : i32
    return %c0_i32, %c0_i32_0 : i32, i32
  }
  func.func @transform_9(%arg0: i32, %arg1: i32) -> (i32, i32) {
    %c0_i32 = arith.constant 0 : i32
    %c0_i32_0 = arith.constant 0 : i32
    %c0_i32_1 = arith.constant 0 : i32
    return %c0_i32, %c0_i32_0 : i32, i32
  }
  func.func @transform_10(%arg0: i32, %arg1: i32) -> (i32, i32) {
    %c0_i32 = arith.constant 0 : i32
    %c0_i32_0 = arith.constant 0 : i32
    %c0_i32_1 = arith.constant 0 : i32
    return %c0_i32, %c0_i32_0 : i32, i32
  }
  func.func @transform_11(%arg0: i32, %arg1: i32) -> (i32, i32) {
    %c0_i32 = arith.constant 0 : i32
    %c0_i32_0 = arith.constant 0 : i32
    %c0_i32_1 = arith.constant 0 : i32
    return %c0_i32, %c0_i32_0 : i32, i32
  }
  func.func @transform_12(%arg0: i32, %arg1: i32) -> (i32, i32) {
    %c0_i32 = arith.constant 0 : i32
    %c0_i32_0 = arith.constant 0 : i32
    %c0_i32_1 = arith.constant 0 : i32
    return %c0_i32, %c0_i32_0 : i32, i32
  }
  func.func @transform_13(%arg0: i32, %arg1: i32) -> (i32, i32) {
    %c0_i32 = arith.constant 0 : i32
    %c0_i32_0 = arith.constant 0 : i32
    %c0_i32_1 = arith.constant 0 : i32
    return %c0_i32, %c0_i32_0 : i32, i32
  }
  func.func @transform_14(%arg0: i32, %arg1: i32) -> (i32, i32) {
    %c0_i32 = arith.constant 0 : i32
    %c0_i32_0 = arith.constant 0 : i32
    %c0_i32_1 = arith.constant 0 : i32
    return %c0_i32, %c0_i32_0 : i32, i32
  }
  func.func @transform_15(%arg0: i32, %arg1: i32) -> (i32, i32) {
    %c0_i32 = arith.constant 0 : i32
    %c0_i32_0 = arith.constant 0 : i32
    %c0_i32_1 = arith.constant 0 : i32
    return %c0_i32, %c0_i32_0 : i32, i32
  }
  func.func @transform_16(%arg0: i32, %arg1: i32) -> (i32, i32) {
    %c0_i32 = arith.constant 0 : i32
    %c0_i32_0 = arith.constant 0 : i32
    %c0_i32_1 = arith.constant 0 : i32
    return %c0_i32, %c0_i32_0 : i32, i32
  }
  func.func @transform_17(%arg0: i32, %arg1: i32) -> (i32, i32, i32) {
    %c0_i32 = arith.constant 0 : i32
    %c0_i32_0 = arith.constant 0 : i32
    return %arg0, %arg1, %c0_i32 : i32, i32, i32
  }
}

module attributes {stable_mosaic.version = 11 : i64} {
  func.func @_block_kernel(%arg0: i32, %arg1: i32, %arg2: memref<1x8x32xf32, #tpu.memory_space<vmem>>, %arg3: memref<1x32xf32, #tpu.memory_space<vmem>>, %arg4: memref<1x32xf32, #tpu.memory_space<vmem>>, %arg5: memref<32x32xbf16, #tpu.memory_space<vmem>>, %arg6: memref<1x32xf32, #tpu.memory_space<vmem>>, %arg7: memref<32x32xbf16, #tpu.memory_space<vmem>>, %arg8: memref<1x32xf32, #tpu.memory_space<vmem>>, %arg9: memref<32x32xbf16, #tpu.memory_space<vmem>>, %arg10: memref<1x32xf32, #tpu.memory_space<vmem>>, %arg11: memref<32x32xbf16, #tpu.memory_space<vmem>>, %arg12: memref<1x32xf32, #tpu.memory_space<vmem>>, %arg13: memref<1x32xf32, #tpu.memory_space<vmem>>, %arg14: memref<1x32xf32, #tpu.memory_space<vmem>>, %arg15: memref<32x128xbf16, #tpu.memory_space<vmem>>, %arg16: memref<1x128xf32, #tpu.memory_space<vmem>>, %arg17: memref<128x32xbf16, #tpu.memory_space<vmem>>, %arg18: memref<1x32xf32, #tpu.memory_space<vmem>>, %arg19: memref<1x8x32xf32, #tpu.memory_space<vmem>>) attributes {dimension_semantics = [#tpu.dimension_semantics<parallel>, #tpu.dimension_semantics<parallel>], iteration_bounds = array<i64: 2, 1>, scalar_prefetch = 0 : i64, scratch_operands = 0 : i64, tpu.core_type = #tpu.core_type<tc>, window_params = [{transform_indices = @transform_0, window_bounds = array<i64: 1, 8, 32>}, {pipeline_mode = #tpu.pipeline_mode<synchronous>, transform_indices = @transform_1, window_bounds = array<i64: 1, 32>}, {pipeline_mode = #tpu.pipeline_mode<synchronous>, transform_indices = @transform_2, window_bounds = array<i64: 1, 32>}, {pipeline_mode = #tpu.pipeline_mode<synchronous>, transform_indices = @transform_3, window_bounds = array<i64: 32, 32>}, {pipeline_mode = #tpu.pipeline_mode<synchronous>, transform_indices = @transform_4, window_bounds = array<i64: 1, 32>}, {pipeline_mode = #tpu.pipeline_mode<synchronous>, transform_indices = @transform_5, window_bounds = array<i64: 32, 32>}, {pipeline_mode = #tpu.pipeline_mode<synchronous>, transform_indices = @transform_6, window_bounds = array<i64: 1, 32>}, {pipeline_mode = #tpu.pipeline_mode<synchronous>, transform_indices = @transform_7, window_bounds = array<i64: 32, 32>}, {pipeline_mode = #tpu.pipeline_mode<synchronous>, transform_indices = @transform_8, window_bounds = array<i64: 1, 32>}, {pipeline_mode = #tpu.pipeline_mode<synchronous>, transform_indices = @transform_9, window_bounds = array<i64: 32, 32>}, {pipeline_mode = #tpu.pipeline_mode<synchronous>, transform_indices = @transform_10, window_bounds = array<i64: 1, 32>}, {pipeline_mode = #tpu.pipeline_mode<synchronous>, transform_indices = @transform_11, window_bounds = array<i64: 1, 32>}, {pipeline_mode = #tpu.pipeline_mode<synchronous>, transform_indices = @transform_12, window_bounds = array<i64: 1, 32>}, {pipeline_mode = #tpu.pipeline_mode<synchronous>, transform_indices = @transform_13, window_bounds = array<i64: 32, 128>}, {pipeline_mode = #tpu.pipeline_mode<synchronous>, transform_indices = @transform_14, window_bounds = array<i64: 1, 128>}, {pipeline_mode = #tpu.pipeline_mode<synchronous>, transform_indices = @transform_15, window_bounds = array<i64: 128, 32>}, {pipeline_mode = #tpu.pipeline_mode<synchronous>, transform_indices = @transform_16, window_bounds = array<i64: 1, 32>}, {transform_indices = @transform_17, window_bounds = array<i64: 1, 8, 32>}]} {
    %c8_i32 = arith.constant 8 : i32
    %0 = arith.muli %arg1, %c8_i32 : i32
    %1 = tpu.assume_multiple %0, 8 : i32
    %c0 = arith.constant 0 : index
    %c0_0 = arith.constant 0 : index
    %c0_1 = arith.constant 0 : index
    %2 = vector.load %arg2[%c0, %c0_0, %c0_1] : memref<1x8x32xf32, #tpu.memory_space<vmem>>, vector<1x8x32xf32>
    %3 = vector.shape_cast %2 : vector<1x8x32xf32> to vector<8x32xf32>
    %c0_2 = arith.constant 0 : index
    %c0_3 = arith.constant 0 : index
    %4 = vector.load %arg3[%c0_2, %c0_3] : memref<1x32xf32, #tpu.memory_space<vmem>>, vector<1x32xf32>
    %5 = vector.shape_cast %4 : vector<1x32xf32> to vector<32xf32>
    %c0_4 = arith.constant 0 : index
    %c0_5 = arith.constant 0 : index
    %6 = vector.load %arg4[%c0_4, %c0_5] : memref<1x32xf32, #tpu.memory_space<vmem>>, vector<1x32xf32>
    %7 = vector.shape_cast %6 : vector<1x32xf32> to vector<32xf32>
    %cst = arith.constant dense<0.000000e+00> : vector<8xf32>
    %8 = vector.multi_reduction <add>, %3, %cst [1] : vector<8x32xf32> to vector<8xf32>
    %9 = vector.shape_cast %8 : vector<8xf32> to vector<8x1xf32>
    %cst_6 = arith.constant 3.200000e+01 : f32
    %10 = vector.broadcast %cst_6 : f32 to vector<8x1xf32>
    %11 = arith.divf %9, %10 : vector<8x1xf32>
    %12 = vector.broadcast %11 : vector<8x1xf32> to vector<8x32xf32>
    %13 = arith.subf %3, %12 : vector<8x32xf32>
    %14 = arith.mulf %13, %13 : vector<8x32xf32>
    %cst_7 = arith.constant dense<0.000000e+00> : vector<8xf32>
    %15 = vector.multi_reduction <add>, %14, %cst_7 [1] : vector<8x32xf32> to vector<8xf32>
    %16 = vector.shape_cast %15 : vector<8xf32> to vector<8x1xf32>
    %cst_8 = arith.constant 3.200000e+01 : f32
    %17 = vector.broadcast %cst_8 : f32 to vector<8x1xf32>
    %18 = arith.divf %16, %17 : vector<8x1xf32>
    %19 = vector.broadcast %11 : vector<8x1xf32> to vector<8x32xf32>
    %20 = arith.subf %3, %19 : vector<8x32xf32>
    %cst_9 = arith.constant 9.99999974E-6 : f32
    %21 = vector.broadcast %cst_9 : f32 to vector<8x1xf32>
    %22 = arith.addf %18, %21 : vector<8x1xf32>
    %23 = math.rsqrt %22 : vector<8x1xf32>
    %24 = vector.broadcast %23 : vector<8x1xf32> to vector<8x32xf32>
    %25 = arith.mulf %20, %24 : vector<8x32xf32>
    %26 = vector.shape_cast %5 : vector<32xf32> to vector<1x32xf32>
    %27 = vector.broadcast %26 : vector<1x32xf32> to vector<8x32xf32>
    %28 = arith.mulf %25, %27 : vector<8x32xf32>
    %29 = vector.shape_cast %7 : vector<32xf32> to vector<1x32xf32>
    %30 = vector.broadcast %29 : vector<1x32xf32> to vector<8x32xf32>
    %31 = arith.addf %28, %30 : vector<8x32xf32>
    %32 = arith.truncf %31 : vector<8x32xf32> to vector<8x32xbf16>
    %c0_10 = arith.constant 0 : index
    %c0_11 = arith.constant 0 : index
    %33 = vector.load %arg7[%c0_10, %c0_11] : memref<32x32xbf16, #tpu.memory_space<vmem>>, vector<32x32xbf16>
    %cst_12 = arith.constant dense<0.000000e+00> : vector<8x32xf32>
    %34 = tpu.matmul %32, %33, %cst_12 {dimension_numbers = #tpu.dot_dimension_numbers<[1], [0], [0], [1], [0, 0, 1, 1], [], []>} : vector<8x32xbf16>, vector<32x32xbf16>, vector<8x32xf32> -> vector<8x32xf32>
    %c0_13 = arith.constant 0 : index
    %c0_14 = arith.constant 0 : index
    %35 = vector.load %arg8[%c0_13, %c0_14] : memref<1x32xf32, #tpu.memory_space<vmem>>, vector<1x32xf32>
    %36 = vector.shape_cast %35 : vector<1x32xf32> to vector<32xf32>
    %37 = vector.shape_cast %36 : vector<32xf32> to vector<1x32xf32>
    %38 = vector.broadcast %37 : vector<1x32xf32> to vector<8x32xf32>
    %39 = arith.addf %34, %38 : vector<8x32xf32>
    %40 = arith.truncf %39 : vector<8x32xf32> to vector<8x32xbf16>
    %c0_15 = arith.constant 0 : index
    %c0_16 = arith.constant 0 : index
    %41 = vector.load %arg9[%c0_15, %c0_16] : memref<32x32xbf16, #tpu.memory_space<vmem>>, vector<32x32xbf16>
    %cst_17 = arith.constant dense<0.000000e+00> : vector<8x32xf32>
    %42 = tpu.matmul %32, %41, %cst_17 {dimension_numbers = #tpu.dot_dimension_numbers<[1], [0], [0], [1], [0, 0, 1, 1], [], []>} : vector<8x32xbf16>, vector<32x32xbf16>, vector<8x32xf32> -> vector<8x32xf32>
    %c0_18 = arith.constant 0 : index
    %c0_19 = arith.constant 0 : index
    %43 = vector.load %arg10[%c0_18, %c0_19] : memref<1x32xf32, #tpu.memory_space<vmem>>, vector<1x32xf32>
    %44 = vector.shape_cast %43 : vector<1x32xf32> to vector<32xf32>
    %45 = vector.shape_cast %44 : vector<32xf32> to vector<1x32xf32>
    %46 = vector.broadcast %45 : vector<1x32xf32> to vector<8x32xf32>
    %47 = arith.addf %42, %46 : vector<8x32xf32>
    %48 = arith.truncf %47 : vector<8x32xf32> to vector<8x32xbf16>
    %c0_20 = arith.constant 0 : index
    %49 = arith.index_cast %1 : i32 to index
    %c0_21 = arith.constant 0 : index
    %50 = vector.load %arg2[%c0_20, %49, %c0_21] : memref<1x8x32xf32, #tpu.memory_space<vmem>>, vector<1x8x32xf32>
    %51 = vector.shape_cast %50 : vector<1x8x32xf32> to vector<8x32xf32>
    %c0_22 = arith.constant 0 : index
    %c0_23 = arith.constant 0 : index
    %52 = vector.load %arg3[%c0_22, %c0_23] : memref<1x32xf32, #tpu.memory_space<vmem>>, vector<1x32xf32>
    %53 = vector.shape_cast %52 : vector<1x32xf32> to vector<32xf32>
    %c0_24 = arith.constant 0 : index
    %c0_25 = arith.constant 0 : index
    %54 = vector.load %arg4[%c0_24, %c0_25] : memref<1x32xf32, #tpu.memory_space<vmem>>, vector<1x32xf32>
    %55 = vector.shape_cast %54 : vector<1x32xf32> to vector<32xf32>
    %cst_26 = arith.constant dense<0.000000e+00> : vector<8xf32>
    %56 = vector.multi_reduction <add>, %51, %cst_26 [1] : vector<8x32xf32> to vector<8xf32>
    %57 = vector.shape_cast %56 : vector<8xf32> to vector<8x1xf32>
    %cst_27 = arith.constant 3.200000e+01 : f32
    %58 = vector.broadcast %cst_27 : f32 to vector<8x1xf32>
    %59 = arith.divf %57, %58 : vector<8x1xf32>
    %60 = vector.broadcast %59 : vector<8x1xf32> to vector<8x32xf32>
    %61 = arith.subf %51, %60 : vector<8x32xf32>
    %62 = arith.mulf %61, %61 : vector<8x32xf32>
    %cst_28 = arith.constant dense<0.000000e+00> : vector<8xf32>
    %63 = vector.multi_reduction <add>, %62, %cst_28 [1] : vector<8x32xf32> to vector<8xf32>
    %64 = vector.shape_cast %63 : vector<8xf32> to vector<8x1xf32>
    %cst_29 = arith.constant 3.200000e+01 : f32
    %65 = vector.broadcast %cst_29 : f32 to vector<8x1xf32>
    %66 = arith.divf %64, %65 : vector<8x1xf32>
    %67 = vector.broadcast %59 : vector<8x1xf32> to vector<8x32xf32>
    %68 = arith.subf %51, %67 : vector<8x32xf32>
    %cst_30 = arith.constant 9.99999974E-6 : f32
    %69 = vector.broadcast %cst_30 : f32 to vector<8x1xf32>
    %70 = arith.addf %66, %69 : vector<8x1xf32>
    %71 = math.rsqrt %70 : vector<8x1xf32>
    %72 = vector.broadcast %71 : vector<8x1xf32> to vector<8x32xf32>
    %73 = arith.mulf %68, %72 : vector<8x32xf32>
    %74 = vector.shape_cast %53 : vector<32xf32> to vector<1x32xf32>
    %75 = vector.broadcast %74 : vector<1x32xf32> to vector<8x32xf32>
    %76 = arith.mulf %73, %75 : vector<8x32xf32>
    %77 = vector.shape_cast %55 : vector<32xf32> to vector<1x32xf32>
    %78 = vector.broadcast %77 : vector<1x32xf32> to vector<8x32xf32>
    %79 = arith.addf %76, %78 : vector<8x32xf32>
    %80 = arith.truncf %79 : vector<8x32xf32> to vector<8x32xbf16>
    %c0_31 = arith.constant 0 : index
    %c0_32 = arith.constant 0 : index
    %81 = vector.load %arg5[%c0_31, %c0_32] : memref<32x32xbf16, #tpu.memory_space<vmem>>, vector<32x32xbf16>
    %cst_33 = arith.constant dense<0.000000e+00> : vector<8x32xf32>
    %82 = tpu.matmul %80, %81, %cst_33 {dimension_numbers = #tpu.dot_dimension_numbers<[1], [0], [0], [1], [0, 0, 1, 1], [], []>} : vector<8x32xbf16>, vector<32x32xbf16>, vector<8x32xf32> -> vector<8x32xf32>
    %c0_34 = arith.constant 0 : index
    %c0_35 = arith.constant 0 : index
    %83 = vector.load %arg6[%c0_34, %c0_35] : memref<1x32xf32, #tpu.memory_space<vmem>>, vector<1x32xf32>
    %84 = vector.shape_cast %83 : vector<1x32xf32> to vector<32xf32>
    %85 = vector.shape_cast %84 : vector<32xf32> to vector<1x32xf32>
    %86 = vector.broadcast %85 : vector<1x32xf32> to vector<8x32xf32>
    %87 = arith.addf %82, %86 : vector<8x32xf32>
    %88 = arith.truncf %87 : vector<8x32xf32> to vector<8x32xbf16>
    %cst_36 = arith.constant 0.000000e+00 : f32
    %89 = vector.broadcast %cst_36 : f32 to vector<8x32xf32>
    %90 = vector.extract_strided_slice %88 {offsets = [0, 0], sizes = [8, 8], strides = [1, 1]} : vector<8x32xbf16> to vector<8x8xbf16>
    %91 = vector.extract_strided_slice %40 {offsets = [0, 0], sizes = [8, 8], strides = [1, 1]} : vector<8x32xbf16> to vector<8x8xbf16>
    %92 = vector.extract_strided_slice %48 {offsets = [0, 0], sizes = [8, 8], strides = [1, 1]} : vector<8x32xbf16> to vector<8x8xbf16>
    %cst_37 = arith.constant dense<0.000000e+00> : vector<8x8xf32>
    %93 = tpu.matmul %90, %91, %cst_37 {dimension_numbers = #tpu.dot_dimension_numbers<[1], [1], [0], [0], [0, 0, 1, 0], [], []>} : vector<8x8xbf16>, vector<8x8xbf16>, vector<8x8xf32> -> vector<8x8xf32>
    %cst_38 = arith.constant dense<0xFF800000> : vector<8xf32>
    %94 = vector.multi_reduction <maximumf>, %93, %cst_38 [1] : vector<8x8xf32> to vector<8xf32>
    %95 = vector.shape_cast %94 : vector<8xf32> to vector<8x1xf32>
    %96 = vector.broadcast %95 : vector<8x1xf32> to vector<8x8xf32>
    %97 = arith.subf %93, %96 : vector<8x8xf32>
    %98 = math.exp %97 : vector<8x8xf32>
    %cst_39 = arith.constant dense<0.000000e+00> : vector<8xf32>
    %99 = vector.multi_reduction <add>, %98, %cst_39 [1] : vector<8x8xf32> to vector<8xf32>
    %100 = vector.shape_cast %99 : vector<8xf32> to vector<8x1xf32>
    %101 = tpu.reciprocal %100 {approx = true} : vector<8x1xf32> -> vector<8x1xf32>
    %102 = vector.broadcast %101 : vector<8x1xf32> to vector<8x8xf32>
    %103 = arith.mulf %98, %102 : vector<8x8xf32>
    %104 = arith.truncf %103 : vector<8x8xf32> to vector<8x8xbf16>
    %cst_40 = arith.constant dense<0.000000e+00> : vector<8x8xf32>
    %105 = tpu.matmul %104, %92, %cst_40 {dimension_numbers = #tpu.dot_dimension_numbers<[1], [0], [0], [1], [0, 0, 1, 1], [], []>} : vector<8x8xbf16>, vector<8x8xbf16>, vector<8x8xf32> -> vector<8x8xf32>
    %106 = arith.truncf %105 : vector<8x8xf32> to vector<8x8xbf16>
    %c0_41 = arith.constant 0 : index
    %c0_42 = arith.constant 0 : index
    %107 = vector.load %arg11[%c0_41, %c0_42] : memref<32x32xbf16, #tpu.memory_space<vmem>>, vector<8x32xbf16>
    %cst_43 = arith.constant dense<0.000000e+00> : vector<8x32xf32>
    %108 = tpu.matmul %106, %107, %cst_43 {dimension_numbers = #tpu.dot_dimension_numbers<[1], [0], [0], [1], [0, 0, 1, 1], [], []>} : vector<8x8xbf16>, vector<8x32xbf16>, vector<8x32xf32> -> vector<8x32xf32>
    %109 = arith.addf %89, %108 : vector<8x32xf32>
    %110 = vector.extract_strided_slice %88 {offsets = [0, 8], sizes = [8, 8], strides = [1, 1]} : vector<8x32xbf16> to vector<8x8xbf16>
    %111 = vector.extract_strided_slice %40 {offsets = [0, 8], sizes = [8, 8], strides = [1, 1]} : vector<8x32xbf16> to vector<8x8xbf16>
    %112 = vector.extract_strided_slice %48 {offsets = [0, 8], sizes = [8, 8], strides = [1, 1]} : vector<8x32xbf16> to vector<8x8xbf16>
    %cst_44 = arith.constant dense<0.000000e+00> : vector<8x8xf32>
    %113 = tpu.matmul %110, %111, %cst_44 {dimension_numbers = #tpu.dot_dimension_numbers<[1], [1], [0], [0], [0, 0, 1, 0], [], []>} : vector<8x8xbf16>, vector<8x8xbf16>, vector<8x8xf32> -> vector<8x8xf32>
    %cst_45 = arith.constant dense<0xFF800000> : vector<8xf32>
    %114 = vector.multi_reduction <maximumf>, %113, %cst_45 [1] : vector<8x8xf32> to vector<8xf32>
    %115 = vector.shape_cast %114 : vector<8xf32> to vector<8x1xf32>
    %116 = vector.broadcast %115 : vector<8x1xf32> to vector<8x8xf32>
    %117 = arith.subf %113, %116 : vector<8x8xf32>
    %118 = math.exp %117 : vector<8x8xf32>
    %cst_46 = arith.constant dense<0.000000e+00> : vector<8xf32>
    %119 = vector.multi_reduction <add>, %118, %cst_46 [1] : vector<8x8xf32> to vector<8xf32>
    %120 = vector.shape_cast %119 : vector<8xf32> to vector<8x1xf32>
    %121 = tpu.reciprocal %120 {approx = true} : vector<8x1xf32> -> vector<8x1xf32>
    %122 = vector.broadcast %121 : vector<8x1xf32> to vector<8x8xf32>
    %123 = arith.mulf %118, %122 : vector<8x8xf32>
    %124 = arith.truncf %123 : vector<8x8xf32> to vector<8x8xbf16>
    %cst_47 = arith.constant dense<0.000000e+00> : vector<8x8xf32>
    %125 = tpu.matmul %124, %112, %cst_47 {dimension_numbers = #tpu.dot_dimension_numbers<[1], [0], [0], [1], [0, 0, 1, 1], [], []>} : vector<8x8xbf16>, vector<8x8xbf16>, vector<8x8xf32> -> vector<8x8xf32>
    %126 = arith.truncf %125 : vector<8x8xf32> to vector<8x8xbf16>
    %c8 = arith.constant 8 : index
    %c0_48 = arith.constant 0 : index
    %127 = vector.load %arg11[%c8, %c0_48] : memref<32x32xbf16, #tpu.memory_space<vmem>>, vector<8x32xbf16>
    %cst_49 = arith.constant dense<0.000000e+00> : vector<8x32xf32>
    %128 = tpu.matmul %126, %127, %cst_49 {dimension_numbers = #tpu.dot_dimension_numbers<[1], [0], [0], [1], [0, 0, 1, 1], [], []>} : vector<8x8xbf16>, vector<8x32xbf16>, vector<8x32xf32> -> vector<8x32xf32>
    %129 = arith.addf %109, %128 : vector<8x32xf32>
    %130 = vector.extract_strided_slice %88 {offsets = [0, 16], sizes = [8, 8], strides = [1, 1]} : vector<8x32xbf16> to vector<8x8xbf16>
    %131 = vector.extract_strided_slice %40 {offsets = [0, 16], sizes = [8, 8], strides = [1, 1]} : vector<8x32xbf16> to vector<8x8xbf16>
    %132 = vector.extract_strided_slice %48 {offsets = [0, 16], sizes = [8, 8], strides = [1, 1]} : vector<8x32xbf16> to vector<8x8xbf16>
    %cst_50 = arith.constant dense<0.000000e+00> : vector<8x8xf32>
    %133 = tpu.matmul %130, %131, %cst_50 {dimension_numbers = #tpu.dot_dimension_numbers<[1], [1], [0], [0], [0, 0, 1, 0], [], []>} : vector<8x8xbf16>, vector<8x8xbf16>, vector<8x8xf32> -> vector<8x8xf32>
    %cst_51 = arith.constant dense<0xFF800000> : vector<8xf32>
    %134 = vector.multi_reduction <maximumf>, %133, %cst_51 [1] : vector<8x8xf32> to vector<8xf32>
    %135 = vector.shape_cast %134 : vector<8xf32> to vector<8x1xf32>
    %136 = vector.broadcast %135 : vector<8x1xf32> to vector<8x8xf32>
    %137 = arith.subf %133, %136 : vector<8x8xf32>
    %138 = math.exp %137 : vector<8x8xf32>
    %cst_52 = arith.constant dense<0.000000e+00> : vector<8xf32>
    %139 = vector.multi_reduction <add>, %138, %cst_52 [1] : vector<8x8xf32> to vector<8xf32>
    %140 = vector.shape_cast %139 : vector<8xf32> to vector<8x1xf32>
    %141 = tpu.reciprocal %140 {approx = true} : vector<8x1xf32> -> vector<8x1xf32>
    %142 = vector.broadcast %141 : vector<8x1xf32> to vector<8x8xf32>
    %143 = arith.mulf %138, %142 : vector<8x8xf32>
    %144 = arith.truncf %143 : vector<8x8xf32> to vector<8x8xbf16>
    %cst_53 = arith.constant dense<0.000000e+00> : vector<8x8xf32>
    %145 = tpu.matmul %144, %132, %cst_53 {dimension_numbers = #tpu.dot_dimension_numbers<[1], [0], [0], [1], [0, 0, 1, 1], [], []>} : vector<8x8xbf16>, vector<8x8xbf16>, vector<8x8xf32> -> vector<8x8xf32>
    %146 = arith.truncf %145 : vector<8x8xf32> to vector<8x8xbf16>
    %c16 = arith.constant 16 : index
    %c0_54 = arith.constant 0 : index
    %147 = vector.load %arg11[%c16, %c0_54] : memref<32x32xbf16, #tpu.memory_space<vmem>>, vector<8x32xbf16>
    %cst_55 = arith.constant dense<0.000000e+00> : vector<8x32xf32>
    %148 = tpu.matmul %146, %147, %cst_55 {dimension_numbers = #tpu.dot_dimension_numbers<[1], [0], [0], [1], [0, 0, 1, 1], [], []>} : vector<8x8xbf16>, vector<8x32xbf16>, vector<8x32xf32> -> vector<8x32xf32>
    %149 = arith.addf %129, %148 : vector<8x32xf32>
    %150 = vector.extract_strided_slice %88 {offsets = [0, 24], sizes = [8, 8], strides = [1, 1]} : vector<8x32xbf16> to vector<8x8xbf16>
    %151 = vector.extract_strided_slice %40 {offsets = [0, 24], sizes = [8, 8], strides = [1, 1]} : vector<8x32xbf16> to vector<8x8xbf16>
    %152 = vector.extract_strided_slice %48 {offsets = [0, 24], sizes = [8, 8], strides = [1, 1]} : vector<8x32xbf16> to vector<8x8xbf16>
    %cst_56 = arith.constant dense<0.000000e+00> : vector<8x8xf32>
    %153 = tpu.matmul %150, %151, %cst_56 {dimension_numbers = #tpu.dot_dimension_numbers<[1], [1], [0], [0], [0, 0, 1, 0], [], []>} : vector<8x8xbf16>, vector<8x8xbf16>, vector<8x8xf32> -> vector<8x8xf32>
    %cst_57 = arith.constant dense<0xFF800000> : vector<8xf32>
    %154 = vector.multi_reduction <maximumf>, %153, %cst_57 [1] : vector<8x8xf32> to vector<8xf32>
    %155 = vector.shape_cast %154 : vector<8xf32> to vector<8x1xf32>
    %156 = vector.broadcast %155 : vector<8x1xf32> to vector<8x8xf32>
    %157 = arith.subf %153, %156 : vector<8x8xf32>
    %158 = math.exp %157 : vector<8x8xf32>
    %cst_58 = arith.constant dense<0.000000e+00> : vector<8xf32>
    %159 = vector.multi_reduction <add>, %158, %cst_58 [1] : vector<8x8xf32> to vector<8xf32>
    %160 = vector.shape_cast %159 : vector<8xf32> to vector<8x1xf32>
    %161 = tpu.reciprocal %160 {approx = true} : vector<8x1xf32> -> vector<8x1xf32>
    %162 = vector.broadcast %161 : vector<8x1xf32> to vector<8x8xf32>
    %163 = arith.mulf %158, %162 : vector<8x8xf32>
    %164 = arith.truncf %163 : vector<8x8xf32> to vector<8x8xbf16>
    %cst_59 = arith.constant dense<0.000000e+00> : vector<8x8xf32>
    %165 = tpu.matmul %164, %152, %cst_59 {dimension_numbers = #tpu.dot_dimension_numbers<[1], [0], [0], [1], [0, 0, 1, 1], [], []>} : vector<8x8xbf16>, vector<8x8xbf16>, vector<8x8xf32> -> vector<8x8xf32>
    %166 = arith.truncf %165 : vector<8x8xf32> to vector<8x8xbf16>
    %c24 = arith.constant 24 : index
    %c0_60 = arith.constant 0 : index
    %167 = vector.load %arg11[%c24, %c0_60] : memref<32x32xbf16, #tpu.memory_space<vmem>>, vector<8x32xbf16>
    %cst_61 = arith.constant dense<0.000000e+00> : vector<8x32xf32>
    %168 = tpu.matmul %166, %167, %cst_61 {dimension_numbers = #tpu.dot_dimension_numbers<[1], [0], [0], [1], [0, 0, 1, 1], [], []>} : vector<8x8xbf16>, vector<8x32xbf16>, vector<8x32xf32> -> vector<8x32xf32>
    %169 = arith.addf %149, %168 : vector<8x32xf32>
    %170 = arith.addf %51, %169 : vector<8x32xf32>
    %c0_62 = arith.constant 0 : index
    %c0_63 = arith.constant 0 : index
    %171 = vector.load %arg12[%c0_62, %c0_63] : memref<1x32xf32, #tpu.memory_space<vmem>>, vector<1x32xf32>
    %172 = vector.shape_cast %171 : vector<1x32xf32> to vector<32xf32>
    %173 = vector.shape_cast %172 : vector<32xf32> to vector<1x32xf32>
    %174 = vector.broadcast %173 : vector<1x32xf32> to vector<8x32xf32>
    %175 = arith.addf %170, %174 : vector<8x32xf32>
    %c0_64 = arith.constant 0 : index
    %c0_65 = arith.constant 0 : index
    %176 = vector.load %arg13[%c0_64, %c0_65] : memref<1x32xf32, #tpu.memory_space<vmem>>, vector<1x32xf32>
    %177 = vector.shape_cast %176 : vector<1x32xf32> to vector<32xf32>
    %c0_66 = arith.constant 0 : index
    %c0_67 = arith.constant 0 : index
    %178 = vector.load %arg14[%c0_66, %c0_67] : memref<1x32xf32, #tpu.memory_space<vmem>>, vector<1x32xf32>
    %179 = vector.shape_cast %178 : vector<1x32xf32> to vector<32xf32>
    %cst_68 = arith.constant dense<0.000000e+00> : vector<8xf32>
    %180 = vector.multi_reduction <add>, %175, %cst_68 [1] : vector<8x32xf32> to vector<8xf32>
    %181 = vector.shape_cast %180 : vector<8xf32> to vector<8x1xf32>
    %cst_69 = arith.constant 3.200000e+01 : f32
    %182 = vector.broadcast %cst_69 : f32 to vector<8x1xf32>
    %183 = arith.divf %181, %182 : vector<8x1xf32>
    %184 = vector.broadcast %183 : vector<8x1xf32> to vector<8x32xf32>
    %185 = arith.subf %175, %184 : vector<8x32xf32>
    %186 = arith.mulf %185, %185 : vector<8x32xf32>
    %cst_70 = arith.constant dense<0.000000e+00> : vector<8xf32>
    %187 = vector.multi_reduction <add>, %186, %cst_70 [1] : vector<8x32xf32> to vector<8xf32>
    %188 = vector.shape_cast %187 : vector<8xf32> to vector<8x1xf32>
    %cst_71 = arith.constant 3.200000e+01 : f32
    %189 = vector.broadcast %cst_71 : f32 to vector<8x1xf32>
    %190 = arith.divf %188, %189 : vector<8x1xf32>
    %191 = vector.broadcast %183 : vector<8x1xf32> to vector<8x32xf32>
    %192 = arith.subf %175, %191 : vector<8x32xf32>
    %cst_72 = arith.constant 9.99999974E-6 : f32
    %193 = vector.broadcast %cst_72 : f32 to vector<8x1xf32>
    %194 = arith.addf %190, %193 : vector<8x1xf32>
    %195 = math.rsqrt %194 : vector<8x1xf32>
    %196 = vector.broadcast %195 : vector<8x1xf32> to vector<8x32xf32>
    %197 = arith.mulf %192, %196 : vector<8x32xf32>
    %198 = vector.shape_cast %177 : vector<32xf32> to vector<1x32xf32>
    %199 = vector.broadcast %198 : vector<1x32xf32> to vector<8x32xf32>
    %200 = arith.mulf %197, %199 : vector<8x32xf32>
    %201 = vector.shape_cast %179 : vector<32xf32> to vector<1x32xf32>
    %202 = vector.broadcast %201 : vector<1x32xf32> to vector<8x32xf32>
    %203 = arith.addf %200, %202 : vector<8x32xf32>
    %204 = arith.truncf %203 : vector<8x32xf32> to vector<8x32xbf16>
    %c0_73 = arith.constant 0 : index
    %c0_74 = arith.constant 0 : index
    %205 = vector.load %arg15[%c0_73, %c0_74] : memref<32x128xbf16, #tpu.memory_space<vmem>>, vector<32x128xbf16>
    %cst_75 = arith.constant dense<0.000000e+00> : vector<8x128xf32>
    %206 = tpu.matmul %204, %205, %cst_75 {dimension_numbers = #tpu.dot_dimension_numbers<[1], [0], [0], [1], [0, 0, 1, 1], [], []>} : vector<8x32xbf16>, vector<32x128xbf16>, vector<8x128xf32> -> vector<8x128xf32>
    %c0_76 = arith.constant 0 : index
    %c0_77 = arith.constant 0 : index
    %207 = vector.load %arg16[%c0_76, %c0_77] : memref<1x128xf32, #tpu.memory_space<vmem>>, vector<1x128xf32>
    %208 = vector.shape_cast %207 : vector<1x128xf32> to vector<128xf32>
    %209 = vector.shape_cast %208 : vector<128xf32> to vector<1x128xf32>
    %210 = vector.broadcast %209 : vector<1x128xf32> to vector<8x128xf32>
    %211 = arith.addf %206, %210 : vector<8x128xf32>
    %cst_78 = arith.constant 5.000000e-01 : f32
    %212 = vector.broadcast %cst_78 : f32 to vector<8x128xf32>
    %213 = arith.mulf %212, %211 : vector<8x128xf32>
    %cst_79 = arith.constant 0.707106769 : f32
    %214 = vector.broadcast %cst_79 : f32 to vector<8x128xf32>
    %215 = arith.mulf %211, %214 : vector<8x128xf32>
    %216 = math.erf %215 : vector<8x128xf32>
    %cst_80 = arith.constant 1.000000e+00 : f32
    %217 = vector.broadcast %cst_80 : f32 to vector<8x128xf32>
    %218 = arith.addf %217, %216 : vector<8x128xf32>
    %219 = arith.mulf %213, %218 : vector<8x128xf32>
    %220 = arith.truncf %219 : vector<8x128xf32> to vector<8x128xbf16>
    %c0_81 = arith.constant 0 : index
    %c0_82 = arith.constant 0 : index
    %221 = vector.load %arg17[%c0_81, %c0_82] : memref<128x32xbf16, #tpu.memory_space<vmem>>, vector<128x32xbf16>
    %cst_83 = arith.constant dense<0.000000e+00> : vector<8x32xf32>
    %222 = tpu.matmul %220, %221, %cst_83 {dimension_numbers = #tpu.dot_dimension_numbers<[1], [0], [0], [1], [0, 0, 1, 1], [], []>} : vector<8x128xbf16>, vector<128x32xbf16>, vector<8x32xf32> -> vector<8x32xf32>
    %c0_84 = arith.constant 0 : index
    %c0_85 = arith.constant 0 : index
    %223 = vector.load %arg18[%c0_84, %c0_85] : memref<1x32xf32, #tpu.memory_space<vmem>>, vector<1x32xf32>
    %224 = vector.shape_cast %223 : vector<1x32xf32> to vector<32xf32>
    %225 = vector.shape_cast %224 : vector<32xf32> to vector<1x32xf32>
    %226 = vector.broadcast %225 : vector<1x32xf32> to vector<8x32xf32>
    %227 = arith.addf %222, %226 : vector<8x32xf32>
    %228 = arith.addf %175, %227 : vector<8x32xf32>
    %c0_86 = arith.constant 0 : index
    %c0_87 = arith.constant 0 : index
    %c0_88 = arith.constant 0 : index
    %229 = vector.load %arg19[%c0_86, %c0_87, %c0_88] : memref<1x8x32xf32, #tpu.memory_space<vmem>>, vector<1x8x32xf32>
    %230 = vector.shape_cast %229 : vector<1x8x32xf32> to vector<8x32xf32>
    %231 = vector.shape_cast %228 : vector<8x32xf32> to vector<1x8x32xf32>
    tpu.vector_store %arg19[%c0_86, %c0_87, %c0_88], %231 {strides = array<i32>} : memref<1x8x32xf32, #tpu.memory_space<vmem>>, vector<1x8x32xf32>,
    return
  }
  func.func @transform_0(%arg0: i32, %arg1: i32) -> (i32, i32, i32) {
    %c0_i32 = arith.constant 0 : i32
    %c0_i32_0 = arith.constant 0 : i32
    %c0_i32_1 = arith.constant 0 : i32
    return %arg0, %c0_i32, %c0_i32_0 : i32, i32, i32
  }
  func.func @transform_1(%arg0: i32, %arg1: i32) -> (i32, i32) {
    %c0_i32 = arith.constant 0 : i32
    %c0_i32_0 = arith.constant 0 : i32
    %c0_i32_1 = arith.constant 0 : i32
    return %c0_i32, %c0_i32_0 : i32, i32
  }
  func.func @transform_2(%arg0: i32, %arg1: i32) -> (i32, i32) {
    %c0_i32 = arith.constant 0 : i32
    %c0_i32_0 = arith.constant 0 : i32
    %c0_i32_1 = arith.constant 0 : i32
    return %c0_i32, %c0_i32_0 : i32, i32
  }
  func.func @transform_3(%arg0: i32, %arg1: i32) -> (i32, i32) {
    %c0_i32 = arith.constant 0 : i32
    %c0_i32_0 = arith.constant 0 : i32
    %c0_i32_1 = arith.constant 0 : i32
    return %c0_i32, %c0_i32_0 : i32, i32
  }
  func.func @transform_4(%arg0: i32, %arg1: i32) -> (i32, i32) {
    %c0_i32 = arith.constant 0 : i32
    %c0_i32_0 = arith.constant 0 : i32
    %c0_i32_1 = arith.constant 0 : i32
    return %c0_i32, %c0_i32_0 : i32, i32
  }
  func.func @transform_5(%arg0: i32, %arg1: i32) -> (i32, i32) {
    %c0_i32 = arith.constant 0 : i32
    %c0_i32_0 = arith.constant 0 : i32
    %c0_i32_1 = arith.constant 0 : i32
    return %c0_i32, %c0_i32_0 : i32, i32
  }
  func.func @transform_6(%arg0: i32, %arg1: i32) -> (i32, i32) {
    %c0_i32 = arith.constant 0 : i32
    %c0_i32_0 = arith.constant 0 : i32
    %c0_i32_1 = arith.constant 0 : i32
    return %c0_i32, %c0_i32_0 : i32, i32
  }
  func.func @transform_7(%arg0: i32, %arg1: i32) -> (i32, i32) {
    %c0_i32 = arith.constant 0 : i32
    %c0_i32_0 = arith.constant 0 : i32
    %c0_i32_1 = arith.constant 0 : i32
    return %c0_i32, %c0_i32_0 : i32, i32
  }
  func.func @transform_8(%arg0: i32, %arg1: i32) -> (i32, i32) {
    %c0_i32 = arith.constant 0 : i32
    %c0_i32_0 = arith.constant 0 : i32
    %c0_i32_1 = arith.constant 0 : i32
    return %c0_i32, %c0_i32_0 : i32, i32
  }
  func.func @transform_9(%arg0: i32, %arg1: i32) -> (i32, i32) {
    %c0_i32 = arith.constant 0 : i32
    %c0_i32_0 = arith.constant 0 : i32
    %c0_i32_1 = arith.constant 0 : i32
    return %c0_i32, %c0_i32_0 : i32, i32
  }
  func.func @transform_10(%arg0: i32, %arg1: i32) -> (i32, i32) {
    %c0_i32 = arith.constant 0 : i32
    %c0_i32_0 = arith.constant 0 : i32
    %c0_i32_1 = arith.constant 0 : i32
    return %c0_i32, %c0_i32_0 : i32, i32
  }
  func.func @transform_11(%arg0: i32, %arg1: i32) -> (i32, i32) {
    %c0_i32 = arith.constant 0 : i32
    %c0_i32_0 = arith.constant 0 : i32
    %c0_i32_1 = arith.constant 0 : i32
    return %c0_i32, %c0_i32_0 : i32, i32
  }
  func.func @transform_12(%arg0: i32, %arg1: i32) -> (i32, i32) {
    %c0_i32 = arith.constant 0 : i32
    %c0_i32_0 = arith.constant 0 : i32
    %c0_i32_1 = arith.constant 0 : i32
    return %c0_i32, %c0_i32_0 : i32, i32
  }
  func.func @transform_13(%arg0: i32, %arg1: i32) -> (i32, i32) {
    %c0_i32 = arith.constant 0 : i32
    %c0_i32_0 = arith.constant 0 : i32
    %c0_i32_1 = arith.constant 0 : i32
    return %c0_i32, %c0_i32_0 : i32, i32
  }
  func.func @transform_14(%arg0: i32, %arg1: i32) -> (i32, i32) {
    %c0_i32 = arith.constant 0 : i32
    %c0_i32_0 = arith.constant 0 : i32
    %c0_i32_1 = arith.constant 0 : i32
    return %c0_i32, %c0_i32_0 : i32, i32
  }
  func.func @transform_15(%arg0: i32, %arg1: i32) -> (i32, i32) {
    %c0_i32 = arith.constant 0 : i32
    %c0_i32_0 = arith.constant 0 : i32
    %c0_i32_1 = arith.constant 0 : i32
    return %c0_i32, %c0_i32_0 : i32, i32
  }
  func.func @transform_16(%arg0: i32, %arg1: i32) -> (i32, i32) {
    %c0_i32 = arith.constant 0 : i32
    %c0_i32_0 = arith.constant 0 : i32
    %c0_i32_1 = arith.constant 0 : i32
    return %c0_i32, %c0_i32_0 : i32, i32
  }
  func.func @transform_17(%arg0: i32, %arg1: i32) -> (i32, i32, i32) {
    %c0_i32 = arith.constant 0 : i32
    %c0_i32_0 = arith.constant 0 : i32
    return %arg0, %arg1, %c0_i32 : i32, i32, i32
  }
}

</mosaic_0001>

<llo_original>
// kernel: tpu_custom_call.1
$region0: #{tpu_custom_call.1}
  #allocation0 [shape = 'u32[]', space=smem, size = 0x4, offset = 0x4, fixed_abs, tag = 'smem constant byte address 0x4 - core index']
  #allocation1 [shape = 'u32[144,128]{1,0:T(1,128)}', space=vmem, size = 0x12000, scoped, tag = 'internal scratch']
  %s0 = inlined_call_operand.vmem [shape: f32[2,8,32], index: 0, kind: input, shape index: {}]
  %s1 = inlined_call_operand.vmem [shape: f32[1,32], index: 1, kind: input, shape index: {}]
  %s2 = inlined_call_operand.vmem [shape: f32[1,32], index: 2, kind: input, shape index: {}]
  %s3 = inlined_call_operand.vmem [shape: bf16[32,32], index: 3, kind: input, shape index: {}]
  %s4 = inlined_call_operand.hbm [shape: f32[1,32], index: 4, kind: input, shape index: {}]
  %s5 = inlined_call_operand.vmem [shape: bf16[32,32], index: 5, kind: input, shape index: {}]
  %s6 = inlined_call_operand.hbm [shape: f32[1,32], index: 6, kind: input, shape index: {}]
  %s7 = inlined_call_operand.vmem [shape: bf16[32,32], index: 7, kind: input, shape index: {}]
  %s8 = inlined_call_operand.hbm [shape: f32[1,32], index: 8, kind: input, shape index: {}]
  %s9 = inlined_call_operand.vmem [shape: bf16[32,32], index: 9, kind: input, shape index: {}]
  %s10 = inlined_call_operand.vmem [shape: f32[1,32], index: 10, kind: input, shape index: {}]
  %s11 = inlined_call_operand.vmem [shape: f32[1,32], index: 11, kind: input, shape index: {}]
  %s12 = inlined_call_operand.vmem [shape: f32[1,32], index: 12, kind: input, shape index: {}]
  %s13 = inlined_call_operand.vmem [shape: bf16[32,128], index: 13, kind: input, shape index: {}]
  %s14 = inlined_call_operand.vmem [shape: f32[1,128], index: 14, kind: input, shape index: {}]
  %s15 = inlined_call_operand.vmem [shape: bf16[128,32], index: 15, kind: input, shape index: {}]
  %s16 = inlined_call_operand.vmem [shape: f32[1,32], index: 16, kind: input, shape index: {}]
  %s17 = inlined_call_operand.hbm [shape: f32[2,8,32], index: 17, kind: output, shape index: {}]
  %s18 = sld [smem:[#allocation0]]
  $region113: #{tpu_custom_call.1} parent=0
    _
  %s20 = ssub.s32 1, %s18
  %s21 = scalar_select 0, %s20, %s18
  $region1: #{tpu_custom_call.1} parent=0
    #allocation2 [shape = 'u8[512]{0}', space=vmem, size = 0x400, scoped, tag = 'input window, operand 4, single buffered']
    #allocation3 [shape = 's32[2]{0}', space=sflag, size = 0x8, scoped, tag = 'scoped memory for tpu_custom_call.1']
    #allocation4 [shape = 's32[2]{0}', space=sflag, size = 0x8, scoped, tag = 'scoped memory for tpu_custom_call.1']
    #allocation5 [shape = 'u8[512]{0}', space=vmem, size = 0x400, scoped, tag = 'input window, operand 6, single buffered']
    #allocation6 [shape = 's32[1]{0}', space=sflag, size = 0x4, scoped, tag = 'scoped memory for tpu_custom_call.1']
    #allocation7 [shape = 'u8[512]{0}', space=vmem, size = 0x400, scoped, tag = 'input window, operand 8, single buffered']
    #allocation8 [shape = 'u8[8192]{0}', space=vmem, size = 0x2000, scoped, tag = 'output window, operand 0']
    %22 = vsyncpa [#allocation3], 0
    %23 = vsyncpa [#allocation6], 0
    %24 = vsyncpa [#allocation4], 0
    %s25 = scalar_lea.sflag [#allocation4], 1
    %26 = vsyncpa %s25, 0
    loop: start=0, step=1, limit=4
    $region2: #{tpu_custom_call.1} parent=1 // loop_pre_header
      _
    $region3: #{tpu_custom_call.1} parent=1 // loop_header
      %s28 = sphi 0, %s32
      %p29 = scmp.ge.s32.totalorder %s28, 4
      %s35 = sphi 0, %s47
      %s36 = sphi 0, %s43
      %s37 = sphi 0, %s35
      %s38 = sphi 0, %s36
      %s39 = sphi 0, %s37
      %s40 = sphi 0, %s38
      %s50 = sphi 0, %s52
      %s53 = sphi 0, %s50
      %s54 = sphi 0, %s53
      %s70 = sphi 0, %s54
      %s74 = sphi 0, %s74
      %s76 = sphi 0, %s74
      %s77 = sphi 0, %s76
      %s91 = sphi 0, %s77
      %s95 = sphi 0, %s95
      %s97 = sphi 0, %s95
      %s98 = sphi 0, %s97
      %s112 = sphi 0, %s98
      %s116 = sphi 0, %s116
      %s118 = sphi 0, %s116
      %s119 = sphi 0, %s118
      %s133 = sphi 0, %s119
      %s137 = sphi 0, %s137
      %s139 = sphi 0, %s137
      %s140 = sphi 0, %s139
      %s154 = sphi 0, %s140
      %s158 = sphi 0, %s158
      %s160 = sphi 0, %s158
      %s161 = sphi 0, %s160
      %s175 = sphi 0, %s161
      %s179 = sphi 0, %s179
      %s181 = sphi 0, %s179
      %s182 = sphi 0, %s181
      %s196 = sphi 0, %s182
      %s200 = sphi 0, %s200
      %s202 = sphi 0, %s200
      %s203 = sphi 0, %s202
      %s217 = sphi 0, %s203
      %s221 = sphi 0, %s221
      %s223 = sphi 0, %s221
      %s224 = sphi 0, %s223
      %s238 = sphi 0, %s224
      %s242 = sphi 0, %s242
      %s244 = sphi 0, %s242
      %s245 = sphi 0, %s244
      %s259 = sphi 0, %s245
      %s263 = sphi 0, %s263
      %s265 = sphi 0, %s263
      %s266 = sphi 0, %s265
      %s280 = sphi 0, %s266
      %s284 = sphi 0, %s284
      %s286 = sphi 0, %s284
      %s287 = sphi 0, %s286
      %s301 = sphi 0, %s287
      %s305 = sphi 0, %s305
      %s307 = sphi 0, %s305
      %s308 = sphi 0, %s307
      %s322 = sphi 0, %s308
      %s326 = sphi 0, %s326
      %s328 = sphi 0, %s326
      %s329 = sphi 0, %s328
      %s343 = sphi 0, %s329
      %s347 = sphi 0, %s347
      %s349 = sphi 0, %s347
      %s350 = sphi 0, %s349
      %s364 = sphi 0, %s350
      %s368 = sphi 0, %s368
      %s370 = sphi 0, %s368
      %s371 = sphi 0, %s370
      %s385 = sphi 0, %s371
      %s389 = sphi 0, %s389
      %s391 = sphi 0, %s389
      %s392 = sphi 0, %s391
      %s406 = sphi 0, %s392
      %s414 = sphi 0, %s416
      %s417 = sphi 0, %s414
      %s418 = sphi 0, %s417
      %s434 = sphi 0, %s418
    $region4: #{tpu_custom_call.1} parent=1 // loop_header_branch
      %31 = sbr.rel (%p29) target = $region8
    $region5: #{tpu_custom_call.1} parent=1 // loop_body
      %s33 = ssub.s32 %s28, 1
      %s34 = ssub.s32 %s28, 2
      %s41 = sadd.s32 1, %s36
      %p42 = scmp.ge.s32.totalorder %s41, 1
      %s43 = scalar_select %p42, 0, %s41
      %s44 = sadd.s32 1, %s35
      %s45 = scalar_select %p42, %s44, %s35
      %p46 = scmp.ge.s32.totalorder %s45, 2
      %s47 = scalar_select %p46, 0, %s45
      %s48 = ssub.s32 %s35, %s47
      %p49 = scmp.eq.s32.totalorder %s48, 0
      %s51 = sadd.s32 %s50, 1
      %s52 = scalar_select %p49, %s50, %s51
      %p55 = pneg %p49
      %p56 = scmp.eq.s32.totalorder %s28, 1
      %p57 = por %p55, %p56
      %p58 = scmp.ne.s32.totalorder %s50, %s53
      %p59 = scmp.eq.s32.totalorder %s28, 0
      %p60 = por %p58, %p59
      %p61 = scmp.ne.s32.totalorder %s50, %s53
      %p62 = scmp.eq.s32.totalorder %s33, 1
      %p63 = por %p61, %p62
      %p64 = scmp.ne.s32.totalorder %s53, %s54
      %p65 = scmp.eq.s32.totalorder %s33, 0
      %p66 = por %p64, %p65
      %p67 = scmp.ne.s32.totalorder %s53, %s54
      %p68 = scmp.eq.s32.totalorder %s34, 1
      %p69 = por %p67, %p68
      %p71 = scmp.ne.s32.totalorder %s54, %s70
      %p72 = scmp.eq.s32.totalorder %s34, 0
      %p73 = por %p71, %p72
      %s75 = sadd.s32 %s74, 1
      %p78 = scmp.eq.s32.totalorder %s28, 1
      %p79 = scmp.ne.s32.totalorder %s74, %s76
      %p80 = scmp.eq.s32.totalorder %s28, 0
      %p81 = por %p79, %p80
      %p82 = scmp.ne.s32.totalorder %s74, %s76
      %p83 = scmp.eq.s32.totalorder %s33, 1
      %p84 = por %p82, %p83
      %p85 = scmp.ne.s32.totalorder %s76, %s77
      %p86 = scmp.eq.s32.totalorder %s33, 0
      %p87 = por %p85, %p86
      %p88 = scmp.ne.s32.totalorder %s76, %s77
      %p89 = scmp.eq.s32.totalorder %s34, 1
      %p90 = por %p88, %p89
      %p92 = scmp.ne.s32.totalorder %s77, %s91
      %p93 = scmp.eq.s32.totalorder %s34, 0
      %p94 = por %p92, %p93
      %s96 = sadd.s32 %s95, 1
      %p99 = scmp.eq.s32.totalorder %s28, 1
      %p100 = scmp.ne.s32.totalorder %s95, %s97
      %p101 = scmp.eq.s32.totalorder %s28, 0
      %p102 = por %p100, %p101
      %p103 = scmp.ne.s32.totalorder %s95, %s97
      %p104 = scmp.eq.s32.totalorder %s33, 1
      %p105 = por %p103, %p104
      %p106 = scmp.ne.s32.totalorder %s97, %s98
      %p107 = scmp.eq.s32.totalorder %s33, 0
      %p108 = por %p106, %p107
      %p109 = scmp.ne.s32.totalorder %s97, %s98
      %p110 = scmp.eq.s32.totalorder %s34, 1
      %p111 = por %p109, %p110
      %p113 = scmp.ne.s32.totalorder %s98, %s112
      %p114 = scmp.eq.s32.totalorder %s34, 0
      %p115 = por %p113, %p114
      %s117 = sadd.s32 %s116, 1
      %p120 = scmp.eq.s32.totalorder %s28, 1
      %p121 = scmp.ne.s32.totalorder %s116, %s118
      %p122 = scmp.eq.s32.totalorder %s28, 0
      %p123 = por %p121, %p122
      %p124 = scmp.ne.s32.totalorder %s116, %s118
      %p125 = scmp.eq.s32.totalorder %s33, 1
      %p126 = por %p124, %p125
      %p127 = scmp.ne.s32.totalorder %s118, %s119
      %p128 = scmp.eq.s32.totalorder %s33, 0
      %p129 = por %p127, %p128
      %p130 = scmp.ne.s32.totalorder %s118, %s119
      %p131 = scmp.eq.s32.totalorder %s34, 1
      %p132 = por %p130, %p131
      %p134 = scmp.ne.s32.totalorder %s119, %s133
      %p135 = scmp.eq.s32.totalorder %s34, 0
      %p136 = por %p134, %p135
      %s138 = sadd.s32 %s137, 1
      %p141 = scmp.eq.s32.totalorder %s28, 1
      %p142 = scmp.ne.s32.totalorder %s137, %s139
      %p143 = scmp.eq.s32.totalorder %s28, 0
      %p144 = por %p142, %p143
      %p145 = scmp.ne.s32.totalorder %s137, %s139
      %p146 = scmp.eq.s32.totalorder %s33, 1
      %p147 = por %p145, %p146
      %p148 = scmp.ne.s32.totalorder %s139, %s140
      %p149 = scmp.eq.s32.totalorder %s33, 0
      %p150 = por %p148, %p149
      %p151 = scmp.ne.s32.totalorder %s139, %s140
      %p152 = scmp.eq.s32.totalorder %s34, 1
      %p153 = por %p151, %p152
      %p155 = scmp.ne.s32.totalorder %s140, %s154
      %p156 = scmp.eq.s32.totalorder %s34, 0
      %p157 = por %p155, %p156
      %s159 = sadd.s32 %s158, 1
      %p162 = scmp.eq.s32.totalorder %s28, 1
      %p163 = scmp.ne.s32.totalorder %s158, %s160
      %p164 = scmp.eq.s32.totalorder %s28, 0
      %p165 = por %p163, %p164
      %p166 = scmp.ne.s32.totalorder %s158, %s160
      %p167 = scmp.eq.s32.totalorder %s33, 1
      %p168 = por %p166, %p167
      %p169 = scmp.ne.s32.totalorder %s160, %s161
      %p170 = scmp.eq.s32.totalorder %s33, 0
      %p171 = por %p169, %p170
      %p172 = scmp.ne.s32.totalorder %s160, %s161
      %p173 = scmp.eq.s32.totalorder %s34, 1
      %p174 = por %p172, %p173
      %p176 = scmp.ne.s32.totalorder %s161, %s175
      %p177 = scmp.eq.s32.totalorder %s34, 0
      %p178 = por %p176, %p177
      %s180 = sadd.s32 %s179, 1
      %p183 = scmp.eq.s32.totalorder %s28, 1
      %p184 = scmp.ne.s32.totalorder %s179, %s181
      %p185 = scmp.eq.s32.totalorder %s28, 0
      %p186 = por %p184, %p185
      %p187 = scmp.ne.s32.totalorder %s179, %s181
      %p188 = scmp.eq.s32.totalorder %s33, 1
      %p189 = por %p187, %p188
      %p190 = scmp.ne.s32.totalorder %s181, %s182
      %p191 = scmp.eq.s32.totalorder %s33, 0
      %p192 = por %p190, %p191
      %p193 = scmp.ne.s32.totalorder %s181, %s182
      %p194 = scmp.eq.s32.totalorder %s34, 1
      %p195 = por %p193, %p194
      %p197 = scmp.ne.s32.totalorder %s182, %s196
      %p198 = scmp.eq.s32.totalorder %s34, 0
      %p199 = por %p197, %p198
      %s201 = sadd.s32 %s200, 1
      %p204 = scmp.eq.s32.totalorder %s28, 1
      %p205 = scmp.ne.s32.totalorder %s200, %s202
      %p206 = scmp.eq.s32.totalorder %s28, 0
      %p207 = por %p205, %p206
      %p208 = scmp.ne.s32.totalorder %s200, %s202
      %p209 = scmp.eq.s32.totalorder %s33, 1
      %p210 = por %p208, %p209
      %p211 = scmp.ne.s32.totalorder %s202, %s203
      %p212 = scmp.eq.s32.totalorder %s33, 0
      %p213 = por %p211, %p212
      %p214 = scmp.ne.s32.totalorder %s202, %s203
      %p215 = scmp.eq.s32.totalorder %s34, 1
      %p216 = por %p214, %p215
      %p218 = scmp.ne.s32.totalorder %s203, %s217
      %p219 = scmp.eq.s32.totalorder %s34, 0
      %p220 = por %p218, %p219
      %s222 = sadd.s32 %s221, 1
      %p225 = scmp.eq.s32.totalorder %s28, 1
      %p226 = scmp.ne.s32.totalorder %s221, %s223
      %p227 = scmp.eq.s32.totalorder %s28, 0
      %p228 = por %p226, %p227
      %p229 = scmp.ne.s32.totalorder %s221, %s223
      %p230 = scmp.eq.s32.totalorder %s33, 1
      %p231 = por %p229, %p230
      %p232 = scmp.ne.s32.totalorder %s223, %s224
      %p233 = scmp.eq.s32.totalorder %s33, 0
      %p234 = por %p232, %p233
      %p235 = scmp.ne.s32.totalorder %s223, %s224
      %p236 = scmp.eq.s32.totalorder %s34, 1
      %p237 = por %p235, %p236
      %p239 = scmp.ne.s32.totalorder %s224, %s238
      %p240 = scmp.eq.s32.totalorder %s34, 0
      %p241 = por %p239, %p240
      %s243 = sadd.s32 %s242, 1
      %p246 = scmp.eq.s32.totalorder %s28, 1
      %p247 = scmp.ne.s32.totalorder %s242, %s244
      %p248 = scmp.eq.s32.totalorder %s28, 0
      %p249 = por %p247, %p248
      %p250 = scmp.ne.s32.totalorder %s242, %s244
      %p251 = scmp.eq.s32.totalorder %s33, 1
      %p252 = por %p250, %p251
      %p253 = scmp.ne.s32.totalorder %s244, %s245
      %p254 = scmp.eq.s32.totalorder %s33, 0
      %p255 = por %p253, %p254
      %p256 = scmp.ne.s32.totalorder %s244, %s245
      %p257 = scmp.eq.s32.totalorder %s34, 1
      %p258 = por %p256, %p257
      %p260 = scmp.ne.s32.totalorder %s245, %s259
      %p261 = scmp.eq.s32.totalorder %s34, 0
      %p262 = por %p260, %p261
      %s264 = sadd.s32 %s263, 1
      %p267 = scmp.eq.s32.totalorder %s28, 1
      %p268 = scmp.ne.s32.totalorder %s263, %s265
      %p269 = scmp.eq.s32.totalorder %s28, 0
      %p270 = por %p268, %p269
      %p271 = scmp.ne.s32.totalorder %s263, %s265
      %p272 = scmp.eq.s32.totalorder %s33, 1
      %p273 = por %p271, %p272
      %p274 = scmp.ne.s32.totalorder %s265, %s266
      %p275 = scmp.eq.s32.totalorder %s33, 0
      %p276 = por %p274, %p275
      %p277 = scmp.ne.s32.totalorder %s265, %s266
      %p278 = scmp.eq.s32.totalorder %s34, 1
      %p279 = por %p277, %p278
      %p281 = scmp.ne.s32.totalorder %s266, %s280
      %p282 = scmp.eq.s32.totalorder %s34, 0
      %p283 = por %p281, %p282
      %s285 = sadd.s32 %s284, 1
      %p288 = scmp.eq.s32.totalorder %s28, 1
      %p289 = scmp.ne.s32.totalorder %s284, %s286
      %p290 = scmp.eq.s32.totalorder %s28, 0
      %p291 = por %p289, %p290
      %p292 = scmp.ne.s32.totalorder %s284, %s286
      %p293 = scmp.eq.s32.totalorder %s33, 1
      %p294 = por %p292, %p293
      %p295 = scmp.ne.s32.totalorder %s286, %s287
      %p296 = scmp.eq.s32.totalorder %s33, 0
      %p297 = por %p295, %p296
      %p298 = scmp.ne.s32.totalorder %s286, %s287
      %p299 = scmp.eq.s32.totalorder %s34, 1
      %p300 = por %p298, %p299
      %p302 = scmp.ne.s32.totalorder %s287, %s301
      %p303 = scmp.eq.s32.totalorder %s34, 0
      %p304 = por %p302, %p303
      %s306 = sadd.s32 %s305, 1
      %p309 = scmp.eq.s32.totalorder %s28, 1
      %p310 = scmp.ne.s32.totalorder %s305, %s307
      %p311 = scmp.eq.s32.totalorder %s28, 0
      %p312 = por %p310, %p311
      %p313 = scmp.ne.s32.totalorder %s305, %s307
      %p314 = scmp.eq.s32.totalorder %s33, 1
      %p315 = por %p313, %p314
      %p316 = scmp.ne.s32.totalorder %s307, %s308
      %p317 = scmp.eq.s32.totalorder %s33, 0
      %p318 = por %p316, %p317
      %p319 = scmp.ne.s32.totalorder %s307, %s308
      %p320 = scmp.eq.s32.totalorder %s34, 1
      %p321 = por %p319, %p320
      %p323 = scmp.ne.s32.totalorder %s308, %s322
      %p324 = scmp.eq.s32.totalorder %s34, 0
      %p325 = por %p323, %p324
      %s327 = sadd.s32 %s326, 1
      %p330 = scmp.eq.s32.totalorder %s28, 1
      %p331 = scmp.ne.s32.totalorder %s326, %s328
      %p332 = scmp.eq.s32.totalorder %s28, 0
      %p333 = por %p331, %p332
      %p334 = scmp.ne.s32.totalorder %s326, %s328
      %p335 = scmp.eq.s32.totalorder %s33, 1
      %p336 = por %p334, %p335
      %p337 = scmp.ne.s32.totalorder %s328, %s329
      %p338 = scmp.eq.s32.totalorder %s33, 0
      %p339 = por %p337, %p338
      %p340 = scmp.ne.s32.totalorder %s328, %s329
      %p341 = scmp.eq.s32.totalorder %s34, 1
      %p342 = por %p340, %p341
      %p344 = scmp.ne.s32.totalorder %s329, %s343
      %p345 = scmp.eq.s32.totalorder %s34, 0
      %p346 = por %p344, %p345
      %s348 = sadd.s32 %s347, 1
      %p351 = scmp.eq.s32.totalorder %s28, 1
      %p352 = scmp.ne.s32.totalorder %s347, %s349
      %p353 = scmp.eq.s32.totalorder %s28, 0
      %p354 = por %p352, %p353
      %p355 = scmp.ne.s32.totalorder %s347, %s349
      %p356 = scmp.eq.s32.totalorder %s33, 1
      %p357 = por %p355, %p356
      %p358 = scmp.ne.s32.totalorder %s349, %s350
      %p359 = scmp.eq.s32.totalorder %s33, 0
      %p360 = por %p358, %p359
      %p361 = scmp.ne.s32.totalorder %s349, %s350
      %p362 = scmp.eq.s32.totalorder %s34, 1
      %p363 = por %p361, %p362
      %p365 = scmp.ne.s32.totalorder %s350, %s364
      %p366 = scmp.eq.s32.totalorder %s34, 0
      %p367 = por %p365, %p366
      %s369 = sadd.s32 %s368, 1
      %p372 = scmp.eq.s32.totalorder %s28, 1
      %p373 = scmp.ne.s32.totalorder %s368, %s370
      %p374 = scmp.eq.s32.totalorder %s28, 0
      %p375 = por %p373, %p374
      %p376 = scmp.ne.s32.totalorder %s368, %s370
      %p377 = scmp.eq.s32.totalorder %s33, 1
      %p378 = por %p376, %p377
      %p379 = scmp.ne.s32.totalorder %s370, %s371
      %p380 = scmp.eq.s32.totalorder %s33, 0
      %p381 = por %p379, %p380
      %p382 = scmp.ne.s32.totalorder %s370, %s371
      %p383 = scmp.eq.s32.totalorder %s34, 1
      %p384 = por %p382, %p383
      %p386 = scmp.ne.s32.totalorder %s371, %s385
      %p387 = scmp.eq.s32.totalorder %s34, 0
      %p388 = por %p386, %p387
      %s390 = sadd.s32 %s389, 1
      %p393 = scmp.eq.s32.totalorder %s28, 1
      %p394 = scmp.ne.s32.totalorder %s389, %s391
      %p395 = scmp.eq.s32.totalorder %s28, 0
      %p396 = por %p394, %p395
      %p397 = scmp.ne.s32.totalorder %s389, %s391
      %p398 = scmp.eq.s32.totalorder %s33, 1
      %p399 = por %p397, %p398
      %p400 = scmp.ne.s32.totalorder %s391, %s392
      %p401 = scmp.eq.s32.totalorder %s33, 0
      %p402 = por %p400, %p401
      %p403 = scmp.ne.s32.totalorder %s391, %s392
      %p404 = scmp.eq.s32.totalorder %s34, 1
      %p405 = por %p403, %p404
      %p407 = scmp.ne.s32.totalorder %s392, %s406
      %p408 = scmp.eq.s32.totalorder %s34, 0
      %p409 = por %p407, %p408
      %s410 = ssub.s32 %s35, %s47
      %s411 = ssub.s32 %s36, %s43
      %s412 = sor.u32 %s410, %s411
      %p413 = scmp.eq.s32.totalorder %s412, 0
      %s415 = sadd.s32 %s414, 1
      %s416 = scalar_select %p413, %s414, %s415
      %p419 = pneg %p413
      %p420 = scmp.eq.s32.totalorder %s28, 1
      %p421 = por %p419, %p420
      %p422 = scmp.ne.s32.totalorder %s414, %s417
      %p423 = scmp.eq.s32.totalorder %s28, 0
      %p424 = por %p422, %p423
      %p425 = scmp.ne.s32.totalorder %s414, %s417
      %p426 = scmp.eq.s32.totalorder %s33, 1
      %p427 = por %p425, %p426
      %p428 = scmp.ne.s32.totalorder %s417, %s418
      %p429 = scmp.eq.s32.totalorder %s33, 0
      %p430 = por %p428, %p429
      %p431 = scmp.ne.s32.totalorder %s417, %s418
      %p432 = scmp.eq.s32.totalorder %s34, 1
      %p433 = por %p431, %p432
      %p435 = scmp.ne.s32.totalorder %s418, %s434
      %p436 = scmp.eq.s32.totalorder %s34, 0
      %p437 = por %p435, %p436
      %p438 = scmp.le.s32.totalorder 1, %s28
      %p439 = scmp.lt.s32.totalorder %s28, 3
      %p440 = pnand %p438, %p439
      %p441 = pneg %p440
      // Predicated region
      $region9: #{tpu_custom_call.1} parent=5 // pred_check
        _
      $region10: #{tpu_custom_call.1} parent=5 // pred_check_branch
        %443 = sbr.rel (%p440) target = $region12
      $region11: #{tpu_custom_call.1} parent=5 // pred_region
        %s444 = ssub.s32 %s28, 1
        // Predicated region
        $region13: #{tpu_custom_call.1} parent=11 // pred_check
          %p445 = pneg %p87
        $region14: #{tpu_custom_call.1} parent=11 // pred_check_branch
          %447 = sbr.rel (%p445) target = $region16
        $region15: #{tpu_custom_call.1} parent=11 // pred_region
          _
        $region16: #{tpu_custom_call.1} parent=11 // pred_fallthru
          _
        // Predicated region
        $region17: #{tpu_custom_call.1} parent=11 // pred_check
          %p448 = pneg %p108
        $region18: #{tpu_custom_call.1} parent=11 // pred_check_branch
          %450 = sbr.rel (%p448) target = $region20
        $region19: #{tpu_custom_call.1} parent=11 // pred_region
          _
        $region20: #{tpu_custom_call.1} parent=11 // pred_fallthru
          _
        // Predicated region
        $region21: #{tpu_custom_call.1} parent=11 // pred_check
          %p451 = pneg %p129
        $region22: #{tpu_custom_call.1} parent=11 // pred_check_branch
          %453 = sbr.rel (%p451) target = $region24
        $region23: #{tpu_custom_call.1} parent=11 // pred_region
          _
        $region24: #{tpu_custom_call.1} parent=11 // pred_fallthru
          _
        // Predicated region
        $region25: #{tpu_custom_call.1} parent=11 // pred_check
          %p454 = pneg %p150
        $region26: #{tpu_custom_call.1} parent=11 // pred_check_branch
          %456 = sbr.rel (%p454) target = $region28
        $region27: #{tpu_custom_call.1} parent=11 // pred_region
          %s458 = ssub.s32 16, 16
          %459 = vsyncadd [#allocation3], %s458
          %s461 = sshll.u32 [#allocation2], 4
          %s462 = int_to_ptr.vmem [resolvable:$true] %s461
          %464 = dma.hbm_to_vmem [thread:$0]  %s4, 16, %s462, [#allocation3]
        $region28: #{tpu_custom_call.1} parent=11 // pred_fallthru
          _
        // Predicated region
        $region29: #{tpu_custom_call.1} parent=11 // pred_check
          %p465 = pneg %p171
        $region30: #{tpu_custom_call.1} parent=11 // pred_check_branch
          %467 = sbr.rel (%p465) target = $region32
        $region31: #{tpu_custom_call.1} parent=11 // pred_region
          _
        $region32: #{tpu_custom_call.1} parent=11 // pred_fallthru
          _
        // Predicated region
        $region33: #{tpu_custom_call.1} parent=11 // pred_check
          %p468 = pneg %p192
        $region34: #{tpu_custom_call.1} parent=11 // pred_check_branch
          %470 = sbr.rel (%p468) target = $region36
        $region35: #{tpu_custom_call.1} parent=11 // pred_region
          %s472 = ssub.s32 16, 16
          %473 = vsyncadd [#allocation6], %s472
          %s475 = sshll.u32 [#allocation5], 4
          %s476 = int_to_ptr.vmem [resolvable:$true] %s475
          %478 = dma.hbm_to_vmem [thread:$0]  %s6, 16, %s476, [#allocation6]
        $region36: #{tpu_custom_call.1} parent=11 // pred_fallthru
          _
        // Predicated region
        $region37: #{tpu_custom_call.1} parent=11 // pred_check
          %p479 = pneg %p213
        $region38: #{tpu_custom_call.1} parent=11 // pred_check_branch
          %481 = sbr.rel (%p479) target = $region40
        $region39: #{tpu_custom_call.1} parent=11 // pred_region
          _
        $region40: #{tpu_custom_call.1} parent=11 // pred_fallthru
          _
        // Predicated region
        $region41: #{tpu_custom_call.1} parent=11 // pred_check
          %p482 = pneg %p234
        $region42: #{tpu_custom_call.1} parent=11 // pred_check_branch
          %484 = sbr.rel (%p482) target = $region44
        $region43: #{tpu_custom_call.1} parent=11 // pred_region
          %s486 = ssub.s32 16, 16
          %487 = vsyncadd [#allocation6], %s486
          %s489 = sshll.u32 [#allocation7], 4
          %s490 = int_to_ptr.vmem [resolvable:$true] %s489
          %492 = dma.hbm_to_vmem [thread:$0]  %s8, 16, %s490, [#allocation6]
        $region44: #{tpu_custom_call.1} parent=11 // pred_fallthru
          _
        // Predicated region
        $region45: #{tpu_custom_call.1} parent=11 // pred_check
          %p493 = pneg %p255
        $region46: #{tpu_custom_call.1} parent=11 // pred_check_branch
          %495 = sbr.rel (%p493) target = $region48
        $region47: #{tpu_custom_call.1} parent=11 // pred_region
          _
        $region48: #{tpu_custom_call.1} parent=11 // pred_fallthru
          _
        // Predicated region
        $region49: #{tpu_custom_call.1} parent=11 // pred_check
          %p496 = pneg %p276
        $region50: #{tpu_custom_call.1} parent=11 // pred_check_branch
          %498 = sbr.rel (%p496) target = $region52
        $region51: #{tpu_custom_call.1} parent=11 // pred_region
          _
        $region52: #{tpu_custom_call.1} parent=11 // pred_fallthru
          _
        // Predicated region
        $region53: #{tpu_custom_call.1} parent=11 // pred_check
          %p499 = pneg %p297
        $region54: #{tpu_custom_call.1} parent=11 // pred_check_branch
          %501 = sbr.rel (%p499) target = $region56
        $region55: #{tpu_custom_call.1} parent=11 // pred_region
          _
        $region56: #{tpu_custom_call.1} parent=11 // pred_fallthru
          _
        // Predicated region
        $region57: #{tpu_custom_call.1} parent=11 // pred_check
          %p502 = pneg %p318
        $region58: #{tpu_custom_call.1} parent=11 // pred_check_branch
          %504 = sbr.rel (%p502) target = $region60
        $region59: #{tpu_custom_call.1} parent=11 // pred_region
          _
        $region60: #{tpu_custom_call.1} parent=11 // pred_fallthru
          _
        // Predicated region
        $region61: #{tpu_custom_call.1} parent=11 // pred_check
          %p505 = pneg %p339
        $region62: #{tpu_custom_call.1} parent=11 // pred_check_branch
          %507 = sbr.rel (%p505) target = $region64
        $region63: #{tpu_custom_call.1} parent=11 // pred_region
          _
        $region64: #{tpu_custom_call.1} parent=11 // pred_fallthru
          _
        // Predicated region
        $region65: #{tpu_custom_call.1} parent=11 // pred_check
          %p508 = pneg %p360
        $region66: #{tpu_custom_call.1} parent=11 // pred_check_branch
          %510 = sbr.rel (%p508) target = $region68
        $region67: #{tpu_custom_call.1} parent=11 // pred_region
          _
        $region68: #{tpu_custom_call.1} parent=11 // pred_fallthru
          _
        // Predicated region
        $region69: #{tpu_custom_call.1} parent=11 // pred_check
          %p511 = pneg %p381
        $region70: #{tpu_custom_call.1} parent=11 // pred_check_branch
          %513 = sbr.rel (%p511) target = $region72
        $region71: #{tpu_custom_call.1} parent=11 // pred_region
          _
        $region72: #{tpu_custom_call.1} parent=11 // pred_fallthru
          _
        // Predicated region
        $region73: #{tpu_custom_call.1} parent=11 // pred_check
          %p514 = pneg %p402
        $region74: #{tpu_custom_call.1} parent=11 // pred_check_branch
          %516 = sbr.rel (%p514) target = $region76
        $region75: #{tpu_custom_call.1} parent=11 // pred_region
          _
        $region76: #{tpu_custom_call.1} parent=11 // pred_fallthru
          _
      $region12: #{tpu_custom_call.1} parent=5 // pred_fallthru
        _
      %p517 = scmp.lt.s32.totalorder %s28, 2
      // Predicated region
      $region77: #{tpu_custom_call.1} parent=5 // pred_check
        %p518 = pneg %p517
      $region78: #{tpu_custom_call.1} parent=5 // pred_check_branch
        %520 = sbr.rel (%p518) target = $region80
      $region79: #{tpu_custom_call.1} parent=5 // pred_region
        // Predicated region
        $region81: #{tpu_custom_call.1} parent=79 // pred_check
          %p521 = pneg %p60
        $region82: #{tpu_custom_call.1} parent=79 // pred_check_branch
          %523 = sbr.rel (%p521) target = $region84
        $region83: #{tpu_custom_call.1} parent=79 // pred_region
          %p524 = scmp.lt.s32.totalorder %s35, 1
          %s525 = scalar_select %p524, %s35, 1
          %s526 = smul.addr %s525, 8
          %s527 = scalar_lea.vmem %s0, %s526
        $region84: #{tpu_custom_call.1} parent=79 // pred_fallthru
          _
      $region80: #{tpu_custom_call.1} parent=5 // pred_fallthru
        _
      %p528 = scmp.le.s32.totalorder 1, %s28
      %p529 = scmp.lt.s32.totalorder %s28, 3
      %p530 = pnand %p528, %p529
      %p531 = pneg %p530
      // Predicated region
      $region85: #{tpu_custom_call.1} parent=5 // pred_check
        _
      $region86: #{tpu_custom_call.1} parent=5 // pred_check_branch
        %533 = sbr.rel (%p530) target = $region88
      $region87: #{tpu_custom_call.1} parent=5 // pred_region
        %s534 = ssub.s32 %s28, 1
        // Predicated region
        $region89: #{tpu_custom_call.1} parent=87 // pred_check
          %p535 = pneg %p150
        $region90: #{tpu_custom_call.1} parent=87 // pred_check_branch
          %537 = sbr.rel (%p535) target = $region92
        $region91: #{tpu_custom_call.1} parent=87 // pred_region
          %538 = dma.done [#allocation3], 16
        $region92: #{tpu_custom_call.1} parent=87 // pred_fallthru
          _
        // Predicated region
        $region93: #{tpu_custom_call.1} parent=87 // pred_check
          %p539 = pneg %p192
        $region94: #{tpu_custom_call.1} parent=87 // pred_check_branch
          %541 = sbr.rel (%p539) target = $region96
        $region95: #{tpu_custom_call.1} parent=87 // pred_region
          %542 = dma.done [#allocation6], 16
        $region96: #{tpu_custom_call.1} parent=87 // pred_fallthru
          _
        // Predicated region
        $region97: #{tpu_custom_call.1} parent=87 // pred_check
          %p543 = pneg %p234
        $region98: #{tpu_custom_call.1} parent=87 // pred_check_branch
          %545 = sbr.rel (%p543) target = $region100
        $region99: #{tpu_custom_call.1} parent=87 // pred_region
          %546 = dma.done [#allocation6], 16
        $region100: #{tpu_custom_call.1} parent=87 // pred_fallthru
          _
        %p547 = scmp.lt.s32.totalorder %s37, 1
        %s548 = scalar_select %p547, %s37, 1
        %s549 = smul.addr %s548, 8
        %s550 = scalar_lea.vmem %s0, %s549
        %p551 = pneg %p66
        %p552 = pneg %p63
        %p553 = pneg %p87
        %p554 = pneg %p84
        %p555 = pneg %p108
        %p556 = pneg %p105
        %p557 = pneg %p129
        %p558 = pneg %p126
        %p559 = pneg %p150
        %p560 = pneg %p147
        %p561 = pneg %p171
        %p562 = pneg %p168
        %p563 = pneg %p192
        %p564 = pneg %p189
        %p565 = pneg %p213
        %p566 = pneg %p210
        %p567 = pneg %p234
        %p568 = pneg %p231
        %p569 = pneg %p255
        %p570 = pneg %p252
        %p571 = pneg %p276
        %p572 = pneg %p273
        %p573 = pneg %p297
        %p574 = pneg %p294
        %p575 = pneg %p318
        %p576 = pneg %p315
        %p577 = pneg %p339
        %p578 = pneg %p336
        %p579 = pneg %p360
        %p580 = pneg %p357
        %p581 = pneg %p381
        %p582 = pneg %p378
        %p583 = pneg %p402
        %p584 = pneg %p399
        %p585 = pneg %p430
        %p586 = pneg %p427
        %s587 = sand.u32 %s417, 1
        %s588 = scalar_lea.sflag [#allocation4], %s587
        %s589 = sand.u32 %s417, 1
        %s590 = smul.addr %s589, 8
        %s591 = scalar_lea.vmem [#allocation8], %s590
        %p592 = scmp.lt.s32.totalorder %s37, 1
        %s593 = scalar_select %p592, %s37, 1
        %s594 = smul.addr %s593, 8
        %s595 = scalar_lea.vmem %s0, %s594
        %s597 = smul.u32 %s38, 8
        %v598 = vld [vmem:[%s595] sm:$0xff]
        %v599 = vld [vmem:[%s1] sm:$0x1]
        %v600 = vld [vmem:[%s2] sm:$0x1]
        %vm601 = vcmask 261120
        %v602 = vsel %vm601, %v598, 0.0
        %603 = vadd.xlane.f32.xlu0 %v602
        %v604 = vpop.xlane.xlu0 %603
        %v605 = vrcp.pop 32.0
        %v606 = vmul.f32 %v604, %v605
        %v607 = vsub.f32 %v598, %v606
        %v608 = vmul.f32 %v607, %v607
        %v609 = vsel %vm601, %v608, 0.0
        %610 = vadd.xlane.f32.xlu0 %v609
        %v611 = vpop.xlane.xlu0 %610
        %v612 = vmul.f32 %v611, %v605
        %v613 = vadd.f32 %v612, 1e-05
        %v614 = vrsqrt.pop %v613
        %v615 = vmul.f32 %v607, %v614
        %v617 = vlaneseq
        %v618 = vshrl.u32 %v617, 7
        %v619 = vsub.s32 0, %v618
        %v620 = vrot.slane %v599, %v619
        %v622 = vmul.f32 %v615, %v620
        %v624 = vlaneseq
        %v625 = vshrl.u32 %v624, 7
        %v626 = vsub.s32 0, %v625
        %v627 = vrot.slane %v600, %v626
        %v629 = vadd.f32 %v622, %v627
        %v630 = vpack.c.bf16 %v629, %v629
        %v631 = vld [vmem:[%s5] sm:$0xf]
        %v632 = vld [vmem:[%s5 + $0x4] sm:$0xf]
        %v633 = vld [vmem:[%s5 + $0x8] sm:$0xf]
        %v634 = vld [vmem:[%s5 + $0xc] sm:$0xf]
        %v635 = vld [vmem:[#allocation5] sm:$0x1]
        %v637 = vlaneseq
        %v638 = vshrl.u32 %v637, 7
        %v639 = vsub.s32 0, %v638
        %v640 = vrot.slane %v635, %v639
        %v646 = vunpack.c.l.b16 %v631
        %v647 = vunpack.c.l.b16 %v632
        %v648 = vunpack.c.l.b16 %v633
        %v649 = vunpack.c.l.b16 %v634
        %v650 = vpack.c.b16 %v647, %v646
        %v651 = vpack.c.b16 %v649, %v648
        %v655 = vsel %vm601, %v630, 0
        %657 = vmatprep.subr.bf16.mxu0 0
        %658 = vmatpush1.bf16.msra.mxu0 %v650
        %659 = vmatprep.subr.bf16.mxu0 0
        %660 = vmatpush1.bf16.msra.mxu0 %v651
        %661 = vmatprep.subr.bf16.mxu0 0
        %662 = vmatpush1.bf16.msra.mxu0 0
        %663 = vmatprep.subr.bf16.mxu0 0
        %664 = vmatpush1.bf16.msra.mxu0 0
        %665 = vmatprep.subr.bf16.mxu0 0
        %666 = vmatpush1.bf16.msra.mxu0 0
        %667 = vmatprep.subr.bf16.mxu0 0
        %668 = vmatpush1.bf16.msra.mxu0 0
        %669 = vmatprep.subr.bf16.mxu0 0
        %670 = vmatpush1.bf16.msra.mxu0 0
        %671 = vmatprep.subr.bf16.mxu0 0
        %672 = vmatpush1.bf16.msra.mxu0 0
        %673 = vmatprep.subr.bf16.mxu0 0
        %674 = vmatpush1.bf16.msra.mxu0 0
        %675 = vmatprep.subr.bf16.mxu0 0
        %676 = vmatpush1.bf16.msra.mxu0 0
        %677 = vmatprep.subr.bf16.mxu0 0
        %678 = vmatpush1.bf16.msra.mxu0 0
        %679 = vmatprep.subr.bf16.mxu0 0
        %680 = vmatpush1.bf16.msra.mxu0 0
        %681 = vmatprep.subr.bf16.mxu0 0
        %682 = vmatpush1.bf16.msra.mxu0 0
        %683 = vmatprep.subr.bf16.mxu0 0
        %684 = vmatpush1.bf16.msra.mxu0 0
        %685 = vmatprep.subr.bf16.mxu0 0
        %686 = vmatpush1.bf16.msra.mxu0 0
        %687 = vmatprep.subr.bf16.mxu0 0
        %688 = vmatpush1.bf16.msra.mxu0 0
        %689 = vmatprep.mubr.bf16.mxu0 0
        %690 = vmatmul.mubr.bf16.gmra.mrb[0].mxu0 %v655
        %v691 = vpop.f32.mrb[0].mxu0
        %v692 = vadd.f32 %v640, %v691
        %v693 = vpop.f32.mrb[0].mxu0
        %v694 = vpop.f32.mrb[0].mxu0
        %v695 = vpop.f32.mrb[0].mxu0
        %696 = vdwg.mxu0
        %v697 = vpack.c.bf16 %v692, %v692
        %v698 = vld [vmem:[%s7] sm:$0xf]
        %v699 = vld [vmem:[%s7 + $0x4] sm:$0xf]
        %v700 = vld [vmem:[%s7 + $0x8] sm:$0xf]
        %v701 = vld [vmem:[%s7 + $0xc] sm:$0xf]
        %v702 = vld [vmem:[#allocation7] sm:$0x1]
        %v704 = vlaneseq
        %v705 = vshrl.u32 %v704, 7
        %v706 = vsub.s32 0, %v705
        %v707 = vrot.slane %v702, %v706
        %v713 = vunpack.c.l.b16 %v698
        %v714 = vunpack.c.l.b16 %v699
        %v715 = vunpack.c.l.b16 %v700
        %v716 = vunpack.c.l.b16 %v701
        %v717 = vpack.c.b16 %v714, %v713
        %v718 = vpack.c.b16 %v716, %v715
        %721 = vmatprep.subr.bf16.mxu0 0
        %722 = vmatpush1.bf16.msra.mxu0 %v717
        %723 = vmatprep.subr.bf16.mxu0 0
        %724 = vmatpush1.bf16.msra.mxu0 %v718
        %725 = vmatprep.subr.bf16.mxu0 0
        %726 = vmatpush1.bf16.msra.mxu0 0
        %727 = vmatprep.subr.bf16.mxu0 0
        %728 = vmatpush1.bf16.msra.mxu0 0
        %729 = vmatprep.subr.bf16.mxu0 0
        %730 = vmatpush1.bf16.msra.mxu0 0
        %731 = vmatprep.subr.bf16.mxu0 0
        %732 = vmatpush1.bf16.msra.mxu0 0
        %733 = vmatprep.subr.bf16.mxu0 0
        %734 = vmatpush1.bf16.msra.mxu0 0
        %735 = vmatprep.subr.bf16.mxu0 0
        %736 = vmatpush1.bf16.msra.mxu0 0
        %737 = vmatprep.subr.bf16.mxu0 0
        %738 = vmatpush1.bf16.msra.mxu0 0
        %739 = vmatprep.subr.bf16.mxu0 0
        %740 = vmatpush1.bf16.msra.mxu0 0
        %741 = vmatprep.subr.bf16.mxu0 0
        %742 = vmatpush1.bf16.msra.mxu0 0
        %743 = vmatprep.subr.bf16.mxu0 0
        %744 = vmatpush1.bf16.msra.mxu0 0
        %745 = vmatprep.subr.bf16.mxu0 0
        %746 = vmatpush1.bf16.msra.mxu0 0
        %747 = vmatprep.subr.bf16.mxu0 0
        %748 = vmatpush1.bf16.msra.mxu0 0
        %749 = vmatprep.subr.bf16.mxu0 0
        %750 = vmatpush1.bf16.msra.mxu0 0
        %751 = vmatprep.subr.bf16.mxu0 0
        %752 = vmatpush1.bf16.msra.mxu0 0
        %753 = vmatprep.mubr.bf16.mxu0 0
        %754 = vmatmul.mubr.bf16.gmra.mrb[0].mxu0 %v655
        %v755 = vpop.f32.mrb[0].mxu0
        %v756 = vadd.f32 %v707, %v755
        %v757 = vpop.f32.mrb[0].mxu0
        %v758 = vpop.f32.mrb[0].mxu0
        %v759 = vpop.f32.mrb[0].mxu0
        %760 = vdwg.mxu0
        %v761 = vpack.c.bf16 %v756, %v756
        %s762 = scalar_lea.vmem %s595, %s597
        %v763 = vld [vmem:[%s762] sm:$0xff]
        %v764 = vsel %vm601, %v763, 0.0
        %765 = vadd.xlane.f32.xlu0 %v764
        %v766 = vpop.xlane.xlu0 %765
        %v767 = vmul.f32 %v766, %v605
        %v768 = vsub.f32 %v763, %v767
        %v769 = vmul.f32 %v768, %v768
        %v770 = vsel %vm601, %v769, 0.0
        %771 = vadd.xlane.f32.xlu0 %v770
        %v772 = vpop.xlane.xlu0 %771
        %v773 = vmul.f32 %v772, %v605
        %v774 = vadd.f32 %v773, 1e-05
        %v775 = vrsqrt.pop %v774
        %v776 = vmul.f32 %v768, %v775
        %v777 = vmul.f32 %v776, %v620
        %v778 = vadd.f32 %v777, %v627
        %v779 = vpack.c.bf16 %v778, %v778
        %v780 = vld [vmem:[%s3] sm:$0xf]
        %v781 = vld [vmem:[%s3 + $0x4] sm:$0xf]
        %v782 = vld [vmem:[%s3 + $0x8] sm:$0xf]
        %v783 = vld [vmem:[%s3 + $0xc] sm:$0xf]
        %v784 = vld [vmem:[#allocation2] sm:$0x1]
        %v786 = vlaneseq
        %v787 = vshrl.u32 %v786, 7
        %v788 = vsub.s32 0, %v787
        %v789 = vrot.slane %v784, %v788
        %v795 = vunpack.c.l.b16 %v780
        %v796 = vunpack.c.l.b16 %v781
        %v797 = vunpack.c.l.b16 %v782
        %v798 = vunpack.c.l.b16 %v783
        %v799 = vpack.c.b16 %v796, %v795
        %v800 = vpack.c.b16 %v798, %v797
        %v804 = vsel %vm601, %v779, 0
        %806 = vmatprep.subr.bf16.mxu0 0
        %807 = vmatpush1.bf16.msra.mxu0 %v799
        %808 = vmatprep.subr.bf16.mxu0 0
        %809 = vmatpush1.bf16.msra.mxu0 %v800
        %810 = vmatprep.subr.bf16.mxu0 0
        %811 = vmatpush1.bf16.msra.mxu0 0
        %812 = vmatprep.subr.bf16.mxu0 0
        %813 = vmatpush1.bf16.msra.mxu0 0
        %814 = vmatprep.subr.bf16.mxu0 0
        %815 = vmatpush1.bf16.msra.mxu0 0
        %816 = vmatprep.subr.bf16.mxu0 0
        %817 = vmatpush1.bf16.msra.mxu0 0
        %818 = vmatprep.subr.bf16.mxu0 0
        %819 = vmatpush1.bf16.msra.mxu0 0
        %820 = vmatprep.subr.bf16.mxu0 0
        %821 = vmatpush1.bf16.msra.mxu0 0
        %822 = vmatprep.subr.bf16.mxu0 0
        %823 = vmatpush1.bf16.msra.mxu0 0
        %824 = vmatprep.subr.bf16.mxu0 0
        %825 = vmatpush1.bf16.msra.mxu0 0
        %826 = vmatprep.subr.bf16.mxu0 0
        %827 = vmatpush1.bf16.msra.mxu0 0
        %828 = vmatprep.subr.bf16.mxu0 0
        %829 = vmatpush1.bf16.msra.mxu0 0
        %830 = vmatprep.subr.bf16.mxu0 0
        %831 = vmatpush1.bf16.msra.mxu0 0
        %832 = vmatprep.subr.bf16.mxu0 0
        %833 = vmatpush1.bf16.msra.mxu0 0
        %834 = vmatprep.subr.bf16.mxu0 0
        %835 = vmatpush1.bf16.msra.mxu0 0
        %836 = vmatprep.subr.bf16.mxu0 0
        %837 = vmatpush1.bf16.msra.mxu0 0
        %838 = vmatprep.mubr.bf16.mxu0 0
        %839 = vmatmul.mubr.bf16.gmra.mrb[0].mxu0 %v804
        %v840 = vpop.f32.mrb[0].mxu0
        %v841 = vadd.f32 %v789, %v840
        %v842 = vpop.f32.mrb[0].mxu0
        %v843 = vpop.f32.mrb[0].mxu0
        %v844 = vpop.f32.mrb[0].mxu0
        %845 = vdwg.mxu0
        %v846 = vpack.c.bf16 %v841, %v841
        %vm847 = vcmask 64512
        %v849 = vsel %vm847, %v846, 0
        %v852 = vsel %vm847, %v697, 0
        %854 = vmatprep.subr.bf16.mxu0 0
        %855 = vmatpush1.bf16.xpose.msra.mxu0 %v852
        %856 = vmatprep.subr.bf16.mxu0 0
        %857 = vmatpush1.bf16.xpose.msra.mxu0 0
        %858 = vmatprep.subr.bf16.mxu0 0
        %859 = vmatpush1.bf16.xpose.msra.mxu0 0
        %860 = vmatprep.subr.bf16.mxu0 0
        %861 = vmatpush1.bf16.xpose.msra.mxu0 0
        %862 = vmatprep.subr.bf16.mxu0 0
        %863 = vmatpush1.bf16.xpose.msra.mxu0 0
        %864 = vmatprep.subr.bf16.mxu0 0
        %865 = vmatpush1.bf16.xpose.msra.mxu0 0
        %866 = vmatprep.subr.bf16.mxu0 0
        %867 = vmatpush1.bf16.xpose.msra.mxu0 0
        %868 = vmatprep.subr.bf16.mxu0 0
        %869 = vmatpush1.bf16.xpose.msra.mxu0 0
        %870 = vmatprep.subr.bf16.mxu0 0
        %871 = vmatpush1.bf16.xpose.msra.mxu0 0
        %872 = vmatprep.subr.bf16.mxu0 0
        %873 = vmatpush1.bf16.xpose.msra.mxu0 0
        %874 = vmatprep.subr.bf16.mxu0 0
        %875 = vmatpush1.bf16.xpose.msra.mxu0 0
        %876 = vmatprep.subr.bf16.mxu0 0
        %877 = vmatpush1.bf16.xpose.msra.mxu0 0
        %878 = vmatprep.subr.bf16.mxu0 0
        %879 = vmatpush1.bf16.xpose.msra.mxu0 0
        %880 = vmatprep.subr.bf16.mxu0 0
        %881 = vmatpush1.bf16.xpose.msra.mxu0 0
        %882 = vmatprep.subr.bf16.mxu0 0
        %883 = vmatpush1.bf16.xpose.msra.mxu0 0
        %884 = vmatprep.subr.bf16.mxu0 0
        %885 = vmatpush1.bf16.xpose.msra.mxu0 0
        %886 = vmatprep.mubr.bf16.mxu0 0
        %887 = vmatmul.mubr.bf16.gmra.mrb[0].mxu0 %v849
        %v888 = vpop.f32.mrb[0].mxu0
        %v889 = vadd.f32 0.0, %v888
        %v890 = vpop.f32.mrb[0].mxu0
        %v891 = vpop.f32.mrb[0].mxu0
        %v892 = vpop.f32.mrb[0].mxu0
        %893 = vdwg.mxu0
        %v894 = vsel %vm847, %v889, -inf
        %895 = vmax.xlane.f32.xlu0 %v894
        %v896 = vpop.xlane.xlu0 %895
        %v897 = vsub.f32 %v889, %v896
        %v898 = vmul.f32 %v897, 1.442695
        %v899 = vpow.pop %v898
        %v900 = vsel %vm847, %v899, 0.0
        %901 = vadd.xlane.f32.xlu0 %v900
        %v902 = vpop.xlane.xlu0 %901
        %v903 = vrcp.pop %v902
        %v904 = vmul.f32 %v899, %v903
        %v905 = vpack.c.bf16 %v904, %v904
        %v907 = vsel %vm847, %v905, 0
        %vm909 = vcmask 1043456
        %v911 = vsel %vm909, %v761, 0
        %913 = vmatprep.subr.bf16.mxu0 0
        %914 = vmatpush1.bf16.msra.mxu0 %v911
        %915 = vmatprep.subr.bf16.mxu0 0
        %916 = vmatpush1.bf16.msra.mxu0 0
        %917 = vmatprep.subr.bf16.mxu0 0
        %918 = vmatpush1.bf16.msra.mxu0 0
        %919 = vmatprep.subr.bf16.mxu0 0
        %920 = vmatpush1.bf16.msra.mxu0 0
        %921 = vmatprep.subr.bf16.mxu0 0
        %922 = vmatpush1.bf16.msra.mxu0 0
        %923 = vmatprep.subr.bf16.mxu0 0
        %924 = vmatpush1.bf16.msra.mxu0 0
        %925 = vmatprep.subr.bf16.mxu0 0
        %926 = vmatpush1.bf16.msra.mxu0 0
        %927 = vmatprep.subr.bf16.mxu0 0
        %928 = vmatpush1.bf16.msra.mxu0 0
        %929 = vmatprep.subr.bf16.mxu0 0
        %930 = vmatpush1.bf16.msra.mxu0 0
        %931 = vmatprep.subr.bf16.mxu0 0
        %932 = vmatpush1.bf16.msra.mxu0 0
        %933 = vmatprep.subr.bf16.mxu0 0
        %934 = vmatpush1.bf16.msra.mxu0 0
        %935 = vmatprep.subr.bf16.mxu0 0
        %936 = vmatpush1.bf16.msra.mxu0 0
        %937 = vmatprep.subr.bf16.mxu0 0
        %938 = vmatpush1.bf16.msra.mxu0 0
        %939 = vmatprep.subr.bf16.mxu0 0
        %940 = vmatpush1.bf16.msra.mxu0 0
        %941 = vmatprep.subr.bf16.mxu0 0
        %942 = vmatpush1.bf16.msra.mxu0 0
        %943 = vmatprep.subr.bf16.mxu0 0
        %944 = vmatpush1.bf16.msra.mxu0 0
        %945 = vmatprep.mubr.bf16.mxu0 0
        %946 = vmatmul.mubr.bf16.gmra.mrb[0].mxu0 %v907
        %v947 = vpop.f32.mrb[0].mxu0
        %v948 = vadd.f32 0.0, %v947
        %v949 = vpop.f32.mrb[0].mxu0
        %v950 = vpop.f32.mrb[0].mxu0
        %v951 = vpop.f32.mrb[0].mxu0
        %952 = vdwg.mxu0
        %v953 = vpack.c.bf16 %v948, %v948
        %v954 = vld [vmem:[%s9] sm:$0xf]
        %956 = vrot.lane.b32.xlu0 %v846, 120
        %v957 = vpop.permute.xlu0 %956
        %959 = vrot.lane.b32.xlu0 %v697, 120
        %v960 = vpop.permute.xlu0 %959
        %v962 = vsel %vm847, %v957, 0
        %v965 = vsel %vm847, %v960, 0
        %967 = vmatprep.subr.bf16.mxu0 0
        %968 = vmatpush1.bf16.xpose.msra.mxu0 %v965
        %969 = vmatprep.subr.bf16.mxu0 0
        %970 = vmatpush1.bf16.xpose.msra.mxu0 0
        %971 = vmatprep.subr.bf16.mxu0 0
        %972 = vmatpush1.bf16.xpose.msra.mxu0 0
        %973 = vmatprep.subr.bf16.mxu0 0
        %974 = vmatpush1.bf16.xpose.msra.mxu0 0
        %975 = vmatprep.subr.bf16.mxu0 0
        %976 = vmatpush1.bf16.xpose.msra.mxu0 0
        %977 = vmatprep.subr.bf16.mxu0 0
        %978 = vmatpush1.bf16.xpose.msra.mxu0 0
        %979 = vmatprep.subr.bf16.mxu0 0
        %980 = vmatpush1.bf16.xpose.msra.mxu0 0
        %981 = vmatprep.subr.bf16.mxu0 0
        %982 = vmatpush1.bf16.xpose.msra.mxu0 0
        %983 = vmatprep.subr.bf16.mxu0 0
        %984 = vmatpush1.bf16.xpose.msra.mxu0 0
        %985 = vmatprep.subr.bf16.mxu0 0
        %986 = vmatpush1.bf16.xpose.msra.mxu0 0
        %987 = vmatprep.subr.bf16.mxu0 0
        %988 = vmatpush1.bf16.xpose.msra.mxu0 0
        %989 = vmatprep.subr.bf16.mxu0 0
        %990 = vmatpush1.bf16.xpose.msra.mxu0 0
        %991 = vmatprep.subr.bf16.mxu0 0
        %992 = vmatpush1.bf16.xpose.msra.mxu0 0
        %993 = vmatprep.subr.bf16.mxu0 0
        %994 = vmatpush1.bf16.xpose.msra.mxu0 0
        %995 = vmatprep.subr.bf16.mxu0 0
        %996 = vmatpush1.bf16.xpose.msra.mxu0 0
        %997 = vmatprep.subr.bf16.mxu0 0
        %998 = vmatpush1.bf16.xpose.msra.mxu0 0
        %999 = vmatprep.mubr.bf16.mxu0 0
        %1000 = vmatmul.mubr.bf16.gmra.mrb[0].mxu0 %v962
        %v1001 = vpop.f32.mrb[0].mxu0
        %v1002 = vadd.f32 0.0, %v1001
        %v1003 = vpop.f32.mrb[0].mxu0
        %v1004 = vpop.f32.mrb[0].mxu0
        %v1005 = vpop.f32.mrb[0].mxu0
        %1006 = vdwg.mxu0
        %v1007 = vsel %vm847, %v1002, -inf
        %1008 = vmax.xlane.f32.xlu0 %v1007
        %v1009 = vpop.xlane.xlu0 %1008
        %v1010 = vsub.f32 %v1002, %v1009
        %v1011 = vmul.f32 %v1010, 1.442695
        %v1012 = vpow.pop %v1011
        %v1013 = vsel %vm847, %v1012, 0.0
        %1014 = vadd.xlane.f32.xlu0 %v1013
        %v1015 = vpop.xlane.xlu0 %1014
        %v1016 = vrcp.pop %v1015
        %v1017 = vmul.f32 %v1012, %v1016
        %v1018 = vpack.c.bf16 %v1017, %v1017
        %1020 = vrot.lane.b32.xlu0 %v761, 120
        %v1021 = vpop.permute.xlu0 %1020
        %v1023 = vsel %vm847, %v1018, 0
        %v1026 = vsel %vm909, %v1021, 0
        %1028 = vmatprep.subr.bf16.mxu0 0
        %1029 = vmatpush1.bf16.msra.mxu0 %v1026
        %1030 = vmatprep.subr.bf16.mxu0 0
        %1031 = vmatpush1.bf16.msra.mxu0 0
        %1032 = vmatprep.subr.bf16.mxu0 0
        %1033 = vmatpush1.bf16.msra.mxu0 0
        %1034 = vmatprep.subr.bf16.mxu0 0
        %1035 = vmatpush1.bf16.msra.mxu0 0
        %1036 = vmatprep.subr.bf16.mxu0 0
        %1037 = vmatpush1.bf16.msra.mxu0 0
        %1038 = vmatprep.subr.bf16.mxu0 0
        %1039 = vmatpush1.bf16.msra.mxu0 0
        %1040 = vmatprep.subr.bf16.mxu0 0
        %1041 = vmatpush1.bf16.msra.mxu0 0
        %1042 = vmatprep.subr.bf16.mxu0 0
        %1043 = vmatpush1.bf16.msra.mxu0 0
        %1044 = vmatprep.subr.bf16.mxu0 0
        %1045 = vmatpush1.bf16.msra.mxu0 0
        %1046 = vmatprep.subr.bf16.mxu0 0
        %1047 = vmatpush1.bf16.msra.mxu0 0
        %1048 = vmatprep.subr.bf16.mxu0 0
        %1049 = vmatpush1.bf16.msra.mxu0 0
        %1050 = vmatprep.subr.bf16.mxu0 0
        %1051 = vmatpush1.bf16.msra.mxu0 0
        %1052 = vmatprep.subr.bf16.mxu0 0
        %1053 = vmatpush1.bf16.msra.mxu0 0
        %1054 = vmatprep.subr.bf16.mxu0 0
        %1055 = vmatpush1.bf16.msra.mxu0 0
        %1056 = vmatprep.subr.bf16.mxu0 0
        %1057 = vmatpush1.bf16.msra.mxu0 0
        %1058 = vmatprep.subr.bf16.mxu0 0
        %1059 = vmatpush1.bf16.msra.mxu0 0
        %1060 = vmatprep.mubr.bf16.mxu0 0
        %1061 = vmatmul.mubr.bf16.gmra.mrb[0].mxu0 %v1023
        %v1062 = vpop.f32.mrb[0].mxu0
        %v1063 = vadd.f32 0.0, %v1062
        %v1064 = vpop.f32.mrb[0].mxu0
        %v1065 = vpop.f32.mrb[0].mxu0
        %v1066 = vpop.f32.mrb[0].mxu0
        %1067 = vdwg.mxu0
        %v1068 = vpack.c.bf16 %v1063, %v1063
        %v1069 = vld [vmem:[%s9 + $0x4] sm:$0xf]
        %v1071 = vsel %vm847, %v1068, 0
        %v1074 = vsel %vm909, %v1069, 0
        %1076 = vmatprep.subr.bf16.mxu0 0
        %1077 = vmatpush1.bf16.msra.mxu0 %v1074
        %1078 = vmatprep.subr.bf16.mxu0 0
        %1079 = vmatpush1.bf16.msra.mxu0 0
        %1080 = vmatprep.subr.bf16.mxu0 0
        %1081 = vmatpush1.bf16.msra.mxu0 0
        %1082 = vmatprep.subr.bf16.mxu0 0
        %1083 = vmatpush1.bf16.msra.mxu0 0
        %1084 = vmatprep.subr.bf16.mxu0 0
        %1085 = vmatpush1.bf16.msra.mxu0 0
        %1086 = vmatprep.subr.bf16.mxu0 0
        %1087 = vmatpush1.bf16.msra.mxu0 0
        %1088 = vmatprep.subr.bf16.mxu0 0
        %1089 = vmatpush1.bf16.msra.mxu0 0
        %1090 = vmatprep.subr.bf16.mxu0 0
        %1091 = vmatpush1.bf16.msra.mxu0 0
        %1092 = vmatprep.subr.bf16.mxu0 0
        %1093 = vmatpush1.bf16.msra.mxu0 0
        %1094 = vmatprep.subr.bf16.mxu0 0
        %1095 = vmatpush1.bf16.msra.mxu0 0
        %1096 = vmatprep.subr.bf16.mxu0 0
        %1097 = vmatpush1.bf16.msra.mxu0 0
        %1098 = vmatprep.subr.bf16.mxu0 0
        %1099 = vmatpush1.bf16.msra.mxu0 0
        %1100 = vmatprep.subr.bf16.mxu0 0
        %1101 = vmatpush1.bf16.msra.mxu0 0
        %1102 = vmatprep.subr.bf16.mxu0 0
        %1103 = vmatpush1.bf16.msra.mxu0 0
        %1104 = vmatprep.subr.bf16.mxu0 0
        %1105 = vmatpush1.bf16.msra.mxu0 0
        %1106 = vmatprep.subr.bf16.mxu0 0
        %1107 = vmatpush1.bf16.msra.mxu0 0
        %1108 = vmatprep.mubr.bf16.mxu0 0
        %1109 = vmatmul.mubr.bf16.gmra.mrb[0].mxu0 %v1071
        %v1110 = vpop.f32.mrb[0].mxu0
        %v1111 = vadd.f32 0.0, %v1110
        %v1112 = vpop.f32.mrb[0].mxu0
        %v1113 = vpop.f32.mrb[0].mxu0
        %v1114 = vpop.f32.mrb[0].mxu0
        %1115 = vdwg.mxu0
        %v1117 = vsel %vm847, %v953, 0
        %v1120 = vsel %vm909, %v954, 0
        %1122 = vmatprep.subr.bf16.mxu0 0
        %1123 = vmatpush1.bf16.msra.mxu0 %v1120
        %1124 = vmatprep.subr.bf16.mxu0 0
        %1125 = vmatpush1.bf16.msra.mxu0 0
        %1126 = vmatprep.subr.bf16.mxu0 0
        %1127 = vmatpush1.bf16.msra.mxu0 0
        %1128 = vmatprep.subr.bf16.mxu0 0
        %1129 = vmatpush1.bf16.msra.mxu0 0
        %1130 = vmatprep.subr.bf16.mxu0 0
        %1131 = vmatpush1.bf16.msra.mxu0 0
        %1132 = vmatprep.subr.bf16.mxu0 0
        %1133 = vmatpush1.bf16.msra.mxu0 0
        %1134 = vmatprep.subr.bf16.mxu0 0
        %1135 = vmatpush1.bf16.msra.mxu0 0
        %1136 = vmatprep.subr.bf16.mxu0 0
        %1137 = vmatpush1.bf16.msra.mxu0 0
        %1138 = vmatprep.subr.bf16.mxu0 0
        %1139 = vmatpush1.bf16.msra.mxu0 0
        %1140 = vmatprep.subr.bf16.mxu0 0
        %1141 = vmatpush1.bf16.msra.mxu0 0
        %1142 = vmatprep.subr.bf16.mxu0 0
        %1143 = vmatpush1.bf16.msra.mxu0 0
        %1144 = vmatprep.subr.bf16.mxu0 0
        %1145 = vmatpush1.bf16.msra.mxu0 0
        %1146 = vmatprep.subr.bf16.mxu0 0
        %1147 = vmatpush1.bf16.msra.mxu0 0
        %1148 = vmatprep.subr.bf16.mxu0 0
        %1149 = vmatpush1.bf16.msra.mxu0 0
        %1150 = vmatprep.subr.bf16.mxu0 0
        %1151 = vmatpush1.bf16.msra.mxu0 0
        %1152 = vmatprep.subr.bf16.mxu0 0
        %1153 = vmatpush1.bf16.msra.mxu0 0
        %1154 = vmatprep.mubr.bf16.mxu0 0
        %1155 = vmatmul.mubr.bf16.gmra.mrb[0].mxu0 %v1117
        %v1156 = vpop.f32.mrb[0].mxu0
        %v1157 = vadd.f32 %v1111, %v1156
        %v1158 = vpop.f32.mrb[0].mxu0
        %v1159 = vpop.f32.mrb[0].mxu0
        %v1160 = vpop.f32.mrb[0].mxu0
        %1161 = vdwg.mxu0
        %1162 = vrot.lane.b32.xlu0 %v846, 112
        %v1163 = vpop.permute.xlu0 %1162
        %1164 = vrot.lane.b32.xlu0 %v697, 112
        %v1165 = vpop.permute.xlu0 %1164
        %v1167 = vsel %vm847, %v1163, 0
        %v1170 = vsel %vm847, %v1165, 0
        %1172 = vmatprep.subr.bf16.mxu0 0
        %1173 = vmatpush1.bf16.xpose.msra.mxu0 %v1170
        %1174 = vmatprep.subr.bf16.mxu0 0
        %1175 = vmatpush1.bf16.xpose.msra.mxu0 0
        %1176 = vmatprep.subr.bf16.mxu0 0
        %1177 = vmatpush1.bf16.xpose.msra.mxu0 0
        %1178 = vmatprep.subr.bf16.mxu0 0
        %1179 = vmatpush1.bf16.xpose.msra.mxu0 0
        %1180 = vmatprep.subr.bf16.mxu0 0
        %1181 = vmatpush1.bf16.xpose.msra.mxu0 0
        %1182 = vmatprep.subr.bf16.mxu0 0
        %1183 = vmatpush1.bf16.xpose.msra.mxu0 0
        %1184 = vmatprep.subr.bf16.mxu0 0
        %1185 = vmatpush1.bf16.xpose.msra.mxu0 0
        %1186 = vmatprep.subr.bf16.mxu0 0
        %1187 = vmatpush1.bf16.xpose.msra.mxu0 0
        %1188 = vmatprep.subr.bf16.mxu0 0
        %1189 = vmatpush1.bf16.xpose.msra.mxu0 0
        %1190 = vmatprep.subr.bf16.mxu0 0
        %1191 = vmatpush1.bf16.xpose.msra.mxu0 0
        %1192 = vmatprep.subr.bf16.mxu0 0
        %1193 = vmatpush1.bf16.xpose.msra.mxu0 0
        %1194 = vmatprep.subr.bf16.mxu0 0
        %1195 = vmatpush1.bf16.xpose.msra.mxu0 0
        %1196 = vmatprep.subr.bf16.mxu0 0
        %1197 = vmatpush1.bf16.xpose.msra.mxu0 0
        %1198 = vmatprep.subr.bf16.mxu0 0
        %1199 = vmatpush1.bf16.xpose.msra.mxu0 0
        %1200 = vmatprep.subr.bf16.mxu0 0
        %1201 = vmatpush1.bf16.xpose.msra.mxu0 0
        %1202 = vmatprep.subr.bf16.mxu0 0
        %1203 = vmatpush1.bf16.xpose.msra.mxu0 0
        %1204 = vmatprep.mubr.bf16.mxu0 0
        %1205 = vmatmul.mubr.bf16.gmra.mrb[0].mxu0 %v1167
        %v1206 = vpop.f32.mrb[0].mxu0
        %v1207 = vadd.f32 0.0, %v1206
        %v1208 = vpop.f32.mrb[0].mxu0
        %v1209 = vpop.f32.mrb[0].mxu0
        %v1210 = vpop.f32.mrb[0].mxu0
        %1211 = vdwg.mxu0
        %v1212 = vsel %vm847, %v1207, -inf
        %1213 = vmax.xlane.f32.xlu0 %v1212
        %v1214 = vpop.xlane.xlu0 %1213
        %v1215 = vsub.f32 %v1207, %v1214
        %v1216 = vmul.f32 %v1215, 1.442695
        %v1217 = vpow.pop %v1216
        %v1218 = vsel %vm847, %v1217, 0.0
        %1219 = vadd.xlane.f32.xlu0 %v1218
        %v1220 = vpop.xlane.xlu0 %1219
        %v1221 = vrcp.pop %v1220
        %v1222 = vmul.f32 %v1217, %v1221
        %v1223 = vpack.c.bf16 %v1222, %v1222
        %1224 = vrot.lane.b32.xlu0 %v761, 112
        %v1225 = vpop.permute.xlu0 %1224
        %v1227 = vsel %vm847, %v1223, 0
        %v1230 = vsel %vm909, %v1225, 0
        %1232 = vmatprep.subr.bf16.mxu0 0
        %1233 = vmatpush1.bf16.msra.mxu0 %v1230
        %1234 = vmatprep.subr.bf16.mxu0 0
        %1235 = vmatpush1.bf16.msra.mxu0 0
        %1236 = vmatprep.subr.bf16.mxu0 0
        %1237 = vmatpush1.bf16.msra.mxu0 0
        %1238 = vmatprep.subr.bf16.mxu0 0
        %1239 = vmatpush1.bf16.msra.mxu0 0
        %1240 = vmatprep.subr.bf16.mxu0 0
        %1241 = vmatpush1.bf16.msra.mxu0 0
        %1242 = vmatprep.subr.bf16.mxu0 0
        %1243 = vmatpush1.bf16.msra.mxu0 0
        %1244 = vmatprep.subr.bf16.mxu0 0
        %1245 = vmatpush1.bf16.msra.mxu0 0
        %1246 = vmatprep.subr.bf16.mxu0 0
        %1247 = vmatpush1.bf16.msra.mxu0 0
        %1248 = vmatprep.subr.bf16.mxu0 0
        %1249 = vmatpush1.bf16.msra.mxu0 0
        %1250 = vmatprep.subr.bf16.mxu0 0
        %1251 = vmatpush1.bf16.msra.mxu0 0
        %1252 = vmatprep.subr.bf16.mxu0 0
        %1253 = vmatpush1.bf16.msra.mxu0 0
        %1254 = vmatprep.subr.bf16.mxu0 0
        %1255 = vmatpush1.bf16.msra.mxu0 0
        %1256 = vmatprep.subr.bf16.mxu0 0
        %1257 = vmatpush1.bf16.msra.mxu0 0
        %1258 = vmatprep.subr.bf16.mxu0 0
        %1259 = vmatpush1.bf16.msra.mxu0 0
        %1260 = vmatprep.subr.bf16.mxu0 0
        %1261 = vmatpush1.bf16.msra.mxu0 0
        %1262 = vmatprep.subr.bf16.mxu0 0
        %1263 = vmatpush1.bf16.msra.mxu0 0
        %1264 = vmatprep.mubr.bf16.mxu0 0
        %1265 = vmatmul.mubr.bf16.gmra.mrb[0].mxu0 %v1227
        %v1266 = vpop.f32.mrb[0].mxu0
        %v1267 = vadd.f32 0.0, %v1266
        %v1268 = vpop.f32.mrb[0].mxu0
        %v1269 = vpop.f32.mrb[0].mxu0
        %v1270 = vpop.f32.mrb[0].mxu0
        %1271 = vdwg.mxu0
        %v1272 = vpack.c.bf16 %v1267, %v1267
        %v1273 = vld [vmem:[%s9 + $0x8] sm:$0xf]
        %v1275 = vsel %vm847, %v1272, 0
        %v1278 = vsel %vm909, %v1273, 0
        %1280 = vmatprep.subr.bf16.mxu0 0
        %1281 = vmatpush1.bf16.msra.mxu0 %v1278
        %1282 = vmatprep.subr.bf16.mxu0 0
        %1283 = vmatpush1.bf16.msra.mxu0 0
        %1284 = vmatprep.subr.bf16.mxu0 0
        %1285 = vmatpush1.bf16.msra.mxu0 0
        %1286 = vmatprep.subr.bf16.mxu0 0
        %1287 = vmatpush1.bf16.msra.mxu0 0
        %1288 = vmatprep.subr.bf16.mxu0 0
        %1289 = vmatpush1.bf16.msra.mxu0 0
        %1290 = vmatprep.subr.bf16.mxu0 0
        %1291 = vmatpush1.bf16.msra.mxu0 0
        %1292 = vmatprep.subr.bf16.mxu0 0
        %1293 = vmatpush1.bf16.msra.mxu0 0
        %1294 = vmatprep.subr.bf16.mxu0 0
        %1295 = vmatpush1.bf16.msra.mxu0 0
        %1296 = vmatprep.subr.bf16.mxu0 0
        %1297 = vmatpush1.bf16.msra.mxu0 0
        %1298 = vmatprep.subr.bf16.mxu0 0
        %1299 = vmatpush1.bf16.msra.mxu0 0
        %1300 = vmatprep.subr.bf16.mxu0 0
        %1301 = vmatpush1.bf16.msra.mxu0 0
        %1302 = vmatprep.subr.bf16.mxu0 0
        %1303 = vmatpush1.bf16.msra.mxu0 0
        %1304 = vmatprep.subr.bf16.mxu0 0
        %1305 = vmatpush1.bf16.msra.mxu0 0
        %1306 = vmatprep.subr.bf16.mxu0 0
        %1307 = vmatpush1.bf16.msra.mxu0 0
        %1308 = vmatprep.subr.bf16.mxu0 0
        %1309 = vmatpush1.bf16.msra.mxu0 0
        %1310 = vmatprep.subr.bf16.mxu0 0
        %1311 = vmatpush1.bf16.msra.mxu0 0
        %1312 = vmatprep.mubr.bf16.mxu0 0
        %1313 = vmatmul.mubr.bf16.gmra.mrb[0].mxu0 %v1275
        %v1314 = vpop.f32.mrb[0].mxu0
        %v1315 = vadd.f32 0.0, %v1314
        %v1316 = vpop.f32.mrb[0].mxu0
        %v1317 = vpop.f32.mrb[0].mxu0
        %v1318 = vpop.f32.mrb[0].mxu0
        %1319 = vdwg.mxu0
        %v1320 = vadd.f32 %v1157, %v1315
        %1321 = vrot.lane.b32.xlu0 %v846, 104
        %v1322 = vpop.permute.xlu0 %1321
        %1323 = vrot.lane.b32.xlu0 %v697, 104
        %v1324 = vpop.permute.xlu0 %1323
        %v1326 = vsel %vm847, %v1322, 0
        %v1329 = vsel %vm847, %v1324, 0
        %1331 = vmatprep.subr.bf16.mxu0 0
        %1332 = vmatpush1.bf16.xpose.msra.mxu0 %v1329
        %1333 = vmatprep.subr.bf16.mxu0 0
        %1334 = vmatpush1.bf16.xpose.msra.mxu0 0
        %1335 = vmatprep.subr.bf16.mxu0 0
        %1336 = vmatpush1.bf16.xpose.msra.mxu0 0
        %1337 = vmatprep.subr.bf16.mxu0 0
        %1338 = vmatpush1.bf16.xpose.msra.mxu0 0
        %1339 = vmatprep.subr.bf16.mxu0 0
        %1340 = vmatpush1.bf16.xpose.msra.mxu0 0
        %1341 = vmatprep.subr.bf16.mxu0 0
        %1342 = vmatpush1.bf16.xpose.msra.mxu0 0
        %1343 = vmatprep.subr.bf16.mxu0 0
        %1344 = vmatpush1.bf16.xpose.msra.mxu0 0
        %1345 = vmatprep.subr.bf16.mxu0 0
        %1346 = vmatpush1.bf16.xpose.msra.mxu0 0
        %1347 = vmatprep.subr.bf16.mxu0 0
        %1348 = vmatpush1.bf16.xpose.msra.mxu0 0
        %1349 = vmatprep.subr.bf16.mxu0 0
        %1350 = vmatpush1.bf16.xpose.msra.mxu0 0
        %1351 = vmatprep.subr.bf16.mxu0 0
        %1352 = vmatpush1.bf16.xpose.msra.mxu0 0
        %1353 = vmatprep.subr.bf16.mxu0 0
        %1354 = vmatpush1.bf16.xpose.msra.mxu0 0
        %1355 = vmatprep.subr.bf16.mxu0 0
        %1356 = vmatpush1.bf16.xpose.msra.mxu0 0
        %1357 = vmatprep.subr.bf16.mxu0 0
        %1358 = vmatpush1.bf16.xpose.msra.mxu0 0
        %1359 = vmatprep.subr.bf16.mxu0 0
        %1360 = vmatpush1.bf16.xpose.msra.mxu0 0
        %1361 = vmatprep.subr.bf16.mxu0 0
        %1362 = vmatpush1.bf16.xpose.msra.mxu0 0
        %1363 = vmatprep.mubr.bf16.mxu0 0
        %1364 = vmatmul.mubr.bf16.gmra.mrb[0].mxu0 %v1326
        %v1365 = vpop.f32.mrb[0].mxu0
        %v1366 = vadd.f32 0.0, %v1365
        %v1367 = vpop.f32.mrb[0].mxu0
        %v1368 = vpop.f32.mrb[0].mxu0
        %v1369 = vpop.f32.mrb[0].mxu0
        %1370 = vdwg.mxu0
        %v1371 = vsel %vm847, %v1366, -inf
        %1372 = vmax.xlane.f32.xlu0 %v1371
        %v1373 = vpop.xlane.xlu0 %1372
        %v1374 = vsub.f32 %v1366, %v1373
        %v1375 = vmul.f32 %v1374, 1.442695
        %v1376 = vpow.pop %v1375
        %v1377 = vsel %vm847, %v1376, 0.0
        %1378 = vadd.xlane.f32.xlu0 %v1377
        %v1379 = vpop.xlane.xlu0 %1378
        %v1380 = vrcp.pop %v1379
        %v1381 = vmul.f32 %v1376, %v1380
        %v1382 = vpack.c.bf16 %v1381, %v1381
        %1383 = vrot.lane.b32.xlu0 %v761, 104
        %v1384 = vpop.permute.xlu0 %1383
        %v1386 = vsel %vm847, %v1382, 0
        %v1389 = vsel %vm909, %v1384, 0
        %1391 = vmatprep.subr.bf16.mxu0 0
        %1392 = vmatpush1.bf16.msra.mxu0 %v1389
        %1393 = vmatprep.subr.bf16.mxu0 0
        %1394 = vmatpush1.bf16.msra.mxu0 0
        %1395 = vmatprep.subr.bf16.mxu0 0
        %1396 = vmatpush1.bf16.msra.mxu0 0
        %1397 = vmatprep.subr.bf16.mxu0 0
        %1398 = vmatpush1.bf16.msra.mxu0 0
        %1399 = vmatprep.subr.bf16.mxu0 0
        %1400 = vmatpush1.bf16.msra.mxu0 0
        %1401 = vmatprep.subr.bf16.mxu0 0
        %1402 = vmatpush1.bf16.msra.mxu0 0
        %1403 = vmatprep.subr.bf16.mxu0 0
        %1404 = vmatpush1.bf16.msra.mxu0 0
        %1405 = vmatprep.subr.bf16.mxu0 0
        %1406 = vmatpush1.bf16.msra.mxu0 0
        %1407 = vmatprep.subr.bf16.mxu0 0
        %1408 = vmatpush1.bf16.msra.mxu0 0
        %1409 = vmatprep.subr.bf16.mxu0 0
        %1410 = vmatpush1.bf16.msra.mxu0 0
        %1411 = vmatprep.subr.bf16.mxu0 0
        %1412 = vmatpush1.bf16.msra.mxu0 0
        %1413 = vmatprep.subr.bf16.mxu0 0
        %1414 = vmatpush1.bf16.msra.mxu0 0
        %1415 = vmatprep.subr.bf16.mxu0 0
        %1416 = vmatpush1.bf16.msra.mxu0 0
        %1417 = vmatprep.subr.bf16.mxu0 0
        %1418 = vmatpush1.bf16.msra.mxu0 0
        %1419 = vmatprep.subr.bf16.mxu0 0
        %1420 = vmatpush1.bf16.msra.mxu0 0
        %1421 = vmatprep.subr.bf16.mxu0 0
        %1422 = vmatpush1.bf16.msra.mxu0 0
        %1423 = vmatprep.mubr.bf16.mxu0 0
        %1424 = vmatmul.mubr.bf16.gmra.mrb[0].mxu0 %v1386
        %v1425 = vpop.f32.mrb[0].mxu0
        %v1426 = vadd.f32 0.0, %v1425
        %v1427 = vpop.f32.mrb[0].mxu0
        %v1428 = vpop.f32.mrb[0].mxu0
        %v1429 = vpop.f32.mrb[0].mxu0
        %1430 = vdwg.mxu0
        %v1431 = vpack.c.bf16 %v1426, %v1426
        %v1432 = vld [vmem:[%s9 + $0xc] sm:$0xf]
        %v1434 = vsel %vm847, %v1431, 0
        %v1437 = vsel %vm909, %v1432, 0
        %1439 = vmatprep.subr.bf16.mxu0 0
        %1440 = vmatpush1.bf16.msra.mxu0 %v1437
        %1441 = vmatprep.subr.bf16.mxu0 0
        %1442 = vmatpush1.bf16.msra.mxu0 0
        %1443 = vmatprep.subr.bf16.mxu0 0
        %1444 = vmatpush1.bf16.msra.mxu0 0
        %1445 = vmatprep.subr.bf16.mxu0 0
        %1446 = vmatpush1.bf16.msra.mxu0 0
        %1447 = vmatprep.subr.bf16.mxu0 0
        %1448 = vmatpush1.bf16.msra.mxu0 0
        %1449 = vmatprep.subr.bf16.mxu0 0
        %1450 = vmatpush1.bf16.msra.mxu0 0
        %1451 = vmatprep.subr.bf16.mxu0 0
        %1452 = vmatpush1.bf16.msra.mxu0 0
        %1453 = vmatprep.subr.bf16.mxu0 0
        %1454 = vmatpush1.bf16.msra.mxu0 0
        %1455 = vmatprep.subr.bf16.mxu0 0
        %1456 = vmatpush1.bf16.msra.mxu0 0
        %1457 = vmatprep.subr.bf16.mxu0 0
        %1458 = vmatpush1.bf16.msra.mxu0 0
        %1459 = vmatprep.subr.bf16.mxu0 0
        %1460 = vmatpush1.bf16.msra.mxu0 0
        %1461 = vmatprep.subr.bf16.mxu0 0
        %1462 = vmatpush1.bf16.msra.mxu0 0
        %1463 = vmatprep.subr.bf16.mxu0 0
        %1464 = vmatpush1.bf16.msra.mxu0 0
        %1465 = vmatprep.subr.bf16.mxu0 0
        %1466 = vmatpush1.bf16.msra.mxu0 0
        %1467 = vmatprep.subr.bf16.mxu0 0
        %1468 = vmatpush1.bf16.msra.mxu0 0
        %1469 = vmatprep.subr.bf16.mxu0 0
        %1470 = vmatpush1.bf16.msra.mxu0 0
        %1471 = vmatprep.mubr.bf16.mxu0 0
        %1472 = vmatmul.mubr.bf16.gmra.mrb[0].mxu0 %v1434
        %v1473 = vpop.f32.mrb[0].mxu0
        %v1474 = vadd.f32 0.0, %v1473
        %v1475 = vpop.f32.mrb[0].mxu0
        %v1476 = vpop.f32.mrb[0].mxu0
        %v1477 = vpop.f32.mrb[0].mxu0
        %1478 = vdwg.mxu0
        %v1479 = vadd.f32 %v1320, %v1474
        %v1480 = vadd.f32 %v763, %v1479
        %v1481 = vld [vmem:[%s10] sm:$0x1]
        %v1483 = vlaneseq
        %v1484 = vshrl.u32 %v1483, 7
        %v1485 = vsub.s32 0, %v1484
        %v1486 = vrot.slane %v1481, %v1485
        %v1488 = vadd.f32 %v1480, %v1486
        %v1489 = vld [vmem:[%s11] sm:$0x1]
        %v1490 = vld [vmem:[%s12] sm:$0x1]
        %v1491 = vsel %vm601, %v1488, 0.0
        %1492 = vadd.xlane.f32.xlu0 %v1491
        %v1493 = vpop.xlane.xlu0 %1492
        %v1494 = vmul.f32 %v1493, %v605
        %v1495 = vsub.f32 %v1488, %v1494
        %v1496 = vmul.f32 %v1495, %v1495
        %v1497 = vsel %vm601, %v1496, 0.0
        %1498 = vadd.xlane.f32.xlu0 %v1497
        %v1499 = vpop.xlane.xlu0 %1498
        %v1500 = vmul.f32 %v1499, %v605
        %v1501 = vadd.f32 %v1500, 1e-05
        %v1502 = vrsqrt.pop %v1501
        %v1503 = vmul.f32 %v1495, %v1502
        %v1505 = vlaneseq
        %v1506 = vshrl.u32 %v1505, 7
        %v1507 = vsub.s32 0, %v1506
        %v1508 = vrot.slane %v1489, %v1507
        %v1510 = vmul.f32 %v1503, %v1508
        %v1512 = vlaneseq
        %v1513 = vshrl.u32 %v1512, 7
        %v1514 = vsub.s32 0, %v1513
        %v1515 = vrot.slane %v1490, %v1514
        %v1517 = vadd.f32 %v1510, %v1515
        %v1518 = vpack.c.bf16 %v1517, %v1517
        %v1519 = vld [vmem:[%s13] sm:$0xf]
        %v1520 = vld [vmem:[%s13 + $0x4] sm:$0xf]
        %v1521 = vld [vmem:[%s13 + $0x8] sm:$0xf]
        %v1522 = vld [vmem:[%s13 + $0xc] sm:$0xf]
        %v1523 = vld [vmem:[%s14] sm:$0x1]
        %v1525 = vlaneseq
        %v1526 = vshrl.u32 %v1525, 7
        %v1527 = vsub.s32 0, %v1526
        %v1528 = vrot.slane %v1523, %v1527
        %v1534 = vunpack.c.l.b16 %v1519
        %v1535 = vunpack.c.l.b16 %v1520
        %v1536 = vunpack.c.l.b16 %v1521
        %v1537 = vunpack.c.l.b16 %v1522
        %v1538 = vpack.c.b16 %v1535, %v1534
        %v1539 = vpack.c.b16 %v1537, %v1536
        %v1543 = vsel %vm601, %v1518, 0
        %1545 = vmatprep.subr.bf16.mxu0 0
        %1546 = vmatpush1.bf16.msra.mxu0 %v1538
        %1547 = vmatprep.subr.bf16.mxu0 0
        %1548 = vmatpush1.bf16.msra.mxu0 %v1539
        %1549 = vmatprep.subr.bf16.mxu0 0
        %1550 = vmatpush1.bf16.msra.mxu0 0
        %1551 = vmatprep.subr.bf16.mxu0 0
        %1552 = vmatpush1.bf16.msra.mxu0 0
        %1553 = vmatprep.subr.bf16.mxu0 0
        %1554 = vmatpush1.bf16.msra.mxu0 0
        %1555 = vmatprep.subr.bf16.mxu0 0
        %1556 = vmatpush1.bf16.msra.mxu0 0
        %1557 = vmatprep.subr.bf16.mxu0 0
        %1558 = vmatpush1.bf16.msra.mxu0 0
        %1559 = vmatprep.subr.bf16.mxu0 0
        %1560 = vmatpush1.bf16.msra.mxu0 0
        %1561 = vmatprep.subr.bf16.mxu0 0
        %1562 = vmatpush1.bf16.msra.mxu0 0
        %1563 = vmatprep.subr.bf16.mxu0 0
        %1564 = vmatpush1.bf16.msra.mxu0 0
        %1565 = vmatprep.subr.bf16.mxu0 0
        %1566 = vmatpush1.bf16.msra.mxu0 0
        %1567 = vmatprep.subr.bf16.mxu0 0
        %1568 = vmatpush1.bf16.msra.mxu0 0
        %1569 = vmatprep.subr.bf16.mxu0 0
        %1570 = vmatpush1.bf16.msra.mxu0 0
        %1571 = vmatprep.subr.bf16.mxu0 0
        %1572 = vmatpush1.bf16.msra.mxu0 0
        %1573 = vmatprep.subr.bf16.mxu0 0
        %1574 = vmatpush1.bf16.msra.mxu0 0
        %1575 = vmatprep.subr.bf16.mxu0 0
        %1576 = vmatpush1.bf16.msra.mxu0 0
        %1577 = vmatprep.mubr.bf16.mxu0 0
        %1578 = vmatmul.mubr.bf16.gmra.mrb[0].mxu0 %v1543
        %v1579 = vpop.f32.mrb[0].mxu0
        %v1580 = vadd.f32 %v1528, %v1579
        %v1581 = vpop.f32.mrb[0].mxu0
        %v1582 = vpop.f32.mrb[0].mxu0
        %v1583 = vpop.f32.mrb[0].mxu0
        %1584 = vdwg.mxu0
        %v1585 = vmul.f32 %v1580, 0.5
        %v1586 = vmul.f32 %v1580, 0.70710677
        %v1587 = verf.f32.pop %v1586
        %v1588 = vadd.f32 %v1587, 1.0
        %v1589 = vmul.f32 %v1585, %v1588
        %v1590 = vpack.c.bf16 %v1589, %v1589
        %v1591 = vld [vmem:[%s15] sm:$0xf]
        %v1592 = vld [vmem:[%s15 + $0x4] sm:$0xf]
        %v1593 = vld [vmem:[%s15 + $0x8] sm:$0xf]
        %v1594 = vld [vmem:[%s15 + $0xc] sm:$0xf]
        %v1595 = vld [vmem:[%s15 + $0x10] sm:$0xf]
        %v1596 = vld [vmem:[%s15 + $0x14] sm:$0xf]
        %v1597 = vld [vmem:[%s15 + $0x18] sm:$0xf]
        %v1598 = vld [vmem:[%s15 + $0x1c] sm:$0xf]
        %v1599 = vld [vmem:[%s15 + $0x20] sm:$0xf]
        %v1600 = vld [vmem:[%s15 + $0x24] sm:$0xf]
        %v1601 = vld [vmem:[%s15 + $0x28] sm:$0xf]
        %v1602 = vld [vmem:[%s15 + $0x2c] sm:$0xf]
        %v1603 = vld [vmem:[%s15 + $0x30] sm:$0xf]
        %v1604 = vld [vmem:[%s15 + $0x34] sm:$0xf]
        %v1605 = vld [vmem:[%s15 + $0x38] sm:$0xf]
        %v1606 = vld [vmem:[%s15 + $0x3c] sm:$0xf]
        %v1607 = vld [vmem:[%s16] sm:$0x1]
        %v1609 = vlaneseq
        %v1610 = vshrl.u32 %v1609, 7
        %v1611 = vsub.s32 0, %v1610
        %v1612 = vrot.slane %v1607, %v1611
        %v1630 = vunpack.c.l.b16 %v1591
        %v1631 = vunpack.c.l.b16 %v1592
        %v1632 = vunpack.c.l.b16 %v1593
        %v1633 = vunpack.c.l.b16 %v1594
        %v1634 = vunpack.c.l.b16 %v1595
        %v1635 = vunpack.c.l.b16 %v1596
        %v1636 = vunpack.c.l.b16 %v1597
        %v1637 = vunpack.c.l.b16 %v1598
        %v1638 = vunpack.c.l.b16 %v1599
        %v1639 = vunpack.c.l.b16 %v1600
        %v1640 = vunpack.c.l.b16 %v1601
        %v1641 = vunpack.c.l.b16 %v1602
        %v1642 = vunpack.c.l.b16 %v1603
        %v1643 = vunpack.c.l.b16 %v1604
        %v1644 = vunpack.c.l.b16 %v1605
        %v1645 = vunpack.c.l.b16 %v1606
        %v1646 = vpack.c.b16 %v1631, %v1630
        %v1647 = vpack.c.b16 %v1633, %v1632
        %v1648 = vpack.c.b16 %v1635, %v1634
        %v1649 = vpack.c.b16 %v1637, %v1636
        %v1650 = vpack.c.b16 %v1639, %v1638
        %v1651 = vpack.c.b16 %v1641, %v1640
        %v1652 = vpack.c.b16 %v1643, %v1642
        %v1653 = vpack.c.b16 %v1645, %v1644
        %1662 = vmatprep.subr.bf16.mxu0 0
        %1663 = vmatpush1.bf16.msra.mxu0 %v1646
        %1664 = vmatprep.subr.bf16.mxu0 0
        %1665 = vmatpush1.bf16.msra.mxu0 %v1647
        %1666 = vmatprep.subr.bf16.mxu0 0
        %1667 = vmatpush1.bf16.msra.mxu0 %v1648
        %1668 = vmatprep.subr.bf16.mxu0 0
        %1669 = vmatpush1.bf16.msra.mxu0 %v1649
        %1670 = vmatprep.subr.bf16.mxu0 0
        %1671 = vmatpush1.bf16.msra.mxu0 %v1650
        %1672 = vmatprep.subr.bf16.mxu0 0
        %1673 = vmatpush1.bf16.msra.mxu0 %v1651
        %1674 = vmatprep.subr.bf16.mxu0 0
        %1675 = vmatpush1.bf16.msra.mxu0 %v1652
        %1676 = vmatprep.subr.bf16.mxu0 0
        %1677 = vmatpush1.bf16.msra.mxu0 %v1653
        %1678 = vmatprep.subr.bf16.mxu0 0
        %1679 = vmatpush1.bf16.msra.mxu0 0
        %1680 = vmatprep.subr.bf16.mxu0 0
        %1681 = vmatpush1.bf16.msra.mxu0 0
        %1682 = vmatprep.subr.bf16.mxu0 0
        %1683 = vmatpush1.bf16.msra.mxu0 0
        %1684 = vmatprep.subr.bf16.mxu0 0
        %1685 = vmatpush1.bf16.msra.mxu0 0
        %1686 = vmatprep.subr.bf16.mxu0 0
        %1687 = vmatpush1.bf16.msra.mxu0 0
        %1688 = vmatprep.subr.bf16.mxu0 0
        %1689 = vmatpush1.bf16.msra.mxu0 0
        %1690 = vmatprep.subr.bf16.mxu0 0
        %1691 = vmatpush1.bf16.msra.mxu0 0
        %1692 = vmatprep.subr.bf16.mxu0 0
        %1693 = vmatpush1.bf16.msra.mxu0 0
        %1694 = vmatprep.mubr.bf16.mxu0 0
        %1695 = vmatmul.mubr.bf16.gmra.mrb[0].mxu0 %v1590
        %v1696 = vpop.f32.mrb[0].mxu0
        %v1697 = vadd.f32 %v1612, %v1696
        %v1698 = vpop.f32.mrb[0].mxu0
        %v1699 = vpop.f32.mrb[0].mxu0
        %v1700 = vpop.f32.mrb[0].mxu0
        %1701 = vdwg.mxu0
        %v1702 = vadd.f32 %v1488, %v1697
        %1703 = vst.msk [vmem:[%s591] sm:$0xff] %vm601, %v1702
        %s1704 = sand.u32 %s417, 1
        %s1705 = scalar_lea.sflag [#allocation4], %s1704
        %s1706 = sand.u32 %s417, 1
        %s1707 = smul.addr %s1706, 8
        %s1708 = scalar_lea.vmem [#allocation8], %s1707
        // Predicated region
        $region101: #{tpu_custom_call.1} parent=87 // pred_check
          %p1709 = pneg %p427
        $region102: #{tpu_custom_call.1} parent=87 // pred_check_branch
          %1711 = sbr.rel (%p1709) target = $region104
        $region103: #{tpu_custom_call.1} parent=87 // pred_region
          %s1713 = ssub.s32 128, 128
          %1714 = vsyncadd %s1705, %s1713
          %s1715 = sadd.s32 %s38, %s37
          %s1716 = smul.addr %s1715, 128
          %s1717 = scalar_lea.hbm %s17, %s1716
          %s1719 = sshll.u32 %s1708, 4
          %s1720 = int_to_ptr.vmem [resolvable:$true] %s1719
          %1722 = dma.vmem_to_hbm [thread:$0]  %s1720, 128, %s1717, %s1705
        $region104: #{tpu_custom_call.1} parent=87 // pred_fallthru
          _
      $region88: #{tpu_custom_call.1} parent=5 // pred_fallthru
        _
      %p1723 = scmp.le.s32.totalorder 2, %s28
      // Predicated region
      $region105: #{tpu_custom_call.1} parent=5 // pred_check
        %p1724 = pneg %p1723
      $region106: #{tpu_custom_call.1} parent=5 // pred_check_branch
        %1726 = sbr.rel (%p1724) target = $region108
      $region107: #{tpu_custom_call.1} parent=5 // pred_region
        %s1727 = ssub.s32 %s28, 2
        // Predicated region
        $region109: #{tpu_custom_call.1} parent=107 // pred_check
          %p1728 = pneg %p433
        $region110: #{tpu_custom_call.1} parent=107 // pred_check_branch
          %1730 = sbr.rel (%p1728) target = $region112
        $region111: #{tpu_custom_call.1} parent=107 // pred_region
          %s1731 = sand.u32 %s418, 1
          %s1732 = scalar_lea.sflag [#allocation4], %s1731
          %s1733 = sand.u32 %s418, 1
          %s1734 = smul.addr %s1733, 8
          %s1735 = scalar_lea.vmem [#allocation8], %s1734
          %1736 = dma.done %s1732, 128
        $region112: #{tpu_custom_call.1} parent=107 // pred_fallthru
          _
      $region108: #{tpu_custom_call.1} parent=5 // pred_fallthru
        _
    $region6: #{tpu_custom_call.1} parent=1 // loop_footer
      %s32 = sadd.s32 1, %s28
    $region7: #{tpu_custom_call.1} parent=1 // loop_footer_branch
      %27 = sbr.rel target = $region3
    $region8: #{tpu_custom_call.1} parent=1 // loop_exit
      _
    %1737 = vsyncpa [#allocation3], 1
    %s1738 = scalar_lea.sflag [#allocation3], 1
    %1739 = vsyncpa %s1738, 1
    %1740 = vsyncpa [#allocation6], 1
    %1741 = vsyncpa [#allocation4], 1
    %s1742 = scalar_lea.sflag [#allocation4], 1
    %1743 = vsyncpa %s1742, 1

// kernel: tpu_custom_call.1
$region0: #{tpu_custom_call.1}
  #allocation0 [shape = 'u32[]', space=smem, size = 0x4, offset = 0x4, fixed_abs, tag = 'smem constant byte address 0x4 - core index']
  #allocation1 [shape = 'u32[144,128]{1,0:T(1,128)}', space=vmem, size = 0x12000, scoped, tag = 'internal scratch']
  %s0 = inlined_call_operand.vmem [shape: f32[2,8,32], index: 0, kind: input, shape index: {}]
  %s1 = inlined_call_operand.vmem [shape: f32[1,32], index: 1, kind: input, shape index: {}]
  %s2 = inlined_call_operand.vmem [shape: f32[1,32], index: 2, kind: input, shape index: {}]
  %s3 = inlined_call_operand.vmem [shape: bf16[32,32], index: 3, kind: input, shape index: {}]
  %s4 = inlined_call_operand.hbm [shape: f32[1,32], index: 4, kind: input, shape index: {}]
  %s5 = inlined_call_operand.vmem [shape: bf16[32,32], index: 5, kind: input, shape index: {}]
  %s6 = inlined_call_operand.hbm [shape: f32[1,32], index: 6, kind: input, shape index: {}]
  %s7 = inlined_call_operand.vmem [shape: bf16[32,32], index: 7, kind: input, shape index: {}]
  %s8 = inlined_call_operand.hbm [shape: f32[1,32], index: 8, kind: input, shape index: {}]
  %s9 = inlined_call_operand.vmem [shape: bf16[32,32], index: 9, kind: input, shape index: {}]
  %s10 = inlined_call_operand.vmem [shape: f32[1,32], index: 10, kind: input, shape index: {}]
  %s11 = inlined_call_operand.vmem [shape: f32[1,32], index: 11, kind: input, shape index: {}]
  %s12 = inlined_call_operand.vmem [shape: f32[1,32], index: 12, kind: input, shape index: {}]
  %s13 = inlined_call_operand.vmem [shape: bf16[32,128], index: 13, kind: input, shape index: {}]
  %s14 = inlined_call_operand.vmem [shape: f32[1,128], index: 14, kind: input, shape index: {}]
  %s15 = inlined_call_operand.vmem [shape: bf16[128,32], index: 15, kind: input, shape index: {}]
  %s16 = inlined_call_operand.vmem [shape: f32[1,32], index: 16, kind: input, shape index: {}]
  %s17 = inlined_call_operand.hbm [shape: f32[2,8,32], index: 17, kind: output, shape index: {}]
  %s18 = sld [smem:[#allocation0]]
  $region113: #{tpu_custom_call.1} parent=0
    _
  %s20 = ssub.s32 1, %s18
  %s21 = scalar_select 0, %s20, %s18
  $region1: #{tpu_custom_call.1} parent=0
    #allocation2 [shape = 'u8[512]{0}', space=vmem, size = 0x400, scoped, tag = 'input window, operand 4, single buffered']
    #allocation3 [shape = 's32[2]{0}', space=sflag, size = 0x8, scoped, tag = 'scoped memory for tpu_custom_call.1']
    #allocation4 [shape = 's32[2]{0}', space=sflag, size = 0x8, scoped, tag = 'scoped memory for tpu_custom_call.1']
    #allocation5 [shape = 'u8[512]{0}', space=vmem, size = 0x400, scoped, tag = 'input window, operand 6, single buffered']
    #allocation6 [shape = 's32[1]{0}', space=sflag, size = 0x4, scoped, tag = 'scoped memory for tpu_custom_call.1']
    #allocation7 [shape = 'u8[512]{0}', space=vmem, size = 0x400, scoped, tag = 'input window, operand 8, single buffered']
    #allocation8 [shape = 'u8[8192]{0}', space=vmem, size = 0x2000, scoped, tag = 'output window, operand 0']
    %22 = vsyncpa [#allocation3], 0
    %23 = vsyncpa [#allocation6], 0
    %24 = vsyncpa [#allocation4], 0
    %s25 = scalar_lea.sflag [#allocation4], 1
    %26 = vsyncpa %s25, 0
    loop: start=0, step=1, limit=4
    $region2: #{tpu_custom_call.1} parent=1 // loop_pre_header
      _
    $region3: #{tpu_custom_call.1} parent=1 // loop_header
      %s28 = sphi 0, %s32
      %p29 = scmp.ge.s32.totalorder %s28, 4
      %s35 = sphi 0, %s47
      %s36 = sphi 0, %s43
      %s37 = sphi 0, %s35
      %s38 = sphi 0, %s36
      %s39 = sphi 0, %s37
      %s40 = sphi 0, %s38
      %s50 = sphi 0, %s52
      %s53 = sphi 0, %s50
      %s54 = sphi 0, %s53
      %s70 = sphi 0, %s54
      %s74 = sphi 0, %s74
      %s76 = sphi 0, %s74
      %s77 = sphi 0, %s76
      %s91 = sphi 0, %s77
      %s95 = sphi 0, %s95
      %s97 = sphi 0, %s95
      %s98 = sphi 0, %s97
      %s112 = sphi 0, %s98
      %s116 = sphi 0, %s116
      %s118 = sphi 0, %s116
      %s119 = sphi 0, %s118
      %s133 = sphi 0, %s119
      %s137 = sphi 0, %s137
      %s139 = sphi 0, %s137
      %s140 = sphi 0, %s139
      %s154 = sphi 0, %s140
      %s158 = sphi 0, %s158
      %s160 = sphi 0, %s158
      %s161 = sphi 0, %s160
      %s175 = sphi 0, %s161
      %s179 = sphi 0, %s179
      %s181 = sphi 0, %s179
      %s182 = sphi 0, %s181
      %s196 = sphi 0, %s182
      %s200 = sphi 0, %s200
      %s202 = sphi 0, %s200
      %s203 = sphi 0, %s202
      %s217 = sphi 0, %s203
      %s221 = sphi 0, %s221
      %s223 = sphi 0, %s221
      %s224 = sphi 0, %s223
      %s238 = sphi 0, %s224
      %s242 = sphi 0, %s242
      %s244 = sphi 0, %s242
      %s245 = sphi 0, %s244
      %s259 = sphi 0, %s245
      %s263 = sphi 0, %s263
      %s265 = sphi 0, %s263
      %s266 = sphi 0, %s265
      %s280 = sphi 0, %s266
      %s284 = sphi 0, %s284
      %s286 = sphi 0, %s284
      %s287 = sphi 0, %s286
      %s301 = sphi 0, %s287
      %s305 = sphi 0, %s305
      %s307 = sphi 0, %s305
      %s308 = sphi 0, %s307
      %s322 = sphi 0, %s308
      %s326 = sphi 0, %s326
      %s328 = sphi 0, %s326
      %s329 = sphi 0, %s328
      %s343 = sphi 0, %s329
      %s347 = sphi 0, %s347
      %s349 = sphi 0, %s347
      %s350 = sphi 0, %s349
      %s364 = sphi 0, %s350
      %s368 = sphi 0, %s368
      %s370 = sphi 0, %s368
      %s371 = sphi 0, %s370
      %s385 = sphi 0, %s371
      %s389 = sphi 0, %s389
      %s391 = sphi 0, %s389
      %s392 = sphi 0, %s391
      %s406 = sphi 0, %s392
      %s414 = sphi 0, %s416
      %s417 = sphi 0, %s414
      %s418 = sphi 0, %s417
      %s434 = sphi 0, %s418
    $region4: #{tpu_custom_call.1} parent=1 // loop_header_branch
      %31 = sbr.rel (%p29) target = $region8
    $region5: #{tpu_custom_call.1} parent=1 // loop_body
      %s33 = ssub.s32 %s28, 1
      %s34 = ssub.s32 %s28, 2
      %s41 = sadd.s32 1, %s36
      %p42 = scmp.ge.s32.totalorder %s41, 1
      %s43 = scalar_select %p42, 0, %s41
      %s44 = sadd.s32 1, %s35
      %s45 = scalar_select %p42, %s44, %s35
      %p46 = scmp.ge.s32.totalorder %s45, 2
      %s47 = scalar_select %p46, 0, %s45
      %s48 = ssub.s32 %s35, %s47
      %p49 = scmp.eq.s32.totalorder %s48, 0
      %s51 = sadd.s32 %s50, 1
      %s52 = scalar_select %p49, %s50, %s51
      %p55 = pneg %p49
      %p56 = scmp.eq.s32.totalorder %s28, 1
      %p57 = por %p55, %p56
      %p58 = scmp.ne.s32.totalorder %s50, %s53
      %p59 = scmp.eq.s32.totalorder %s28, 0
      %p60 = por %p58, %p59
      %p61 = scmp.ne.s32.totalorder %s50, %s53
      %p62 = scmp.eq.s32.totalorder %s33, 1
      %p63 = por %p61, %p62
      %p64 = scmp.ne.s32.totalorder %s53, %s54
      %p65 = scmp.eq.s32.totalorder %s33, 0
      %p66 = por %p64, %p65
      %p67 = scmp.ne.s32.totalorder %s53, %s54
      %p68 = scmp.eq.s32.totalorder %s34, 1
      %p69 = por %p67, %p68
      %p71 = scmp.ne.s32.totalorder %s54, %s70
      %p72 = scmp.eq.s32.totalorder %s34, 0
      %p73 = por %p71, %p72
      %s75 = sadd.s32 %s74, 1
      %p78 = scmp.eq.s32.totalorder %s28, 1
      %p79 = scmp.ne.s32.totalorder %s74, %s76
      %p80 = scmp.eq.s32.totalorder %s28, 0
      %p81 = por %p79, %p80
      %p82 = scmp.ne.s32.totalorder %s74, %s76
      %p83 = scmp.eq.s32.totalorder %s33, 1
      %p84 = por %p82, %p83
      %p85 = scmp.ne.s32.totalorder %s76, %s77
      %p86 = scmp.eq.s32.totalorder %s33, 0
      %p87 = por %p85, %p86
      %p88 = scmp.ne.s32.totalorder %s76, %s77
      %p89 = scmp.eq.s32.totalorder %s34, 1
      %p90 = por %p88, %p89
      %p92 = scmp.ne.s32.totalorder %s77, %s91
      %p93 = scmp.eq.s32.totalorder %s34, 0
      %p94 = por %p92, %p93
      %s96 = sadd.s32 %s95, 1
      %p99 = scmp.eq.s32.totalorder %s28, 1
      %p100 = scmp.ne.s32.totalorder %s95, %s97
      %p101 = scmp.eq.s32.totalorder %s28, 0
      %p102 = por %p100, %p101
      %p103 = scmp.ne.s32.totalorder %s95, %s97
      %p104 = scmp.eq.s32.totalorder %s33, 1
      %p105 = por %p103, %p104
      %p106 = scmp.ne.s32.totalorder %s97, %s98
      %p107 = scmp.eq.s32.totalorder %s33, 0
      %p108 = por %p106, %p107
      %p109 = scmp.ne.s32.totalorder %s97, %s98
      %p110 = scmp.eq.s32.totalorder %s34, 1
      %p111 = por %p109, %p110
      %p113 = scmp.ne.s32.totalorder %s98, %s112
      %p114 = scmp.eq.s32.totalorder %s34, 0
      %p115 = por %p113, %p114
      %s117 = sadd.s32 %s116, 1
      %p120 = scmp.eq.s32.totalorder %s28, 1
      %p121 = scmp.ne.s32.totalorder %s116, %s118
      %p122 = scmp.eq.s32.totalorder %s28, 0
      %p123 = por %p121, %p122
      %p124 = scmp.ne.s32.totalorder %s116, %s118
      %p125 = scmp.eq.s32.totalorder %s33, 1
      %p126 = por %p124, %p125
      %p127 = scmp.ne.s32.totalorder %s118, %s119
      %p128 = scmp.eq.s32.totalorder %s33, 0
      %p129 = por %p127, %p128
      %p130 = scmp.ne.s32.totalorder %s118, %s119
      %p131 = scmp.eq.s32.totalorder %s34, 1
      %p132 = por %p130, %p131
      %p134 = scmp.ne.s32.totalorder %s119, %s133
      %p135 = scmp.eq.s32.totalorder %s34, 0
      %p136 = por %p134, %p135
      %s138 = sadd.s32 %s137, 1
      %p141 = scmp.eq.s32.totalorder %s28, 1
      %p142 = scmp.ne.s32.totalorder %s137, %s139
      %p143 = scmp.eq.s32.totalorder %s28, 0
      %p144 = por %p142, %p143
      %p145 = scmp.ne.s32.totalorder %s137, %s139
      %p146 = scmp.eq.s32.totalorder %s33, 1
      %p147 = por %p145, %p146
      %p148 = scmp.ne.s32.totalorder %s139, %s140
      %p149 = scmp.eq.s32.totalorder %s33, 0
      %p150 = por %p148, %p149
      %p151 = scmp.ne.s32.totalorder %s139, %s140
      %p152 = scmp.eq.s32.totalorder %s34, 1
      %p153 = por %p151, %p152
      %p155 = scmp.ne.s32.totalorder %s140, %s154
      %p156 = scmp.eq.s32.totalorder %s34, 0
      %p157 = por %p155, %p156
      %s159 = sadd.s32 %s158, 1
      %p162 = scmp.eq.s32.totalorder %s28, 1
      %p163 = scmp.ne.s32.totalorder %s158, %s160
      %p164 = scmp.eq.s32.totalorder %s28, 0
      %p165 = por %p163, %p164
      %p166 = scmp.ne.s32.totalorder %s158, %s160
      %p167 = scmp.eq.s32.totalorder %s33, 1
      %p168 = por %p166, %p167
      %p169 = scmp.ne.s32.totalorder %s160, %s161
      %p170 = scmp.eq.s32.totalorder %s33, 0
      %p171 = por %p169, %p170
      %p172 = scmp.ne.s32.totalorder %s160, %s161
      %p173 = scmp.eq.s32.totalorder %s34, 1
      %p174 = por %p172, %p173
      %p176 = scmp.ne.s32.totalorder %s161, %s175
      %p177 = scmp.eq.s32.totalorder %s34, 0
      %p178 = por %p176, %p177
      %s180 = sadd.s32 %s179, 1
      %p183 = scmp.eq.s32.totalorder %s28, 1
      %p184 = scmp.ne.s32.totalorder %s179, %s181
      %p185 = scmp.eq.s32.totalorder %s28, 0
      %p186 = por %p184, %p185
      %p187 = scmp.ne.s32.totalorder %s179, %s181
      %p188 = scmp.eq.s32.totalorder %s33, 1
      %p189 = por %p187, %p188
      %p190 = scmp.ne.s32.totalorder %s181, %s182
      %p191 = scmp.eq.s32.totalorder %s33, 0
      %p192 = por %p190, %p191
      %p193 = scmp.ne.s32.totalorder %s181, %s182
      %p194 = scmp.eq.s32.totalorder %s34, 1
      %p195 = por %p193, %p194
      %p197 = scmp.ne.s32.totalorder %s182, %s196
      %p198 = scmp.eq.s32.totalorder %s34, 0
      %p199 = por %p197, %p198
      %s201 = sadd.s32 %s200, 1
      %p204 = scmp.eq.s32.totalorder %s28, 1
      %p205 = scmp.ne.s32.totalorder %s200, %s202
      %p206 = scmp.eq.s32.totalorder %s28, 0
      %p207 = por %p205, %p206
      %p208 = scmp.ne.s32.totalorder %s200, %s202
      %p209 = scmp.eq.s32.totalorder %s33, 1
      %p210 = por %p208, %p209
      %p211 = scmp.ne.s32.totalorder %s202, %s203
      %p212 = scmp.eq.s32.totalorder %s33, 0
      %p213 = por %p211, %p212
      %p214 = scmp.ne.s32.totalorder %s202, %s203
      %p215 = scmp.eq.s32.totalorder %s34, 1
      %p216 = por %p214, %p215
      %p218 = scmp.ne.s32.totalorder %s203, %s217
      %p219 = scmp.eq.s32.totalorder %s34, 0
      %p220 = por %p218, %p219
      %s222 = sadd.s32 %s221, 1
      %p225 = scmp.eq.s32.totalorder %s28, 1
      %p226 = scmp.ne.s32.totalorder %s221, %s223
      %p227 = scmp.eq.s32.totalorder %s28, 0
      %p228 = por %p226, %p227
      %p229 = scmp.ne.s32.totalorder %s221, %s223
      %p230 = scmp.eq.s32.totalorder %s33, 1
      %p231 = por %p229, %p230
      %p232 = scmp.ne.s32.totalorder %s223, %s224
      %p233 = scmp.eq.s32.totalorder %s33, 0
      %p234 = por %p232, %p233
      %p235 = scmp.ne.s32.totalorder %s223, %s224
      %p236 = scmp.eq.s32.totalorder %s34, 1
      %p237 = por %p235, %p236
      %p239 = scmp.ne.s32.totalorder %s224, %s238
      %p240 = scmp.eq.s32.totalorder %s34, 0
      %p241 = por %p239, %p240
      %s243 = sadd.s32 %s242, 1
      %p246 = scmp.eq.s32.totalorder %s28, 1
      %p247 = scmp.ne.s32.totalorder %s242, %s244
      %p248 = scmp.eq.s32.totalorder %s28, 0
      %p249 = por %p247, %p248
      %p250 = scmp.ne.s32.totalorder %s242, %s244
      %p251 = scmp.eq.s32.totalorder %s33, 1
      %p252 = por %p250, %p251
      %p253 = scmp.ne.s32.totalorder %s244, %s245
      %p254 = scmp.eq.s32.totalorder %s33, 0
      %p255 = por %p253, %p254
      %p256 = scmp.ne.s32.totalorder %s244, %s245
      %p257 = scmp.eq.s32.totalorder %s34, 1
      %p258 = por %p256, %p257
      %p260 = scmp.ne.s32.totalorder %s245, %s259
      %p261 = scmp.eq.s32.totalorder %s34, 0
      %p262 = por %p260, %p261
      %s264 = sadd.s32 %s263, 1
      %p267 = scmp.eq.s32.totalorder %s28, 1
      %p268 = scmp.ne.s32.totalorder %s263, %s265
      %p269 = scmp.eq.s32.totalorder %s28, 0
      %p270 = por %p268, %p269
      %p271 = scmp.ne.s32.totalorder %s263, %s265
      %p272 = scmp.eq.s32.totalorder %s33, 1
      %p273 = por %p271, %p272
      %p274 = scmp.ne.s32.totalorder %s265, %s266
      %p275 = scmp.eq.s32.totalorder %s33, 0
      %p276 = por %p274, %p275
      %p277 = scmp.ne.s32.totalorder %s265, %s266
      %p278 = scmp.eq.s32.totalorder %s34, 1
      %p279 = por %p277, %p278
      %p281 = scmp.ne.s32.totalorder %s266, %s280
      %p282 = scmp.eq.s32.totalorder %s34, 0
      %p283 = por %p281, %p282
      %s285 = sadd.s32 %s284, 1
      %p288 = scmp.eq.s32.totalorder %s28, 1
      %p289 = scmp.ne.s32.totalorder %s284, %s286
      %p290 = scmp.eq.s32.totalorder %s28, 0
      %p291 = por %p289, %p290
      %p292 = scmp.ne.s32.totalorder %s284, %s286
      %p293 = scmp.eq.s32.totalorder %s33, 1
      %p294 = por %p292, %p293
      %p295 = scmp.ne.s32.totalorder %s286, %s287
      %p296 = scmp.eq.s32.totalorder %s33, 0
      %p297 = por %p295, %p296
      %p298 = scmp.ne.s32.totalorder %s286, %s287
      %p299 = scmp.eq.s32.totalorder %s34, 1
      %p300 = por %p298, %p299
      %p302 = scmp.ne.s32.totalorder %s287, %s301
      %p303 = scmp.eq.s32.totalorder %s34, 0
      %p304 = por %p302, %p303
      %s306 = sadd.s32 %s305, 1
      %p309 = scmp.eq.s32.totalorder %s28, 1
      %p310 = scmp.ne.s32.totalorder %s305, %s307
      %p311 = scmp.eq.s32.totalorder %s28, 0
      %p312 = por %p310, %p311
      %p313 = scmp.ne.s32.totalorder %s305, %s307
      %p314 = scmp.eq.s32.totalorder %s33, 1
      %p315 = por %p313, %p314
      %p316 = scmp.ne.s32.totalorder %s307, %s308
      %p317 = scmp.eq.s32.totalorder %s33, 0
      %p318 = por %p316, %p317
      %p319 = scmp.ne.s32.totalorder %s307, %s308
      %p320 = scmp.eq.s32.totalorder %s34, 1
      %p321 = por %p319, %p320
      %p323 = scmp.ne.s32.totalorder %s308, %s322
      %p324 = scmp.eq.s32.totalorder %s34, 0
      %p325 = por %p323, %p324
      %s327 = sadd.s32 %s326, 1
      %p330 = scmp.eq.s32.totalorder %s28, 1
      %p331 = scmp.ne.s32.totalorder %s326, %s328
      %p332 = scmp.eq.s32.totalorder %s28, 0
      %p333 = por %p331, %p332
      %p334 = scmp.ne.s32.totalorder %s326, %s328
      %p335 = scmp.eq.s32.totalorder %s33, 1
      %p336 = por %p334, %p335
      %p337 = scmp.ne.s32.totalorder %s328, %s329
      %p338 = scmp.eq.s32.totalorder %s33, 0
      %p339 = por %p337, %p338
      %p340 = scmp.ne.s32.totalorder %s328, %s329
      %p341 = scmp.eq.s32.totalorder %s34, 1
      %p342 = por %p340, %p341
      %p344 = scmp.ne.s32.totalorder %s329, %s343
      %p345 = scmp.eq.s32.totalorder %s34, 0
      %p346 = por %p344, %p345
      %s348 = sadd.s32 %s347, 1
      %p351 = scmp.eq.s32.totalorder %s28, 1
      %p352 = scmp.ne.s32.totalorder %s347, %s349
      %p353 = scmp.eq.s32.totalorder %s28, 0
      %p354 = por %p352, %p353
      %p355 = scmp.ne.s32.totalorder %s347, %s349
      %p356 = scmp.eq.s32.totalorder %s33, 1
      %p357 = por %p355, %p356
      %p358 = scmp.ne.s32.totalorder %s349, %s350
      %p359 = scmp.eq.s32.totalorder %s33, 0
      %p360 = por %p358, %p359
      %p361 = scmp.ne.s32.totalorder %s349, %s350
      %p362 = scmp.eq.s32.totalorder %s34, 1
      %p363 = por %p361, %p362
      %p365 = scmp.ne.s32.totalorder %s350, %s364
      %p366 = scmp.eq.s32.totalorder %s34, 0
      %p367 = por %p365, %p366
      %s369 = sadd.s32 %s368, 1
      %p372 = scmp.eq.s32.totalorder %s28, 1
      %p373 = scmp.ne.s32.totalorder %s368, %s370
      %p374 = scmp.eq.s32.totalorder %s28, 0
      %p375 = por %p373, %p374
      %p376 = scmp.ne.s32.totalorder %s368, %s370
      %p377 = scmp.eq.s32.totalorder %s33, 1
      %p378 = por %p376, %p377
      %p379 = scmp.ne.s32.totalorder %s370, %s371
      %p380 = scmp.eq.s32.totalorder %s33, 0
      %p381 = por %p379, %p380
      %p382 = scmp.ne.s32.totalorder %s370, %s371
      %p383 = scmp.eq.s32.totalorder %s34, 1
      %p384 = por %p382, %p383
      %p386 = scmp.ne.s32.totalorder %s371, %s385
      %p387 = scmp.eq.s32.totalorder %s34, 0
      %p388 = por %p386, %p387
      %s390 = sadd.s32 %s389, 1
      %p393 = scmp.eq.s32.totalorder %s28, 1
      %p394 = scmp.ne.s32.totalorder %s389, %s391
      %p395 = scmp.eq.s32.totalorder %s28, 0
      %p396 = por %p394, %p395
      %p397 = scmp.ne.s32.totalorder %s389, %s391
      %p398 = scmp.eq.s32.totalorder %s33, 1
      %p399 = por %p397, %p398
      %p400 = scmp.ne.s32.totalorder %s391, %s392
      %p401 = scmp.eq.s32.totalorder %s33, 0
      %p402 = por %p400, %p401
      %p403 = scmp.ne.s32.totalorder %s391, %s392
      %p404 = scmp.eq.s32.totalorder %s34, 1
      %p405 = por %p403, %p404
      %p407 = scmp.ne.s32.totalorder %s392, %s406
      %p408 = scmp.eq.s32.totalorder %s34, 0
      %p409 = por %p407, %p408
      %s410 = ssub.s32 %s35, %s47
      %s411 = ssub.s32 %s36, %s43
      %s412 = sor.u32 %s410, %s411
      %p413 = scmp.eq.s32.totalorder %s412, 0
      %s415 = sadd.s32 %s414, 1
      %s416 = scalar_select %p413, %s414, %s415
      %p419 = pneg %p413
      %p420 = scmp.eq.s32.totalorder %s28, 1
      %p421 = por %p419, %p420
      %p422 = scmp.ne.s32.totalorder %s414, %s417
      %p423 = scmp.eq.s32.totalorder %s28, 0
      %p424 = por %p422, %p423
      %p425 = scmp.ne.s32.totalorder %s414, %s417
      %p426 = scmp.eq.s32.totalorder %s33, 1
      %p427 = por %p425, %p426
      %p428 = scmp.ne.s32.totalorder %s417, %s418
      %p429 = scmp.eq.s32.totalorder %s33, 0
      %p430 = por %p428, %p429
      %p431 = scmp.ne.s32.totalorder %s417, %s418
      %p432 = scmp.eq.s32.totalorder %s34, 1
      %p433 = por %p431, %p432
      %p435 = scmp.ne.s32.totalorder %s418, %s434
      %p436 = scmp.eq.s32.totalorder %s34, 0
      %p437 = por %p435, %p436
      %p438 = scmp.le.s32.totalorder 1, %s28
      %p439 = scmp.lt.s32.totalorder %s28, 3
      %p440 = pnand %p438, %p439
      %p441 = pneg %p440
      // Predicated region
      $region9: #{tpu_custom_call.1} parent=5 // pred_check
        _
      $region10: #{tpu_custom_call.1} parent=5 // pred_check_branch
        %443 = sbr.rel (%p440) target = $region12
      $region11: #{tpu_custom_call.1} parent=5 // pred_region
        %s444 = ssub.s32 %s28, 1
        // Predicated region
        $region13: #{tpu_custom_call.1} parent=11 // pred_check
          %p445 = pneg %p87
        $region14: #{tpu_custom_call.1} parent=11 // pred_check_branch
          %447 = sbr.rel (%p445) target = $region16
        $region15: #{tpu_custom_call.1} parent=11 // pred_region
          _
        $region16: #{tpu_custom_call.1} parent=11 // pred_fallthru
          _
        // Predicated region
        $region17: #{tpu_custom_call.1} parent=11 // pred_check
          %p448 = pneg %p108
        $region18: #{tpu_custom_call.1} parent=11 // pred_check_branch
          %450 = sbr.rel (%p448) target = $region20
        $region19: #{tpu_custom_call.1} parent=11 // pred_region
          _
        $region20: #{tpu_custom_call.1} parent=11 // pred_fallthru
          _
        // Predicated region
        $region21: #{tpu_custom_call.1} parent=11 // pred_check
          %p451 = pneg %p129
        $region22: #{tpu_custom_call.1} parent=11 // pred_check_branch
          %453 = sbr.rel (%p451) target = $region24
        $region23: #{tpu_custom_call.1} parent=11 // pred_region
          _
        $region24: #{tpu_custom_call.1} parent=11 // pred_fallthru
          _
        // Predicated region
        $region25: #{tpu_custom_call.1} parent=11 // pred_check
          %p454 = pneg %p150
        $region26: #{tpu_custom_call.1} parent=11 // pred_check_branch
          %456 = sbr.rel (%p454) target = $region28
        $region27: #{tpu_custom_call.1} parent=11 // pred_region
          %s458 = ssub.s32 16, 16
          %459 = vsyncadd [#allocation3], %s458
          %s461 = sshll.u32 [#allocation2], 4
          %s462 = int_to_ptr.vmem [resolvable:$true] %s461
          %464 = dma.hbm_to_vmem [thread:$0]  %s4, 16, %s462, [#allocation3]
        $region28: #{tpu_custom_call.1} parent=11 // pred_fallthru
          _
        // Predicated region
        $region29: #{tpu_custom_call.1} parent=11 // pred_check
          %p465 = pneg %p171
        $region30: #{tpu_custom_call.1} parent=11 // pred_check_branch
          %467 = sbr.rel (%p465) target = $region32
        $region31: #{tpu_custom_call.1} parent=11 // pred_region
          _
        $region32: #{tpu_custom_call.1} parent=11 // pred_fallthru
          _
        // Predicated region
        $region33: #{tpu_custom_call.1} parent=11 // pred_check
          %p468 = pneg %p192
        $region34: #{tpu_custom_call.1} parent=11 // pred_check_branch
          %470 = sbr.rel (%p468) target = $region36
        $region35: #{tpu_custom_call.1} parent=11 // pred_region
          %s472 = ssub.s32 16, 16
          %473 = vsyncadd [#allocation6], %s472
          %s475 = sshll.u32 [#allocation5], 4
          %s476 = int_to_ptr.vmem [resolvable:$true] %s475
          %478 = dma.hbm_to_vmem [thread:$0]  %s6, 16, %s476, [#allocation6]
        $region36: #{tpu_custom_call.1} parent=11 // pred_fallthru
          _
        // Predicated region
        $region37: #{tpu_custom_call.1} parent=11 // pred_check
          %p479 = pneg %p213
        $region38: #{tpu_custom_call.1} parent=11 // pred_check_branch
          %481 = sbr.rel (%p479) target = $region40
        $region39: #{tpu_custom_call.1} parent=11 // pred_region
          _
        $region40: #{tpu_custom_call.1} parent=11 // pred_fallthru
          _
        // Predicated region
        $region41: #{tpu_custom_call.1} parent=11 // pred_check
          %p482 = pneg %p234
        $region42: #{tpu_custom_call.1} parent=11 // pred_check_branch
          %484 = sbr.rel (%p482) target = $region44
        $region43: #{tpu_custom_call.1} parent=11 // pred_region
          %s486 = ssub.s32 16, 16
          %487 = vsyncadd [#allocation6], %s486
          %s489 = sshll.u32 [#allocation7], 4
          %s490 = int_to_ptr.vmem [resolvable:$true] %s489
          %492 = dma.hbm_to_vmem [thread:$0]  %s8, 16, %s490, [#allocation6]
        $region44: #{tpu_custom_call.1} parent=11 // pred_fallthru
          _
        // Predicated region
        $region45: #{tpu_custom_call.1} parent=11 // pred_check
          %p493 = pneg %p255
        $region46: #{tpu_custom_call.1} parent=11 // pred_check_branch
          %495 = sbr.rel (%p493) target = $region48
        $region47: #{tpu_custom_call.1} parent=11 // pred_region
          _
        $region48: #{tpu_custom_call.1} parent=11 // pred_fallthru
          _
        // Predicated region
        $region49: #{tpu_custom_call.1} parent=11 // pred_check
          %p496 = pneg %p276
        $region50: #{tpu_custom_call.1} parent=11 // pred_check_branch
          %498 = sbr.rel (%p496) target = $region52
        $region51: #{tpu_custom_call.1} parent=11 // pred_region
          _
        $region52: #{tpu_custom_call.1} parent=11 // pred_fallthru
          _
        // Predicated region
        $region53: #{tpu_custom_call.1} parent=11 // pred_check
          %p499 = pneg %p297
        $region54: #{tpu_custom_call.1} parent=11 // pred_check_branch
          %501 = sbr.rel (%p499) target = $region56
        $region55: #{tpu_custom_call.1} parent=11 // pred_region
          _
        $region56: #{tpu_custom_call.1} parent=11 // pred_fallthru
          _
        // Predicated region
        $region57: #{tpu_custom_call.1} parent=11 // pred_check
          %p502 = pneg %p318
        $region58: #{tpu_custom_call.1} parent=11 // pred_check_branch
          %504 = sbr.rel (%p502) target = $region60
        $region59: #{tpu_custom_call.1} parent=11 // pred_region
          _
        $region60: #{tpu_custom_call.1} parent=11 // pred_fallthru
          _
        // Predicated region
        $region61: #{tpu_custom_call.1} parent=11 // pred_check
          %p505 = pneg %p339
        $region62: #{tpu_custom_call.1} parent=11 // pred_check_branch
          %507 = sbr.rel (%p505) target = $region64
        $region63: #{tpu_custom_call.1} parent=11 // pred_region
          _
        $region64: #{tpu_custom_call.1} parent=11 // pred_fallthru
          _
        // Predicated region
        $region65: #{tpu_custom_call.1} parent=11 // pred_check
          %p508 = pneg %p360
        $region66: #{tpu_custom_call.1} parent=11 // pred_check_branch
          %510 = sbr.rel (%p508) target = $region68
        $region67: #{tpu_custom_call.1} parent=11 // pred_region
          _
        $region68: #{tpu_custom_call.1} parent=11 // pred_fallthru
          _
        // Predicated region
        $region69: #{tpu_custom_call.1} parent=11 // pred_check
          %p511 = pneg %p381
        $region70: #{tpu_custom_call.1} parent=11 // pred_check_branch
          %513 = sbr.rel (%p511) target = $region72
        $region71: #{tpu_custom_call.1} parent=11 // pred_region
          _
        $region72: #{tpu_custom_call.1} parent=11 // pred_fallthru
          _
        // Predicated region
        $region73: #{tpu_custom_call.1} parent=11 // pred_check
          %p514 = pneg %p402
        $region74: #{tpu_custom_call.1} parent=11 // pred_check_branch
          %516 = sbr.rel (%p514) target = $region76
        $region75: #{tpu_custom_call.1} parent=11 // pred_region
          _
        $region76: #{tpu_custom_call.1} parent=11 // pred_fallthru
          _
      $region12: #{tpu_custom_call.1} parent=5 // pred_fallthru
        _
      %p517 = scmp.lt.s32.totalorder %s28, 2
      // Predicated region
      $region77: #{tpu_custom_call.1} parent=5 // pred_check
        %p518 = pneg %p517
      $region78: #{tpu_custom_call.1} parent=5 // pred_check_branch
        %520 = sbr.rel (%p518) target = $region80
      $region79: #{tpu_custom_call.1} parent=5 // pred_region
        // Predicated region
        $region81: #{tpu_custom_call.1} parent=79 // pred_check
          %p521 = pneg %p60
        $region82: #{tpu_custom_call.1} parent=79 // pred_check_branch
          %523 = sbr.rel (%p521) target = $region84
        $region83: #{tpu_custom_call.1} parent=79 // pred_region
          %p524 = scmp.lt.s32.totalorder %s35, 1
          %s525 = scalar_select %p524, %s35, 1
          %s526 = smul.addr %s525, 8
          %s527 = scalar_lea.vmem %s0, %s526
        $region84: #{tpu_custom_call.1} parent=79 // pred_fallthru
          _
      $region80: #{tpu_custom_call.1} parent=5 // pred_fallthru
        _
      %p528 = scmp.le.s32.totalorder 1, %s28
      %p529 = scmp.lt.s32.totalorder %s28, 3
      %p530 = pnand %p528, %p529
      %p531 = pneg %p530
      // Predicated region
      $region85: #{tpu_custom_call.1} parent=5 // pred_check
        _
      $region86: #{tpu_custom_call.1} parent=5 // pred_check_branch
        %533 = sbr.rel (%p530) target = $region88
      $region87: #{tpu_custom_call.1} parent=5 // pred_region
        %s534 = ssub.s32 %s28, 1
        // Predicated region
        $region89: #{tpu_custom_call.1} parent=87 // pred_check
          %p535 = pneg %p150
        $region90: #{tpu_custom_call.1} parent=87 // pred_check_branch
          %537 = sbr.rel (%p535) target = $region92
        $region91: #{tpu_custom_call.1} parent=87 // pred_region
          %538 = dma.done [#allocation3], 16
        $region92: #{tpu_custom_call.1} parent=87 // pred_fallthru
          _
        // Predicated region
        $region93: #{tpu_custom_call.1} parent=87 // pred_check
          %p539 = pneg %p192
        $region94: #{tpu_custom_call.1} parent=87 // pred_check_branch
          %541 = sbr.rel (%p539) target = $region96
        $region95: #{tpu_custom_call.1} parent=87 // pred_region
          %542 = dma.done [#allocation6], 16
        $region96: #{tpu_custom_call.1} parent=87 // pred_fallthru
          _
        // Predicated region
        $region97: #{tpu_custom_call.1} parent=87 // pred_check
          %p543 = pneg %p234
        $region98: #{tpu_custom_call.1} parent=87 // pred_check_branch
          %545 = sbr.rel (%p543) target = $region100
        $region99: #{tpu_custom_call.1} parent=87 // pred_region
          %546 = dma.done [#allocation6], 16
        $region100: #{tpu_custom_call.1} parent=87 // pred_fallthru
          _
        %p547 = scmp.lt.s32.totalorder %s37, 1
        %s548 = scalar_select %p547, %s37, 1
        %s549 = smul.addr %s548, 8
        %s550 = scalar_lea.vmem %s0, %s549
        %p551 = pneg %p66
        %p552 = pneg %p63
        %p553 = pneg %p87
        %p554 = pneg %p84
        %p555 = pneg %p108
        %p556 = pneg %p105
        %p557 = pneg %p129
        %p558 = pneg %p126
        %p559 = pneg %p150
        %p560 = pneg %p147
        %p561 = pneg %p171
        %p562 = pneg %p168
        %p563 = pneg %p192
        %p564 = pneg %p189
        %p565 = pneg %p213
        %p566 = pneg %p210
        %p567 = pneg %p234
        %p568 = pneg %p231
        %p569 = pneg %p255
        %p570 = pneg %p252
        %p571 = pneg %p276
        %p572 = pneg %p273
        %p573 = pneg %p297
        %p574 = pneg %p294
        %p575 = pneg %p318
        %p576 = pneg %p315
        %p577 = pneg %p339
        %p578 = pneg %p336
        %p579 = pneg %p360
        %p580 = pneg %p357
        %p581 = pneg %p381
        %p582 = pneg %p378
        %p583 = pneg %p402
        %p584 = pneg %p399
        %p585 = pneg %p430
        %p586 = pneg %p427
        %s587 = sand.u32 %s417, 1
        %s588 = scalar_lea.sflag [#allocation4], %s587
        %s589 = sand.u32 %s417, 1
        %s590 = smul.addr %s589, 8
        %s591 = scalar_lea.vmem [#allocation8], %s590
        %p592 = scmp.lt.s32.totalorder %s37, 1
        %s593 = scalar_select %p592, %s37, 1
        %s594 = smul.addr %s593, 8
        %s595 = scalar_lea.vmem %s0, %s594
        %s597 = smul.u32 %s38, 8
        %v598 = vld [vmem:[%s595] sm:$0xff]
        %v599 = vld [vmem:[%s1] sm:$0x1]
        %v600 = vld [vmem:[%s2] sm:$0x1]
        %vm601 = vcmask 261120
        %v602 = vsel %vm601, %v598, 0.0
        %603 = vadd.xlane.f32.xlu0 %v602
        %v604 = vpop.xlane.xlu0 %603
        %v605 = vrcp.pop 32.0
        %v606 = vmul.f32 %v604, %v605
        %v607 = vsub.f32 %v598, %v606
        %v608 = vmul.f32 %v607, %v607
        %v609 = vsel %vm601, %v608, 0.0
        %610 = vadd.xlane.f32.xlu0 %v609
        %v611 = vpop.xlane.xlu0 %610
        %v612 = vmul.f32 %v611, %v605
        %v613 = vadd.f32 %v612, 1e-05
        %v614 = vrsqrt.pop %v613
        %v615 = vmul.f32 %v607, %v614
        %v617 = vlaneseq
        %v618 = vshrl.u32 %v617, 7
        %v619 = vsub.s32 0, %v618
        %v620 = vrot.slane %v599, %v619
        %v622 = vmul.f32 %v615, %v620
        %v624 = vlaneseq
        %v625 = vshrl.u32 %v624, 7
        %v626 = vsub.s32 0, %v625
        %v627 = vrot.slane %v600, %v626
        %v629 = vadd.f32 %v622, %v627
        %v630 = vpack.c.bf16 %v629, %v629
        %v631 = vld [vmem:[%s5] sm:$0xf]
        %v632 = vld [vmem:[%s5 + $0x4] sm:$0xf]
        %v633 = vld [vmem:[%s5 + $0x8] sm:$0xf]
        %v634 = vld [vmem:[%s5 + $0xc] sm:$0xf]
        %v635 = vld [vmem:[#allocation5] sm:$0x1]
        %v637 = vlaneseq
        %v638 = vshrl.u32 %v637, 7
        %v639 = vsub.s32 0, %v638
        %v640 = vrot.slane %v635, %v639
        %v646 = vunpack.c.l.b16 %v631
        %v647 = vunpack.c.l.b16 %v632
        %v648 = vunpack.c.l.b16 %v633
        %v649 = vunpack.c.l.b16 %v634
        %v650 = vpack.c.b16 %v647, %v646
        %v651 = vpack.c.b16 %v649, %v648
        %v655 = vsel %vm601, %v630, 0
        %657 = vmatprep.subr.bf16.mxu0 0
        %658 = vmatpush1.bf16.msra.mxu0 %v650
        %659 = vmatprep.subr.bf16.mxu0 0
        %660 = vmatpush1.bf16.msra.mxu0 %v651
        %661 = vmatprep.subr.bf16.mxu0 0
        %662 = vmatpush1.bf16.msra.mxu0 0
        %663 = vmatprep.subr.bf16.mxu0 0
        %664 = vmatpush1.bf16.msra.mxu0 0
        %665 = vmatprep.subr.bf16.mxu0 0
        %666 = vmatpush1.bf16.msra.mxu0 0
        %667 = vmatprep.subr.bf16.mxu0 0
        %668 = vmatpush1.bf16.msra.mxu0 0
        %669 = vmatprep.subr.bf16.mxu0 0
        %670 = vmatpush1.bf16.msra.mxu0 0
        %671 = vmatprep.subr.bf16.mxu0 0
        %672 = vmatpush1.bf16.msra.mxu0 0
        %673 = vmatprep.subr.bf16.mxu0 0
        %674 = vmatpush1.bf16.msra.mxu0 0
        %675 = vmatprep.subr.bf16.mxu0 0
        %676 = vmatpush1.bf16.msra.mxu0 0
        %677 = vmatprep.subr.bf16.mxu0 0
        %678 = vmatpush1.bf16.msra.mxu0 0
        %679 = vmatprep.subr.bf16.mxu0 0
        %680 = vmatpush1.bf16.msra.mxu0 0
        %681 = vmatprep.subr.bf16.mxu0 0
        %682 = vmatpush1.bf16.msra.mxu0 0
        %683 = vmatprep.subr.bf16.mxu0 0
        %684 = vmatpush1.bf16.msra.mxu0 0
        %685 = vmatprep.subr.bf16.mxu0 0
        %686 = vmatpush1.bf16.msra.mxu0 0
        %687 = vmatprep.subr.bf16.mxu0 0
        %688 = vmatpush1.bf16.msra.mxu0 0
        %689 = vmatprep.mubr.bf16.mxu0 0
        %690 = vmatmul.mubr.bf16.gmra.mrb[0].mxu0 %v655
        %v691 = vpop.f32.mrb[0].mxu0
        %v692 = vadd.f32 %v640, %v691
        %v693 = vpop.f32.mrb[0].mxu0
        %v694 = vpop.f32.mrb[0].mxu0
        %v695 = vpop.f32.mrb[0].mxu0
        %696 = vdwg.mxu0
        %v697 = vpack.c.bf16 %v692, %v692
        %v698 = vld [vmem:[%s7] sm:$0xf]
        %v699 = vld [vmem:[%s7 + $0x4] sm:$0xf]
        %v700 = vld [vmem:[%s7 + $0x8] sm:$0xf]
        %v701 = vld [vmem:[%s7 + $0xc] sm:$0xf]
        %v702 = vld [vmem:[#allocation7] sm:$0x1]
        %v704 = vlaneseq
        %v705 = vshrl.u32 %v704, 7
        %v706 = vsub.s32 0, %v705
        %v707 = vrot.slane %v702, %v706
        %v713 = vunpack.c.l.b16 %v698
        %v714 = vunpack.c.l.b16 %v699
        %v715 = vunpack.c.l.b16 %v700
        %v716 = vunpack.c.l.b16 %v701
        %v717 = vpack.c.b16 %v714, %v713
        %v718 = vpack.c.b16 %v716, %v715
        %721 = vmatprep.subr.bf16.mxu0 0
        %722 = vmatpush1.bf16.msra.mxu0 %v717
        %723 = vmatprep.subr.bf16.mxu0 0
        %724 = vmatpush1.bf16.msra.mxu0 %v718
        %725 = vmatprep.subr.bf16.mxu0 0
        %726 = vmatpush1.bf16.msra.mxu0 0
        %727 = vmatprep.subr.bf16.mxu0 0
        %728 = vmatpush1.bf16.msra.mxu0 0
        %729 = vmatprep.subr.bf16.mxu0 0
        %730 = vmatpush1.bf16.msra.mxu0 0
        %731 = vmatprep.subr.bf16.mxu0 0
        %732 = vmatpush1.bf16.msra.mxu0 0
        %733 = vmatprep.subr.bf16.mxu0 0
        %734 = vmatpush1.bf16.msra.mxu0 0
        %735 = vmatprep.subr.bf16.mxu0 0
        %736 = vmatpush1.bf16.msra.mxu0 0
        %737 = vmatprep.subr.bf16.mxu0 0
        %738 = vmatpush1.bf16.msra.mxu0 0
        %739 = vmatprep.subr.bf16.mxu0 0
        %740 = vmatpush1.bf16.msra.mxu0 0
        %741 = vmatprep.subr.bf16.mxu0 0
        %742 = vmatpush1.bf16.msra.mxu0 0
        %743 = vmatprep.subr.bf16.mxu0 0
        %744 = vmatpush1.bf16.msra.mxu0 0
        %745 = vmatprep.subr.bf16.mxu0 0
        %746 = vmatpush1.bf16.msra.mxu0 0
        %747 = vmatprep.subr.bf16.mxu0 0
        %748 = vmatpush1.bf16.msra.mxu0 0
        %749 = vmatprep.subr.bf16.mxu0 0
        %750 = vmatpush1.bf16.msra.mxu0 0
        %751 = vmatprep.subr.bf16.mxu0 0
        %752 = vmatpush1.bf16.msra.mxu0 0
        %753 = vmatprep.mubr.bf16.mxu0 0
        %754 = vmatmul.mubr.bf16.gmra.mrb[0].mxu0 %v655
        %v755 = vpop.f32.mrb[0].mxu0
        %v756 = vadd.f32 %v707, %v755
        %v757 = vpop.f32.mrb[0].mxu0
        %v758 = vpop.f32.mrb[0].mxu0
        %v759 = vpop.f32.mrb[0].mxu0
        %760 = vdwg.mxu0
        %v761 = vpack.c.bf16 %v756, %v756
        %s762 = scalar_lea.vmem %s595, %s597
        %v763 = vld [vmem:[%s762] sm:$0xff]
        %v764 = vsel %vm601, %v763, 0.0
        %765 = vadd.xlane.f32.xlu0 %v764
        %v766 = vpop.xlane.xlu0 %765
        %v767 = vmul.f32 %v766, %v605
        %v768 = vsub.f32 %v763, %v767
        %v769 = vmul.f32 %v768, %v768
        %v770 = vsel %vm601, %v769, 0.0
        %771 = vadd.xlane.f32.xlu0 %v770
        %v772 = vpop.xlane.xlu0 %771
        %v773 = vmul.f32 %v772, %v605
        %v774 = vadd.f32 %v773, 1e-05
        %v775 = vrsqrt.pop %v774
        %v776 = vmul.f32 %v768, %v775
        %v777 = vmul.f32 %v776, %v620
        %v778 = vadd.f32 %v777, %v627
        %v779 = vpack.c.bf16 %v778, %v778
        %v780 = vld [vmem:[%s3] sm:$0xf]
        %v781 = vld [vmem:[%s3 + $0x4] sm:$0xf]
        %v782 = vld [vmem:[%s3 + $0x8] sm:$0xf]
        %v783 = vld [vmem:[%s3 + $0xc] sm:$0xf]
        %v784 = vld [vmem:[#allocation2] sm:$0x1]
        %v786 = vlaneseq
        %v787 = vshrl.u32 %v786, 7
        %v788 = vsub.s32 0, %v787
        %v789 = vrot.slane %v784, %v788
        %v795 = vunpack.c.l.b16 %v780
        %v796 = vunpack.c.l.b16 %v781
        %v797 = vunpack.c.l.b16 %v782
        %v798 = vunpack.c.l.b16 %v783
        %v799 = vpack.c.b16 %v796, %v795
        %v800 = vpack.c.b16 %v798, %v797
        %v804 = vsel %vm601, %v779, 0
        %806 = vmatprep.subr.bf16.mxu0 0
        %807 = vmatpush1.bf16.msra.mxu0 %v799
        %808 = vmatprep.subr.bf16.mxu0 0
        %809 = vmatpush1.bf16.msra.mxu0 %v800
        %810 = vmatprep.subr.bf16.mxu0 0
        %811 = vmatpush1.bf16.msra.mxu0 0
        %812 = vmatprep.subr.bf16.mxu0 0
        %813 = vmatpush1.bf16.msra.mxu0 0
        %814 = vmatprep.subr.bf16.mxu0 0
        %815 = vmatpush1.bf16.msra.mxu0 0
        %816 = vmatprep.subr.bf16.mxu0 0
        %817 = vmatpush1.bf16.msra.mxu0 0
        %818 = vmatprep.subr.bf16.mxu0 0
        %819 = vmatpush1.bf16.msra.mxu0 0
        %820 = vmatprep.subr.bf16.mxu0 0
        %821 = vmatpush1.bf16.msra.mxu0 0
        %822 = vmatprep.subr.bf16.mxu0 0
        %823 = vmatpush1.bf16.msra.mxu0 0
        %824 = vmatprep.subr.bf16.mxu0 0
        %825 = vmatpush1.bf16.msra.mxu0 0
        %826 = vmatprep.subr.bf16.mxu0 0
        %827 = vmatpush1.bf16.msra.mxu0 0
        %828 = vmatprep.subr.bf16.mxu0 0
        %829 = vmatpush1.bf16.msra.mxu0 0
        %830 = vmatprep.subr.bf16.mxu0 0
        %831 = vmatpush1.bf16.msra.mxu0 0
        %832 = vmatprep.subr.bf16.mxu0 0
        %833 = vmatpush1.bf16.msra.mxu0 0
        %834 = vmatprep.subr.bf16.mxu0 0
        %835 = vmatpush1.bf16.msra.mxu0 0
        %836 = vmatprep.subr.bf16.mxu0 0
        %837 = vmatpush1.bf16.msra.mxu0 0
        %838 = vmatprep.mubr.bf16.mxu0 0
        %839 = vmatmul.mubr.bf16.gmra.mrb[0].mxu0 %v804
        %v840 = vpop.f32.mrb[0].mxu0
        %v841 = vadd.f32 %v789, %v840
        %v842 = vpop.f32.mrb[0].mxu0
        %v843 = vpop.f32.mrb[0].mxu0
        %v844 = vpop.f32.mrb[0].mxu0
        %845 = vdwg.mxu0
        %v846 = vpack.c.bf16 %v841, %v841
        %vm847 = vcmask 64512
        %v849 = vsel %vm847, %v846, 0
        %v852 = vsel %vm847, %v697, 0
        %854 = vmatprep.subr.bf16.mxu0 0
        %855 = vmatpush1.bf16.xpose.msra.mxu0 %v852
        %856 = vmatprep.subr.bf16.mxu0 0
        %857 = vmatpush1.bf16.xpose.msra.mxu0 0
        %858 = vmatprep.subr.bf16.mxu0 0
        %859 = vmatpush1.bf16.xpose.msra.mxu0 0
        %860 = vmatprep.subr.bf16.mxu0 0
        %861 = vmatpush1.bf16.xpose.msra.mxu0 0
        %862 = vmatprep.subr.bf16.mxu0 0
        %863 = vmatpush1.bf16.xpose.msra.mxu0 0
        %864 = vmatprep.subr.bf16.mxu0 0
        %865 = vmatpush1.bf16.xpose.msra.mxu0 0
        %866 = vmatprep.subr.bf16.mxu0 0
        %867 = vmatpush1.bf16.xpose.msra.mxu0 0
        %868 = vmatprep.subr.bf16.mxu0 0
        %869 = vmatpush1.bf16.xpose.msra.mxu0 0
        %870 = vmatprep.subr.bf16.mxu0 0
        %871 = vmatpush1.bf16.xpose.msra.mxu0 0
        %872 = vmatprep.subr.bf16.mxu0 0
        %873 = vmatpush1.bf16.xpose.msra.mxu0 0
        %874 = vmatprep.subr.bf16.mxu0 0
        %875 = vmatpush1.bf16.xpose.msra.mxu0 0
        %876 = vmatprep.subr.bf16.mxu0 0
        %877 = vmatpush1.bf16.xpose.msra.mxu0 0
        %878 = vmatprep.subr.bf16.mxu0 0
        %879 = vmatpush1.bf16.xpose.msra.mxu0 0
        %880 = vmatprep.subr.bf16.mxu0 0
        %881 = vmatpush1.bf16.xpose.msra.mxu0 0
        %882 = vmatprep.subr.bf16.mxu0 0
        %883 = vmatpush1.bf16.xpose.msra.mxu0 0
        %884 = vmatprep.subr.bf16.mxu0 0
        %885 = vmatpush1.bf16.xpose.msra.mxu0 0
        %886 = vmatprep.mubr.bf16.mxu0 0
        %887 = vmatmul.mubr.bf16.gmra.mrb[0].mxu0 %v849
        %v888 = vpop.f32.mrb[0].mxu0
        %v889 = vadd.f32 0.0, %v888
        %v890 = vpop.f32.mrb[0].mxu0
        %v891 = vpop.f32.mrb[0].mxu0
        %v892 = vpop.f32.mrb[0].mxu0
        %893 = vdwg.mxu0
        %v894 = vsel %vm847, %v889, -inf
        %895 = vmax.xlane.f32.xlu0 %v894
        %v896 = vpop.xlane.xlu0 %895
        %v897 = vsub.f32 %v889, %v896
        %v898 = vmul.f32 %v897, 1.442695
        %v899 = vpow.pop %v898
        %v900 = vsel %vm847, %v899, 0.0
        %901 = vadd.xlane.f32.xlu0 %v900
        %v902 = vpop.xlane.xlu0 %901
        %v903 = vrcp.pop %v902
        %v904 = vmul.f32 %v899, %v903
        %v905 = vpack.c.bf16 %v904, %v904
        %v907 = vsel %vm847, %v905, 0
        %vm909 = vcmask 1043456
        %v911 = vsel %vm909, %v761, 0
        %913 = vmatprep.subr.bf16.mxu0 0
        %914 = vmatpush1.bf16.msra.mxu0 %v911
        %915 = vmatprep.subr.bf16.mxu0 0
        %916 = vmatpush1.bf16.msra.mxu0 0
        %917 = vmatprep.subr.bf16.mxu0 0
        %918 = vmatpush1.bf16.msra.mxu0 0
        %919 = vmatprep.subr.bf16.mxu0 0
        %920 = vmatpush1.bf16.msra.mxu0 0
        %921 = vmatprep.subr.bf16.mxu0 0
        %922 = vmatpush1.bf16.msra.mxu0 0
        %923 = vmatprep.subr.bf16.mxu0 0
        %924 = vmatpush1.bf16.msra.mxu0 0
        %925 = vmatprep.subr.bf16.mxu0 0
        %926 = vmatpush1.bf16.msra.mxu0 0
        %927 = vmatprep.subr.bf16.mxu0 0
        %928 = vmatpush1.bf16.msra.mxu0 0
        %929 = vmatprep.subr.bf16.mxu0 0
        %930 = vmatpush1.bf16.msra.mxu0 0
        %931 = vmatprep.subr.bf16.mxu0 0
        %932 = vmatpush1.bf16.msra.mxu0 0
        %933 = vmatprep.subr.bf16.mxu0 0
        %934 = vmatpush1.bf16.msra.mxu0 0
        %935 = vmatprep.subr.bf16.mxu0 0
        %936 = vmatpush1.bf16.msra.mxu0 0
        %937 = vmatprep.subr.bf16.mxu0 0
        %938 = vmatpush1.bf16.msra.mxu0 0
        %939 = vmatprep.subr.bf16.mxu0 0
        %940 = vmatpush1.bf16.msra.mxu0 0
        %941 = vmatprep.subr.bf16.mxu0 0
        %942 = vmatpush1.bf16.msra.mxu0 0
        %943 = vmatprep.subr.bf16.mxu0 0
        %944 = vmatpush1.bf16.msra.mxu0 0
        %945 = vmatprep.mubr.bf16.mxu0 0
        %946 = vmatmul.mubr.bf16.gmra.mrb[0].mxu0 %v907
        %v947 = vpop.f32.mrb[0].mxu0
        %v948 = vadd.f32 0.0, %v947
        %v949 = vpop.f32.mrb[0].mxu0
        %v950 = vpop.f32.mrb[0].mxu0
        %v951 = vpop.f32.mrb[0].mxu0
        %952 = vdwg.mxu0
        %v953 = vpack.c.bf16 %v948, %v948
        %v954 = vld [vmem:[%s9] sm:$0xf]
        %956 = vrot.lane.b32.xlu0 %v846, 120
        %v957 = vpop.permute.xlu0 %956
        %959 = vrot.lane.b32.xlu0 %v697, 120
        %v960 = vpop.permute.xlu0 %959
        %v962 = vsel %vm847, %v957, 0
        %v965 = vsel %vm847, %v960, 0
        %967 = vmatprep.subr.bf16.mxu0 0
        %968 = vmatpush1.bf16.xpose.msra.mxu0 %v965
        %969 = vmatprep.subr.bf16.mxu0 0
        %970 = vmatpush1.bf16.xpose.msra.mxu0 0
        %971 = vmatprep.subr.bf16.mxu0 0
        %972 = vmatpush1.bf16.xpose.msra.mxu0 0
        %973 = vmatprep.subr.bf16.mxu0 0
        %974 = vmatpush1.bf16.xpose.msra.mxu0 0
        %975 = vmatprep.subr.bf16.mxu0 0
        %976 = vmatpush1.bf16.xpose.msra.mxu0 0
        %977 = vmatprep.subr.bf16.mxu0 0
        %978 = vmatpush1.bf16.xpose.msra.mxu0 0
        %979 = vmatprep.subr.bf16.mxu0 0
        %980 = vmatpush1.bf16.xpose.msra.mxu0 0
        %981 = vmatprep.subr.bf16.mxu0 0
        %982 = vmatpush1.bf16.xpose.msra.mxu0 0
        %983 = vmatprep.subr.bf16.mxu0 0
        %984 = vmatpush1.bf16.xpose.msra.mxu0 0
        %985 = vmatprep.subr.bf16.mxu0 0
        %986 = vmatpush1.bf16.xpose.msra.mxu0 0
        %987 = vmatprep.subr.bf16.mxu0 0
        %988 = vmatpush1.bf16.xpose.msra.mxu0 0
        %989 = vmatprep.subr.bf16.mxu0 0
        %990 = vmatpush1.bf16.xpose.msra.mxu0 0
        %991 = vmatprep.subr.bf16.mxu0 0
        %992 = vmatpush1.bf16.xpose.msra.mxu0 0
        %993 = vmatprep.subr.bf16.mxu0 0
        %994 = vmatpush1.bf16.xpose.msra.mxu0 0
        %995 = vmatprep.subr.bf16.mxu0 0
        %996 = vmatpush1.bf16.xpose.msra.mxu0 0
        %997 = vmatprep.subr.bf16.mxu0 0
        %998 = vmatpush1.bf16.xpose.msra.mxu0 0
        %999 = vmatprep.mubr.bf16.mxu0 0
        %1000 = vmatmul.mubr.bf16.gmra.mrb[0].mxu0 %v962
        %v1001 = vpop.f32.mrb[0].mxu0
        %v1002 = vadd.f32 0.0, %v1001
        %v1003 = vpop.f32.mrb[0].mxu0
        %v1004 = vpop.f32.mrb[0].mxu0
        %v1005 = vpop.f32.mrb[0].mxu0
        %1006 = vdwg.mxu0
        %v1007 = vsel %vm847, %v1002, -inf
        %1008 = vmax.xlane.f32.xlu0 %v1007
        %v1009 = vpop.xlane.xlu0 %1008
        %v1010 = vsub.f32 %v1002, %v1009
        %v1011 = vmul.f32 %v1010, 1.442695
        %v1012 = vpow.pop %v1011
        %v1013 = vsel %vm847, %v1012, 0.0
        %1014 = vadd.xlane.f32.xlu0 %v1013
        %v1015 = vpop.xlane.xlu0 %1014
        %v1016 = vrcp.pop %v1015
        %v1017 = vmul.f32 %v1012, %v1016
        %v1018 = vpack.c.bf16 %v1017, %v1017
        %1020 = vrot.lane.b32.xlu0 %v761, 120
        %v1021 = vpop.permute.xlu0 %1020
        %v1023 = vsel %vm847, %v1018, 0
        %v1026 = vsel %vm909, %v1021, 0
        %1028 = vmatprep.subr.bf16.mxu0 0
        %1029 = vmatpush1.bf16.msra.mxu0 %v1026
        %1030 = vmatprep.subr.bf16.mxu0 0
        %1031 = vmatpush1.bf16.msra.mxu0 0
        %1032 = vmatprep.subr.bf16.mxu0 0
        %1033 = vmatpush1.bf16.msra.mxu0 0
        %1034 = vmatprep.subr.bf16.mxu0 0
        %1035 = vmatpush1.bf16.msra.mxu0 0
        %1036 = vmatprep.subr.bf16.mxu0 0
        %1037 = vmatpush1.bf16.msra.mxu0 0
        %1038 = vmatprep.subr.bf16.mxu0 0
        %1039 = vmatpush1.bf16.msra.mxu0 0
        %1040 = vmatprep.subr.bf16.mxu0 0
        %1041 = vmatpush1.bf16.msra.mxu0 0
        %1042 = vmatprep.subr.bf16.mxu0 0
        %1043 = vmatpush1.bf16.msra.mxu0 0
        %1044 = vmatprep.subr.bf16.mxu0 0
        %1045 = vmatpush1.bf16.msra.mxu0 0
        %1046 = vmatprep.subr.bf16.mxu0 0
        %1047 = vmatpush1.bf16.msra.mxu0 0
        %1048 = vmatprep.subr.bf16.mxu0 0
        %1049 = vmatpush1.bf16.msra.mxu0 0
        %1050 = vmatprep.subr.bf16.mxu0 0
        %1051 = vmatpush1.bf16.msra.mxu0 0
        %1052 = vmatprep.subr.bf16.mxu0 0
        %1053 = vmatpush1.bf16.msra.mxu0 0
        %1054 = vmatprep.subr.bf16.mxu0 0
        %1055 = vmatpush1.bf16.msra.mxu0 0
        %1056 = vmatprep.subr.bf16.mxu0 0
        %1057 = vmatpush1.bf16.msra.mxu0 0
        %1058 = vmatprep.subr.bf16.mxu0 0
        %1059 = vmatpush1.bf16.msra.mxu0 0
        %1060 = vmatprep.mubr.bf16.mxu0 0
        %1061 = vmatmul.mubr.bf16.gmra.mrb[0].mxu0 %v1023
        %v1062 = vpop.f32.mrb[0].mxu0
        %v1063 = vadd.f32 0.0, %v1062
        %v1064 = vpop.f32.mrb[0].mxu0
        %v1065 = vpop.f32.mrb[0].mxu0
        %v1066 = vpop.f32.mrb[0].mxu0
        %1067 = vdwg.mxu0
        %v1068 = vpack.c.bf16 %v1063, %v1063
        %v1069 = vld [vmem:[%s9 + $0x4] sm:$0xf]
        %v1071 = vsel %vm847, %v1068, 0
        %v1074 = vsel %vm909, %v1069, 0
        %1076 = vmatprep.subr.bf16.mxu0 0
        %1077 = vmatpush1.bf16.msra.mxu0 %v1074
        %1078 = vmatprep.subr.bf16.mxu0 0
        %1079 = vmatpush1.bf16.msra.mxu0 0
        %1080 = vmatprep.subr.bf16.mxu0 0
        %1081 = vmatpush1.bf16.msra.mxu0 0
        %1082 = vmatprep.subr.bf16.mxu0 0
        %1083 = vmatpush1.bf16.msra.mxu0 0
        %1084 = vmatprep.subr.bf16.mxu0 0
        %1085 = vmatpush1.bf16.msra.mxu0 0
        %1086 = vmatprep.subr.bf16.mxu0 0
        %1087 = vmatpush1.bf16.msra.mxu0 0
        %1088 = vmatprep.subr.bf16.mxu0 0
        %1089 = vmatpush1.bf16.msra.mxu0 0
        %1090 = vmatprep.subr.bf16.mxu0 0
        %1091 = vmatpush1.bf16.msra.mxu0 0
        %1092 = vmatprep.subr.bf16.mxu0 0
        %1093 = vmatpush1.bf16.msra.mxu0 0
        %1094 = vmatprep.subr.bf16.mxu0 0
        %1095 = vmatpush1.bf16.msra.mxu0 0
        %1096 = vmatprep.subr.bf16.mxu0 0
        %1097 = vmatpush1.bf16.msra.mxu0 0
        %1098 = vmatprep.subr.bf16.mxu0 0
        %1099 = vmatpush1.bf16.msra.mxu0 0
        %1100 = vmatprep.subr.bf16.mxu0 0
        %1101 = vmatpush1.bf16.msra.mxu0 0
        %1102 = vmatprep.subr.bf16.mxu0 0
        %1103 = vmatpush1.bf16.msra.mxu0 0
        %1104 = vmatprep.subr.bf16.mxu0 0
        %1105 = vmatpush1.bf16.msra.mxu0 0
        %1106 = vmatprep.subr.bf16.mxu0 0
        %1107 = vmatpush1.bf16.msra.mxu0 0
        %1108 = vmatprep.mubr.bf16.mxu0 0
        %1109 = vmatmul.mubr.bf16.gmra.mrb[0].mxu0 %v1071
        %v1110 = vpop.f32.mrb[0].mxu0
        %v1111 = vadd.f32 0.0, %v1110
        %v1112 = vpop.f32.mrb[0].mxu0
        %v1113 = vpop.f32.mrb[0].mxu0
        %v1114 = vpop.f32.mrb[0].mxu0
        %1115 = vdwg.mxu0
        %v1117 = vsel %vm847, %v953, 0
        %v1120 = vsel %vm909, %v954, 0
        %1122 = vmatprep.subr.bf16.mxu0 0
        %1123 = vmatpush1.bf16.msra.mxu0 %v1120
        %1124 = vmatprep.subr.bf16.mxu0 0
        %1125 = vmatpush1.bf16.msra.mxu0 0
        %1126 = vmatprep.subr.bf16.mxu0 0
        %1127 = vmatpush1.bf16.msra.mxu0 0
        %1128 = vmatprep.subr.bf16.mxu0 0
        %1129 = vmatpush1.bf16.msra.mxu0 0
        %1130 = vmatprep.subr.bf16.mxu0 0
        %1131 = vmatpush1.bf16.msra.mxu0 0
        %1132 = vmatprep.subr.bf16.mxu0 0
        %1133 = vmatpush1.bf16.msra.mxu0 0
        %1134 = vmatprep.subr.bf16.mxu0 0
        %1135 = vmatpush1.bf16.msra.mxu0 0
        %1136 = vmatprep.subr.bf16.mxu0 0
        %1137 = vmatpush1.bf16.msra.mxu0 0
        %1138 = vmatprep.subr.bf16.mxu0 0
        %1139 = vmatpush1.bf16.msra.mxu0 0
        %1140 = vmatprep.subr.bf16.mxu0 0
        %1141 = vmatpush1.bf16.msra.mxu0 0
        %1142 = vmatprep.subr.bf16.mxu0 0
        %1143 = vmatpush1.bf16.msra.mxu0 0
        %1144 = vmatprep.subr.bf16.mxu0 0
        %1145 = vmatpush1.bf16.msra.mxu0 0
        %1146 = vmatprep.subr.bf16.mxu0 0
        %1147 = vmatpush1.bf16.msra.mxu0 0
        %1148 = vmatprep.subr.bf16.mxu0 0
        %1149 = vmatpush1.bf16.msra.mxu0 0
        %1150 = vmatprep.subr.bf16.mxu0 0
        %1151 = vmatpush1.bf16.msra.mxu0 0
        %1152 = vmatprep.subr.bf16.mxu0 0
        %1153 = vmatpush1.bf16.msra.mxu0 0
        %1154 = vmatprep.mubr.bf16.mxu0 0
        %1155 = vmatmul.mubr.bf16.gmra.mrb[0].mxu0 %v1117
        %v1156 = vpop.f32.mrb[0].mxu0
        %v1157 = vadd.f32 %v1111, %v1156
        %v1158 = vpop.f32.mrb[0].mxu0
        %v1159 = vpop.f32.mrb[0].mxu0
        %v1160 = vpop.f32.mrb[0].mxu0
        %1161 = vdwg.mxu0
        %1162 = vrot.lane.b32.xlu0 %v846, 112
        %v1163 = vpop.permute.xlu0 %1162
        %1164 = vrot.lane.b32.xlu0 %v697, 112
        %v1165 = vpop.permute.xlu0 %1164
        %v1167 = vsel %vm847, %v1163, 0
        %v1170 = vsel %vm847, %v1165, 0
        %1172 = vmatprep.subr.bf16.mxu0 0
        %1173 = vmatpush1.bf16.xpose.msra.mxu0 %v1170
        %1174 = vmatprep.subr.bf16.mxu0 0
        %1175 = vmatpush1.bf16.xpose.msra.mxu0 0
        %1176 = vmatprep.subr.bf16.mxu0 0
        %1177 = vmatpush1.bf16.xpose.msra.mxu0 0
        %1178 = vmatprep.subr.bf16.mxu0 0
        %1179 = vmatpush1.bf16.xpose.msra.mxu0 0
        %1180 = vmatprep.subr.bf16.mxu0 0
        %1181 = vmatpush1.bf16.xpose.msra.mxu0 0
        %1182 = vmatprep.subr.bf16.mxu0 0
        %1183 = vmatpush1.bf16.xpose.msra.mxu0 0
        %1184 = vmatprep.subr.bf16.mxu0 0
        %1185 = vmatpush1.bf16.xpose.msra.mxu0 0
        %1186 = vmatprep.subr.bf16.mxu0 0
        %1187 = vmatpush1.bf16.xpose.msra.mxu0 0
        %1188 = vmatprep.subr.bf16.mxu0 0
        %1189 = vmatpush1.bf16.xpose.msra.mxu0 0
        %1190 = vmatprep.subr.bf16.mxu0 0
        %1191 = vmatpush1.bf16.xpose.msra.mxu0 0
        %1192 = vmatprep.subr.bf16.mxu0 0
        %1193 = vmatpush1.bf16.xpose.msra.mxu0 0
        %1194 = vmatprep.subr.bf16.mxu0 0
        %1195 = vmatpush1.bf16.xpose.msra.mxu0 0
        %1196 = vmatprep.subr.bf16.mxu0 0
        %1197 = vmatpush1.bf16.xpose.msra.mxu0 0
        %1198 = vmatprep.subr.bf16.mxu0 0
        %1199 = vmatpush1.bf16.xpose.msra.mxu0 0
        %1200 = vmatprep.subr.bf16.mxu0 0
        %1201 = vmatpush1.bf16.xpose.msra.mxu0 0
        %1202 = vmatprep.subr.bf16.mxu0 0
        %1203 = vmatpush1.bf16.xpose.msra.mxu0 0
        %1204 = vmatprep.mubr.bf16.mxu0 0
        %1205 = vmatmul.mubr.bf16.gmra.mrb[0].mxu0 %v1167
        %v1206 = vpop.f32.mrb[0].mxu0
        %v1207 = vadd.f32 0.0, %v1206
        %v1208 = vpop.f32.mrb[0].mxu0
        %v1209 = vpop.f32.mrb[0].mxu0
        %v1210 = vpop.f32.mrb[0].mxu0
        %1211 = vdwg.mxu0
        %v1212 = vsel %vm847, %v1207, -inf
        %1213 = vmax.xlane.f32.xlu0 %v1212
        %v1214 = vpop.xlane.xlu0 %1213
        %v1215 = vsub.f32 %v1207, %v1214
        %v1216 = vmul.f32 %v1215, 1.442695
        %v1217 = vpow.pop %v1216
        %v1218 = vsel %vm847, %v1217, 0.0
        %1219 = vadd.xlane.f32.xlu0 %v1218
        %v1220 = vpop.xlane.xlu0 %1219
        %v1221 = vrcp.pop %v1220
        %v1222 = vmul.f32 %v1217, %v1221
        %v1223 = vpack.c.bf16 %v1222, %v1222
        %1224 = vrot.lane.b32.xlu0 %v761, 112
        %v1225 = vpop.permute.xlu0 %1224
        %v1227 = vsel %vm847, %v1223, 0
        %v1230 = vsel %vm909, %v1225, 0
        %1232 = vmatprep.subr.bf16.mxu0 0
        %1233 = vmatpush1.bf16.msra.mxu0 %v1230
        %1234 = vmatprep.subr.bf16.mxu0 0
        %1235 = vmatpush1.bf16.msra.mxu0 0
        %1236 = vmatprep.subr.bf16.mxu0 0
        %1237 = vmatpush1.bf16.msra.mxu0 0
        %1238 = vmatprep.subr.bf16.mxu0 0
        %1239 = vmatpush1.bf16.msra.mxu0 0
        %1240 = vmatprep.subr.bf16.mxu0 0
        %1241 = vmatpush1.bf16.msra.mxu0 0
        %1242 = vmatprep.subr.bf16.mxu0 0
        %1243 = vmatpush1.bf16.msra.mxu0 0
        %1244 = vmatprep.subr.bf16.mxu0 0
        %1245 = vmatpush1.bf16.msra.mxu0 0
        %1246 = vmatprep.subr.bf16.mxu0 0
        %1247 = vmatpush1.bf16.msra.mxu0 0
        %1248 = vmatprep.subr.bf16.mxu0 0
        %1249 = vmatpush1.bf16.msra.mxu0 0
        %1250 = vmatprep.subr.bf16.mxu0 0
        %1251 = vmatpush1.bf16.msra.mxu0 0
        %1252 = vmatprep.subr.bf16.mxu0 0
        %1253 = vmatpush1.bf16.msra.mxu0 0
        %1254 = vmatprep.subr.bf16.mxu0 0
        %1255 = vmatpush1.bf16.msra.mxu0 0
        %1256 = vmatprep.subr.bf16.mxu0 0
        %1257 = vmatpush1.bf16.msra.mxu0 0
        %1258 = vmatprep.subr.bf16.mxu0 0
        %1259 = vmatpush1.bf16.msra.mxu0 0
        %1260 = vmatprep.subr.bf16.mxu0 0
        %1261 = vmatpush1.bf16.msra.mxu0 0
        %1262 = vmatprep.subr.bf16.mxu0 0
        %1263 = vmatpush1.bf16.msra.mxu0 0
        %1264 = vmatprep.mubr.bf16.mxu0 0
        %1265 = vmatmul.mubr.bf16.gmra.mrb[0].mxu0 %v1227
        %v1266 = vpop.f32.mrb[0].mxu0
        %v1267 = vadd.f32 0.0, %v1266
        %v1268 = vpop.f32.mrb[0].mxu0
        %v1269 = vpop.f32.mrb[0].mxu0
        %v1270 = vpop.f32.mrb[0].mxu0
        %1271 = vdwg.mxu0
        %v1272 = vpack.c.bf16 %v1267, %v1267
        %v1273 = vld [vmem:[%s9 + $0x8] sm:$0xf]
        %v1275 = vsel %vm847, %v1272, 0
        %v1278 = vsel %vm909, %v1273, 0
        %1280 = vmatprep.subr.bf16.mxu0 0
        %1281 = vmatpush1.bf16.msra.mxu0 %v1278
        %1282 = vmatprep.subr.bf16.mxu0 0
        %1283 = vmatpush1.bf16.msra.mxu0 0
        %1284 = vmatprep.subr.bf16.mxu0 0
        %1285 = vmatpush1.bf16.msra.mxu0 0
        %1286 = vmatprep.subr.bf16.mxu0 0
        %1287 = vmatpush1.bf16.msra.mxu0 0
        %1288 = vmatprep.subr.bf16.mxu0 0
        %1289 = vmatpush1.bf16.msra.mxu0 0
        %1290 = vmatprep.subr.bf16.mxu0 0
        %1291 = vmatpush1.bf16.msra.mxu0 0
        %1292 = vmatprep.subr.bf16.mxu0 0
        %1293 = vmatpush1.bf16.msra.mxu0 0
        %1294 = vmatprep.subr.bf16.mxu0 0
        %1295 = vmatpush1.bf16.msra.mxu0 0
        %1296 = vmatprep.subr.bf16.mxu0 0
        %1297 = vmatpush1.bf16.msra.mxu0 0
        %1298 = vmatprep.subr.bf16.mxu0 0
        %1299 = vmatpush1.bf16.msra.mxu0 0
        %1300 = vmatprep.subr.bf16.mxu0 0
        %1301 = vmatpush1.bf16.msra.mxu0 0
        %1302 = vmatprep.subr.bf16.mxu0 0
        %1303 = vmatpush1.bf16.msra.mxu0 0
        %1304 = vmatprep.subr.bf16.mxu0 0
        %1305 = vmatpush1.bf16.msra.mxu0 0
        %1306 = vmatprep.subr.bf16.mxu0 0
        %1307 = vmatpush1.bf16.msra.mxu0 0
        %1308 = vmatprep.subr.bf16.mxu0 0
        %1309 = vmatpush1.bf16.msra.mxu0 0
        %1310 = vmatprep.subr.bf16.mxu0 0
        %1311 = vmatpush1.bf16.msra.mxu0 0
        %1312 = vmatprep.mubr.bf16.mxu0 0
        %1313 = vmatmul.mubr.bf16.gmra.mrb[0].mxu0 %v1275
        %v1314 = vpop.f32.mrb[0].mxu0
        %v1315 = vadd.f32 0.0, %v1314
        %v1316 = vpop.f32.mrb[0].mxu0
        %v1317 = vpop.f32.mrb[0].mxu0
        %v1318 = vpop.f32.mrb[0].mxu0
        %1319 = vdwg.mxu0
        %v1320 = vadd.f32 %v1157, %v1315
        %1321 = vrot.lane.b32.xlu0 %v846, 104
        %v1322 = vpop.permute.xlu0 %1321
        %1323 = vrot.lane.b32.xlu0 %v697, 104
        %v1324 = vpop.permute.xlu0 %1323
        %v1326 = vsel %vm847, %v1322, 0
        %v1329 = vsel %vm847, %v1324, 0
        %1331 = vmatprep.subr.bf16.mxu0 0
        %1332 = vmatpush1.bf16.xpose.msra.mxu0 %v1329
        %1333 = vmatprep.subr.bf16.mxu0 0
        %1334 = vmatpush1.bf16.xpose.msra.mxu0 0
        %1335 = vmatprep.subr.bf16.mxu0 0
        %1336 = vmatpush1.bf16.xpose.msra.mxu0 0
        %1337 = vmatprep.subr.bf16.mxu0 0
        %1338 = vmatpush1.bf16.xpose.msra.mxu0 0
        %1339 = vmatprep.subr.bf16.mxu0 0
        %1340 = vmatpush1.bf16.xpose.msra.mxu0 0
        %1341 = vmatprep.subr.bf16.mxu0 0
        %1342 = vmatpush1.bf16.xpose.msra.mxu0 0
        %1343 = vmatprep.subr.bf16.mxu0 0
        %1344 = vmatpush1.bf16.xpose.msra.mxu0 0
        %1345 = vmatprep.subr.bf16.mxu0 0
        %1346 = vmatpush1.bf16.xpose.msra.mxu0 0
        %1347 = vmatprep.subr.bf16.mxu0 0
        %1348 = vmatpush1.bf16.xpose.msra.mxu0 0
        %1349 = vmatprep.subr.bf16.mxu0 0
        %1350 = vmatpush1.bf16.xpose.msra.mxu0 0
        %1351 = vmatprep.subr.bf16.mxu0 0
        %1352 = vmatpush1.bf16.xpose.msra.mxu0 0
        %1353 = vmatprep.subr.bf16.mxu0 0
        %1354 = vmatpush1.bf16.xpose.msra.mxu0 0
        %1355 = vmatprep.subr.bf16.mxu0 0
        %1356 = vmatpush1.bf16.xpose.msra.mxu0 0
        %1357 = vmatprep.subr.bf16.mxu0 0
        %1358 = vmatpush1.bf16.xpose.msra.mxu0 0
        %1359 = vmatprep.subr.bf16.mxu0 0
        %1360 = vmatpush1.bf16.xpose.msra.mxu0 0
        %1361 = vmatprep.subr.bf16.mxu0 0
        %1362 = vmatpush1.bf16.xpose.msra.mxu0 0
        %1363 = vmatprep.mubr.bf16.mxu0 0
        %1364 = vmatmul.mubr.bf16.gmra.mrb[0].mxu0 %v1326
        %v1365 = vpop.f32.mrb[0].mxu0
        %v1366 = vadd.f32 0.0, %v1365
        %v1367 = vpop.f32.mrb[0].mxu0
        %v1368 = vpop.f32.mrb[0].mxu0
        %v1369 = vpop.f32.mrb[0].mxu0
        %1370 = vdwg.mxu0
        %v1371 = vsel %vm847, %v1366, -inf
        %1372 = vmax.xlane.f32.xlu0 %v1371
        %v1373 = vpop.xlane.xlu0 %1372
        %v1374 = vsub.f32 %v1366, %v1373
        %v1375 = vmul.f32 %v1374, 1.442695
        %v1376 = vpow.pop %v1375
        %v1377 = vsel %vm847, %v1376, 0.0
        %1378 = vadd.xlane.f32.xlu0 %v1377
        %v1379 = vpop.xlane.xlu0 %1378
        %v1380 = vrcp.pop %v1379
        %v1381 = vmul.f32 %v1376, %v1380
        %v1382 = vpack.c.bf16 %v1381, %v1381
        %1383 = vrot.lane.b32.xlu0 %v761, 104
        %v1384 = vpop.permute.xlu0 %1383
        %v1386 = vsel %vm847, %v1382, 0
        %v1389 = vsel %vm909, %v1384, 0
        %1391 = vmatprep.subr.bf16.mxu0 0
        %1392 = vmatpush1.bf16.msra.mxu0 %v1389
        %1393 = vmatprep.subr.bf16.mxu0 0
        %1394 = vmatpush1.bf16.msra.mxu0 0
        %1395 = vmatprep.subr.bf16.mxu0 0
        %1396 = vmatpush1.bf16.msra.mxu0 0
        %1397 = vmatprep.subr.bf16.mxu0 0
        %1398 = vmatpush1.bf16.msra.mxu0 0
        %1399 = vmatprep.subr.bf16.mxu0 0
        %1400 = vmatpush1.bf16.msra.mxu0 0
        %1401 = vmatprep.subr.bf16.mxu0 0
        %1402 = vmatpush1.bf16.msra.mxu0 0
        %1403 = vmatprep.subr.bf16.mxu0 0
        %1404 = vmatpush1.bf16.msra.mxu0 0
        %1405 = vmatprep.subr.bf16.mxu0 0
        %1406 = vmatpush1.bf16.msra.mxu0 0
        %1407 = vmatprep.subr.bf16.mxu0 0
        %1408 = vmatpush1.bf16.msra.mxu0 0
        %1409 = vmatprep.subr.bf16.mxu0 0
        %1410 = vmatpush1.bf16.msra.mxu0 0
        %1411 = vmatprep.subr.bf16.mxu0 0
        %1412 = vmatpush1.bf16.msra.mxu0 0
        %1413 = vmatprep.subr.bf16.mxu0 0
        %1414 = vmatpush1.bf16.msra.mxu0 0
        %1415 = vmatprep.subr.bf16.mxu0 0
        %1416 = vmatpush1.bf16.msra.mxu0 0
        %1417 = vmatprep.subr.bf16.mxu0 0
        %1418 = vmatpush1.bf16.msra.mxu0 0
        %1419 = vmatprep.subr.bf16.mxu0 0
        %1420 = vmatpush1.bf16.msra.mxu0 0
        %1421 = vmatprep.subr.bf16.mxu0 0
        %1422 = vmatpush1.bf16.msra.mxu0 0
        %1423 = vmatprep.mubr.bf16.mxu0 0
        %1424 = vmatmul.mubr.bf16.gmra.mrb[0].mxu0 %v1386
        %v1425 = vpop.f32.mrb[0].mxu0
        %v1426 = vadd.f32 0.0, %v1425
        %v1427 = vpop.f32.mrb[0].mxu0
        %v1428 = vpop.f32.mrb[0].mxu0
        %v1429 = vpop.f32.mrb[0].mxu0
        %1430 = vdwg.mxu0
        %v1431 = vpack.c.bf16 %v1426, %v1426
        %v1432 = vld [vmem:[%s9 + $0xc] sm:$0xf]
        %v1434 = vsel %vm847, %v1431, 0
        %v1437 = vsel %vm909, %v1432, 0
        %1439 = vmatprep.subr.bf16.mxu0 0
        %1440 = vmatpush1.bf16.msra.mxu0 %v1437
        %1441 = vmatprep.subr.bf16.mxu0 0
        %1442 = vmatpush1.bf16.msra.mxu0 0
        %1443 = vmatprep.subr.bf16.mxu0 0
        %1444 = vmatpush1.bf16.msra.mxu0 0
        %1445 = vmatprep.subr.bf16.mxu0 0
        %1446 = vmatpush1.bf16.msra.mxu0 0
        %1447 = vmatprep.subr.bf16.mxu0 0
        %1448 = vmatpush1.bf16.msra.mxu0 0
        %1449 = vmatprep.subr.bf16.mxu0 0
        %1450 = vmatpush1.bf16.msra.mxu0 0
        %1451 = vmatprep.subr.bf16.mxu0 0
        %1452 = vmatpush1.bf16.msra.mxu0 0
        %1453 = vmatprep.subr.bf16.mxu0 0
        %1454 = vmatpush1.bf16.msra.mxu0 0
        %1455 = vmatprep.subr.bf16.mxu0 0
        %1456 = vmatpush1.bf16.msra.mxu0 0
        %1457 = vmatprep.subr.bf16.mxu0 0
        %1458 = vmatpush1.bf16.msra.mxu0 0
        %1459 = vmatprep.subr.bf16.mxu0 0
        %1460 = vmatpush1.bf16.msra.mxu0 0
        %1461 = vmatprep.subr.bf16.mxu0 0
        %1462 = vmatpush1.bf16.msra.mxu0 0
        %1463 = vmatprep.subr.bf16.mxu0 0
        %1464 = vmatpush1.bf16.msra.mxu0 0
        %1465 = vmatprep.subr.bf16.mxu0 0
        %1466 = vmatpush1.bf16.msra.mxu0 0
        %1467 = vmatprep.subr.bf16.mxu0 0
        %1468 = vmatpush1.bf16.msra.mxu0 0
        %1469 = vmatprep.subr.bf16.mxu0 0
        %1470 = vmatpush1.bf16.msra.mxu0 0
        %1471 = vmatprep.mubr.bf16.mxu0 0
        %1472 = vmatmul.mubr.bf16.gmra.mrb[0].mxu0 %v1434
        %v1473 = vpop.f32.mrb[0].mxu0
        %v1474 = vadd.f32 0.0, %v1473
        %v1475 = vpop.f32.mrb[0].mxu0
        %v1476 = vpop.f32.mrb[0].mxu0
        %v1477 = vpop.f32.mrb[0].mxu0
        %1478 = vdwg.mxu0
        %v1479 = vadd.f32 %v1320, %v1474
        %v1480 = vadd.f32 %v763, %v1479
        %v1481 = vld [vmem:[%s10] sm:$0x1]
        %v1483 = vlaneseq
        %v1484 = vshrl.u32 %v1483, 7
        %v1485 = vsub.s32 0, %v1484
        %v1486 = vrot.slane %v1481, %v1485
        %v1488 = vadd.f32 %v1480, %v1486
        %v1489 = vld [vmem:[%s11] sm:$0x1]
        %v1490 = vld [vmem:[%s12] sm:$0x1]
        %v1491 = vsel %vm601, %v1488, 0.0
        %1492 = vadd.xlane.f32.xlu0 %v1491
        %v1493 = vpop.xlane.xlu0 %1492
        %v1494 = vmul.f32 %v1493, %v605
        %v1495 = vsub.f32 %v1488, %v1494
        %v1496 = vmul.f32 %v1495, %v1495
        %v1497 = vsel %vm601, %v1496, 0.0
        %1498 = vadd.xlane.f32.xlu0 %v1497
        %v1499 = vpop.xlane.xlu0 %1498
        %v1500 = vmul.f32 %v1499, %v605
        %v1501 = vadd.f32 %v1500, 1e-05
        %v1502 = vrsqrt.pop %v1501
        %v1503 = vmul.f32 %v1495, %v1502
        %v1505 = vlaneseq
        %v1506 = vshrl.u32 %v1505, 7
        %v1507 = vsub.s32 0, %v1506
        %v1508 = vrot.slane %v1489, %v1507
        %v1510 = vmul.f32 %v1503, %v1508
        %v1512 = vlaneseq
        %v1513 = vshrl.u32 %v1512, 7
        %v1514 = vsub.s32 0, %v1513
        %v1515 = vrot.slane %v1490, %v1514
        %v1517 = vadd.f32 %v1510, %v1515
        %v1518 = vpack.c.bf16 %v1517, %v1517
        %v1519 = vld [vmem:[%s13] sm:$0xf]
        %v1520 = vld [vmem:[%s13 + $0x4] sm:$0xf]
        %v1521 = vld [vmem:[%s13 + $0x8] sm:$0xf]
        %v1522 = vld [vmem:[%s13 + $0xc] sm:$0xf]
        %v1523 = vld [vmem:[%s14] sm:$0x1]
        %v1525 = vlaneseq
        %v1526 = vshrl.u32 %v1525, 7
        %v1527 = vsub.s32 0, %v1526
        %v1528 = vrot.slane %v1523, %v1527
        %v1534 = vunpack.c.l.b16 %v1519
        %v1535 = vunpack.c.l.b16 %v1520
        %v1536 = vunpack.c.l.b16 %v1521
        %v1537 = vunpack.c.l.b16 %v1522
        %v1538 = vpack.c.b16 %v1535, %v1534
        %v1539 = vpack.c.b16 %v1537, %v1536
        %v1543 = vsel %vm601, %v1518, 0
        %1545 = vmatprep.subr.bf16.mxu0 0
        %1546 = vmatpush1.bf16.msra.mxu0 %v1538
        %1547 = vmatprep.subr.bf16.mxu0 0
        %1548 = vmatpush1.bf16.msra.mxu0 %v1539
        %1549 = vmatprep.subr.bf16.mxu0 0
        %1550 = vmatpush1.bf16.msra.mxu0 0
        %1551 = vmatprep.subr.bf16.mxu0 0
        %1552 = vmatpush1.bf16.msra.mxu0 0
        %1553 = vmatprep.subr.bf16.mxu0 0
        %1554 = vmatpush1.bf16.msra.mxu0 0
        %1555 = vmatprep.subr.bf16.mxu0 0
        %1556 = vmatpush1.bf16.msra.mxu0 0
        %1557 = vmatprep.subr.bf16.mxu0 0
        %1558 = vmatpush1.bf16.msra.mxu0 0
        %1559 = vmatprep.subr.bf16.mxu0 0
        %1560 = vmatpush1.bf16.msra.mxu0 0
        %1561 = vmatprep.subr.bf16.mxu0 0
        %1562 = vmatpush1.bf16.msra.mxu0 0
        %1563 = vmatprep.subr.bf16.mxu0 0
        %1564 = vmatpush1.bf16.msra.mxu0 0
        %1565 = vmatprep.subr.bf16.mxu0 0
        %1566 = vmatpush1.bf16.msra.mxu0 0
        %1567 = vmatprep.subr.bf16.mxu0 0
        %1568 = vmatpush1.bf16.msra.mxu0 0
        %1569 = vmatprep.subr.bf16.mxu0 0
        %1570 = vmatpush1.bf16.msra.mxu0 0
        %1571 = vmatprep.subr.bf16.mxu0 0
        %1572 = vmatpush1.bf16.msra.mxu0 0
        %1573 = vmatprep.subr.bf16.mxu0 0
        %1574 = vmatpush1.bf16.msra.mxu0 0
        %1575 = vmatprep.subr.bf16.mxu0 0
        %1576 = vmatpush1.bf16.msra.mxu0 0
        %1577 = vmatprep.mubr.bf16.mxu0 0
        %1578 = vmatmul.mubr.bf16.gmra.mrb[0].mxu0 %v1543
        %v1579 = vpop.f32.mrb[0].mxu0
        %v1580 = vadd.f32 %v1528, %v1579
        %v1581 = vpop.f32.mrb[0].mxu0
        %v1582 = vpop.f32.mrb[0].mxu0
        %v1583 = vpop.f32.mrb[0].mxu0
        %1584 = vdwg.mxu0
        %v1585 = vmul.f32 %v1580, 0.5
        %v1586 = vmul.f32 %v1580, 0.70710677
        %v1587 = verf.f32.pop %v1586
        %v1588 = vadd.f32 %v1587, 1.0
        %v1589 = vmul.f32 %v1585, %v1588
        %v1590 = vpack.c.bf16 %v1589, %v1589
        %v1591 = vld [vmem:[%s15] sm:$0xf]
        %v1592 = vld [vmem:[%s15 + $0x4] sm:$0xf]
        %v1593 = vld [vmem:[%s15 + $0x8] sm:$0xf]
        %v1594 = vld [vmem:[%s15 + $0xc] sm:$0xf]
        %v1595 = vld [vmem:[%s15 + $0x10] sm:$0xf]
        %v1596 = vld [vmem:[%s15 + $0x14] sm:$0xf]
        %v1597 = vld [vmem:[%s15 + $0x18] sm:$0xf]
        %v1598 = vld [vmem:[%s15 + $0x1c] sm:$0xf]
        %v1599 = vld [vmem:[%s15 + $0x20] sm:$0xf]
        %v1600 = vld [vmem:[%s15 + $0x24] sm:$0xf]
        %v1601 = vld [vmem:[%s15 + $0x28] sm:$0xf]
        %v1602 = vld [vmem:[%s15 + $0x2c] sm:$0xf]
        %v1603 = vld [vmem:[%s15 + $0x30] sm:$0xf]
        %v1604 = vld [vmem:[%s15 + $0x34] sm:$0xf]
        %v1605 = vld [vmem:[%s15 + $0x38] sm:$0xf]
        %v1606 = vld [vmem:[%s15 + $0x3c] sm:$0xf]
        %v1607 = vld [vmem:[%s16] sm:$0x1]
        %v1609 = vlaneseq
        %v1610 = vshrl.u32 %v1609, 7
        %v1611 = vsub.s32 0, %v1610
        %v1612 = vrot.slane %v1607, %v1611
        %v1630 = vunpack.c.l.b16 %v1591
        %v1631 = vunpack.c.l.b16 %v1592
        %v1632 = vunpack.c.l.b16 %v1593
        %v1633 = vunpack.c.l.b16 %v1594
        %v1634 = vunpack.c.l.b16 %v1595
        %v1635 = vunpack.c.l.b16 %v1596
        %v1636 = vunpack.c.l.b16 %v1597
        %v1637 = vunpack.c.l.b16 %v1598
        %v1638 = vunpack.c.l.b16 %v1599
        %v1639 = vunpack.c.l.b16 %v1600
        %v1640 = vunpack.c.l.b16 %v1601
        %v1641 = vunpack.c.l.b16 %v1602
        %v1642 = vunpack.c.l.b16 %v1603
        %v1643 = vunpack.c.l.b16 %v1604
        %v1644 = vunpack.c.l.b16 %v1605
        %v1645 = vunpack.c.l.b16 %v1606
        %v1646 = vpack.c.b16 %v1631, %v1630
        %v1647 = vpack.c.b16 %v1633, %v1632
        %v1648 = vpack.c.b16 %v1635, %v1634
        %v1649 = vpack.c.b16 %v1637, %v1636
        %v1650 = vpack.c.b16 %v1639, %v1638
        %v1651 = vpack.c.b16 %v1641, %v1640
        %v1652 = vpack.c.b16 %v1643, %v1642
        %v1653 = vpack.c.b16 %v1645, %v1644
        %1662 = vmatprep.subr.bf16.mxu0 0
        %1663 = vmatpush1.bf16.msra.mxu0 %v1646
        %1664 = vmatprep.subr.bf16.mxu0 0
        %1665 = vmatpush1.bf16.msra.mxu0 %v1647
        %1666 = vmatprep.subr.bf16.mxu0 0
        %1667 = vmatpush1.bf16.msra.mxu0 %v1648
        %1668 = vmatprep.subr.bf16.mxu0 0
        %1669 = vmatpush1.bf16.msra.mxu0 %v1649
        %1670 = vmatprep.subr.bf16.mxu0 0
        %1671 = vmatpush1.bf16.msra.mxu0 %v1650
        %1672 = vmatprep.subr.bf16.mxu0 0
        %1673 = vmatpush1.bf16.msra.mxu0 %v1651
        %1674 = vmatprep.subr.bf16.mxu0 0
        %1675 = vmatpush1.bf16.msra.mxu0 %v1652
        %1676 = vmatprep.subr.bf16.mxu0 0
        %1677 = vmatpush1.bf16.msra.mxu0 %v1653
        %1678 = vmatprep.subr.bf16.mxu0 0
        %1679 = vmatpush1.bf16.msra.mxu0 0
        %1680 = vmatprep.subr.bf16.mxu0 0
        %1681 = vmatpush1.bf16.msra.mxu0 0
        %1682 = vmatprep.subr.bf16.mxu0 0
        %1683 = vmatpush1.bf16.msra.mxu0 0
        %1684 = vmatprep.subr.bf16.mxu0 0
        %1685 = vmatpush1.bf16.msra.mxu0 0
        %1686 = vmatprep.subr.bf16.mxu0 0
        %1687 = vmatpush1.bf16.msra.mxu0 0
        %1688 = vmatprep.subr.bf16.mxu0 0
        %1689 = vmatpush1.bf16.msra.mxu0 0
        %1690 = vmatprep.subr.bf16.mxu0 0
        %1691 = vmatpush1.bf16.msra.mxu0 0
        %1692 = vmatprep.subr.bf16.mxu0 0
        %1693 = vmatpush1.bf16.msra.mxu0 0
        %1694 = vmatprep.mubr.bf16.mxu0 0
        %1695 = vmatmul.mubr.bf16.gmra.mrb[0].mxu0 %v1590
        %v1696 = vpop.f32.mrb[0].mxu0
        %v1697 = vadd.f32 %v1612, %v1696
        %v1698 = vpop.f32.mrb[0].mxu0
        %v1699 = vpop.f32.mrb[0].mxu0
        %v1700 = vpop.f32.mrb[0].mxu0
        %1701 = vdwg.mxu0
        %v1702 = vadd.f32 %v1488, %v1697
        %1703 = vst.msk [vmem:[%s591] sm:$0xff] %vm601, %v1702
        %s1704 = sand.u32 %s417, 1
        %s1705 = scalar_lea.sflag [#allocation4], %s1704
        %s1706 = sand.u32 %s417, 1
        %s1707 = smul.addr %s1706, 8
        %s1708 = scalar_lea.vmem [#allocation8], %s1707
        // Predicated region
        $region101: #{tpu_custom_call.1} parent=87 // pred_check
          %p1709 = pneg %p427
        $region102: #{tpu_custom_call.1} parent=87 // pred_check_branch
          %1711 = sbr.rel (%p1709) target = $region104
        $region103: #{tpu_custom_call.1} parent=87 // pred_region
          %s1713 = ssub.s32 128, 128
          %1714 = vsyncadd %s1705, %s1713
          %s1715 = sadd.s32 %s38, %s37
          %s1716 = smul.addr %s1715, 128
          %s1717 = scalar_lea.hbm %s17, %s1716
          %s1719 = sshll.u32 %s1708, 4
          %s1720 = int_to_ptr.vmem [resolvable:$true] %s1719
          %1722 = dma.vmem_to_hbm [thread:$0]  %s1720, 128, %s1717, %s1705
        $region104: #{tpu_custom_call.1} parent=87 // pred_fallthru
          _
      $region88: #{tpu_custom_call.1} parent=5 // pred_fallthru
        _
      %p1723 = scmp.le.s32.totalorder 2, %s28
      // Predicated region
      $region105: #{tpu_custom_call.1} parent=5 // pred_check
        %p1724 = pneg %p1723
      $region106: #{tpu_custom_call.1} parent=5 // pred_check_branch
        %1726 = sbr.rel (%p1724) target = $region108
      $region107: #{tpu_custom_call.1} parent=5 // pred_region
        %s1727 = ssub.s32 %s28, 2
        // Predicated region
        $region109: #{tpu_custom_call.1} parent=107 // pred_check
          %p1728 = pneg %p433
        $region110: #{tpu_custom_call.1} parent=107 // pred_check_branch
          %1730 = sbr.rel (%p1728) target = $region112
        $region111: #{tpu_custom_call.1} parent=107 // pred_region
          %s1731 = sand.u32 %s418, 1
          %s1732 = scalar_lea.sflag [#allocation4], %s1731
          %s1733 = sand.u32 %s418, 1
          %s1734 = smul.addr %s1733, 8
          %s1735 = scalar_lea.vmem [#allocation8], %s1734
          %1736 = dma.done %s1732, 128
        $region112: #{tpu_custom_call.1} parent=107 // pred_fallthru
          _
      $region108: #{tpu_custom_call.1} parent=5 // pred_fallthru
        _
    $region6: #{tpu_custom_call.1} parent=1 // loop_footer
      %s32 = sadd.s32 1, %s28
    $region7: #{tpu_custom_call.1} parent=1 // loop_footer_branch
      %27 = sbr.rel target = $region3
    $region8: #{tpu_custom_call.1} parent=1 // loop_exit
      _
    %1737 = vsyncpa [#allocation3], 1
    %s1738 = scalar_lea.sflag [#allocation3], 1
    %1739 = vsyncpa %s1738, 1
    %1740 = vsyncpa [#allocation6], 1
    %1741 = vsyncpa [#allocation4], 1
    %s1742 = scalar_lea.sflag [#allocation4], 1
    %1743 = vsyncpa %s1742, 1

</llo_original>
